<compile_context>
chip_gen: v5e
topology: v5e:2x2
jax: 0.10.0
libtpu: 0.0.40
codegen_flags: <defaults>
</compile_context>

<pallas_src>
import jax
import jax.numpy as jnp
from jax.experimental import pallas as pl
from jax.experimental.pallas import tpu as pltpu

K = 5            # conv kernel size (both convs)
LANES = 128
TB_MAX = 128     # max batch tile per grid step


def _round_up(x, m):
    return (x + m - 1) // m * m


# ----------------------------- fused Pallas kernel ---------------------------

def _fused_forward_kernel(x_ref, t1_ref, b1_ref, t2_ref, b2_ref,
                          wf1_ref, bf1_ref, wf2_ref, bf2_ref, o_ref):
    # x_ref : (7, 4, TB, 28*Cin) bf16   input rows pre-split as h = 4*m + s
    # t1_ref: (5, 28*Cin, 256)   bf16   conv1 banded matrices (even/odd w halves)
    # t2_ref: (5, 128, 256)      bf16   conv2 banded matrices
    # wf1_ref: (4, 128, 128)     bf16   fc1, one matrix per conv2 output row hp2
    # wf2_ref: (128, 128)        bf16   fc2
    # b*_ref : (1, 128)          f32    bias rows (lane-layout matched)
    # o_ref : (TB, 128)          f32    logits slab (classes in first lanes)
    TB = o_ref.shape[0]
    WIN = x_ref.shape[3]

    def colpool(y):                       # max over even/odd output columns
        return jnp.maximum(y[:, 0:LANES], y[:, LANES:2 * LANES])

    # ---- conv1 + 2x2 max-pool + bias + relu -------------------------------
    # pre-pool output rows h in [0,24), grouped as h = 4*i + r (i in [0,6)).
    # pooled row hp = 2*i + q is max over r in {2q, 2q+1}.
    r1 = []                               # r1[q]: (6*TB, 128) bf16, rows (i, b)
    for q in range(2):
        pooled = None
        for dr in range(2):
            r = 2 * q + dr
            acc = None
            for ki in range(K):
                a, s = divmod(r + ki, 4)              # input row 4*(i+a) + s
                lhs = x_ref[a:a + 6, s, :, :]         # (6, TB, WIN)
                lhs = lhs.reshape(6 * TB, WIN)
                d = jnp.dot(lhs, t1_ref[ki],
                            preferred_element_type=jnp.float32)
                acc = d if acc is None else acc + d
            cp = colpool(acc)                         # (6*TB, 128)
            pooled = cp if pooled is None else jnp.maximum(pooled, cp)
        r1.append(jnp.maximum(pooled + b1_ref[...], 0.0).astype(jnp.bfloat16))

    # ---- conv2 + 2x2 max-pool + bias + relu, kept per output row hp2 -------
    # pre-pool rows h2 = 2*hp2 + dh need conv1-pooled rows hp = h2 + ki.
    a2 = []                               # a2[hp2]: (TB, 128) bf16, rows = b
    for hp2 in range(4):
        rowmax = None
        for dh in range(2):
            acc = None
            for ki in range(K):
                base, q = divmod(dh + ki, 2)          # hp = 2*(hp2+base) + q
                i = hp2 + base
                lhs = r1[q][i * TB:(i + 1) * TB, :]   # (TB, 128)
                d = jnp.dot(lhs, t2_ref[ki],
                            preferred_element_type=jnp.float32)
                acc = d if acc is None else acc + d
            cp = colpool(acc)                         # (TB, 128)
            rowmax = cp if rowmax is None else jnp.maximum(rowmax, cp)
        a2.append(jnp.maximum(rowmax + b2_ref[...], 0.0).astype(jnp.bfloat16))

    # ---- fc1 -> relu -> (dropout = identity, eval) -> fc2 ------------------
    h = None
    for hp2 in range(4):
        d = jnp.dot(a2[hp2], wf1_ref[hp2], preferred_element_type=jnp.float32)
        h = d if h is None else h + d
    h = jnp.maximum(h + bf1_ref[...], 0.0).astype(jnp.bfloat16)
    # TODO(synk): F.dropout / nn.Dropout2d are identities in eval mode only.
    logits = jnp.dot(h, wf2_ref[...], preferred_element_type=jnp.float32)
    o_ref[...] = logits + bf2_ref[...]


# --------------------- trace-time weight re-layout (tiny) --------------------

def _build_conv1_mats(w1, b1):
    """w1: (10, Cin, 5, 5).  Returns T1 (5, 28*Cin, 256) bf16, bias row (1,128)."""
    Cout, Cin = w1.shape[0], w1.shape[1]
    W, Wo, Wp = 28, 24, 12
    win = jnp.arange(W); wout = jnp.arange(Wo); kj = jnp.arange(K)
    S = (win[None, :, None] == wout[None, None, :] + kj[:, None, None]).astype(w1.dtype)
    # U[ki, w_in, cin, w_out, c] = w1[c, cin, ki, w_in - w_out] (banded)
    U = jnp.einsum('jaw,cnij->ianwc', S, w1)              # (5, 28, Cin, 24, 10)
    U = U.reshape(K, W * Cin, Wo, Cout)
    even = U[:, :, 0::2, :].reshape(K, W * Cin, Wp * Cout)    # (5, 28Cin, 120)
    odd = U[:, :, 1::2, :].reshape(K, W * Cin, Wp * Cout)
    pad = jnp.zeros((K, W * Cin, LANES - Wp * Cout), w1.dtype)
    T1 = jnp.concatenate([even, pad, odd, pad], axis=-1).astype(jnp.bfloat16)
    b1row = jnp.pad(jnp.tile(b1, (Wp,)), (0, LANES - Wp * Cout))
    return T1, b1row.reshape(1, LANES).astype(jnp.float32)


def _build_conv2_mats(w2, b2):
    """w2: (20, 10, 5, 5).  Returns T2 (5, 128, 256) bf16, bias row (1,128)."""
    Cout, Cin = w2.shape[0], w2.shape[1]
    Wi, Wo2, Wp2 = 12, 8, 4
    win = jnp.arange(Wi); wout = jnp.arange(Wo2); kj = jnp.arange(K)
    S = (win[None, :, None] == wout[None, None, :] + kj[:, None, None]).astype(w2.dtype)
    U = jnp.einsum('jaw,dcij->iacwd', S, w2)              # (5, 12, 10, 8, 20)
    U = U.reshape(K, Wi * Cin, Wo2, Cout)
    even = U[:, :, 0::2, :].reshape(K, Wi * Cin, Wp2 * Cout)   # (5, 120, 80)
    odd = U[:, :, 1::2, :].reshape(K, Wi * Cin, Wp2 * Cout)
    cpad = jnp.zeros((K, Wi * Cin, LANES - Wp2 * Cout), w2.dtype)
    T2 = jnp.concatenate([even, cpad, odd, cpad], axis=-1)
    T2 = jnp.pad(T2, ((0, 0), (0, LANES - Wi * Cin), (0, 0))).astype(jnp.bfloat16)
    b2row = jnp.pad(jnp.tile(b2, (Wp2,)), (0, LANES - Wp2 * Cout))
    return T2, b2row.reshape(1, LANES).astype(jnp.float32)


def _build_fc_mats(fc1_w, fc1_b, fc2_w, fc2_b, c2):
    """fc1 rows permuted from PyTorch's NCHW .view order (c2, hp2, wp2)."""
    hid, ncls = fc1_w.shape[0], fc2_w.shape[0]
    w1r = fc1_w.reshape(hid, c2, 4, 4)                    # (j, c2, hp2, wp2)
    w1r = jnp.transpose(w1r, (2, 3, 1, 0)).reshape(4, 4 * c2, hid)
    Wf1 = jnp.pad(w1r, ((0, 0), (0, LANES - 4 * c2), (0, LANES - hid)))
    bf1 = jnp.pad(fc1_b, (0, LANES - hid)).reshape(1, LANES)
    Wf2 = jnp.pad(fc2_w.T, ((0, LANES - hid), (0, LANES - ncls)))
    bf2 = jnp.pad(fc2_b, (0, LANES - ncls)).reshape(1, LANES)
    return (Wf1.astype(jnp.bfloat16), bf1.astype(jnp.float32),
            Wf2.astype(jnp.bfloat16), bf2.astype(jnp.float32))


# ------------------------------ forward wrapper ------------------------------

def cnn_mnist_forward(params, x):
    """x: (N, num_channels, 28, 28) NCHW (28x28 required by fc1(320))."""
    N, Cin, H, W = x.shape
    assert H == 28 and W == 28, "CNNMnist's fc1(320) hard-codes 28x28 inputs"
    WIN = W * Cin
    ncls = params["fc2_w"].shape[0]

    T1, b1row = _build_conv1_mats(params["conv1_w"], params["conv1_b"])
    T2, b2row = _build_conv2_mats(params["conv2_w"], params["conv2_b"])
    Wf1, bf1row, Wf2, bf2row = _build_fc_mats(
        params["fc1_w"], params["fc1_b"], params["fc2_w"], params["fc2_b"],
        params["conv2_w"].shape[0])

    # Batch tile: multiple of 8, grid always >= 2 (v7x megacore / DMA overlap).
    TB = max(8, min(TB_MAX, _round_up(pl.cdiv(N, 2), 8)))
    N_pad = max(_round_up(N, TB), 2 * TB)
    grid = N_pad // TB

    xh = jnp.transpose(x.astype(jnp.bfloat16), (0, 2, 3, 1))     # NHWC
    xh = xh.reshape(N, H, WIN)
    if N_pad != N:
        xh = jnp.pad(xh, ((0, N_pad - N), (0, 0), (0, 0)))
    xh = xh.reshape(N_pad, 7, 4, WIN)                            # h = 4*m + s
    xh = jnp.transpose(xh, (1, 2, 0, 3))                         # (7, 4, N_pad, WIN)

    out = pl.pallas_call(
        _fused_forward_kernel,
        out_shape=jax.ShapeDtypeStruct((N_pad, LANES), jnp.float32),
        grid=(grid,),
        in_specs=[
            pl.BlockSpec((7, 4, TB, WIN), lambda i: (0, 0, i, 0)),
            pl.BlockSpec((K, WIN, 2 * LANES), lambda i: (0, 0, 0)),   # resident
            pl.BlockSpec((1, LANES), lambda i: (0, 0)),
            pl.BlockSpec((K, LANES, 2 * LANES), lambda i: (0, 0, 0)),
            pl.BlockSpec((1, LANES), lambda i: (0, 0)),
            pl.BlockSpec((4, LANES, LANES), lambda i: (0, 0, 0)),
            pl.BlockSpec((1, LANES), lambda i: (0, 0)),
            pl.BlockSpec((LANES, LANES), lambda i: (0, 0)),
            pl.BlockSpec((1, LANES), lambda i: (0, 0)),
        ],
        out_specs=pl.BlockSpec((TB, LANES), lambda i: (i, 0)),
        compiler_params=pltpu.CompilerParams(
            dimension_semantics=("parallel",),
        ),
    )(xh, T1, b1row, T2, b2row, Wf1, bf1row, Wf2, bf2row)

    return out[:N, :ncls]


def init_params(key, num_channels=1, num_classes=10):
    """Deterministic PyTorch-default-style uniform(-1/sqrt(fan_in), 1/sqrt(fan_in))."""
    ks = jax.random.split(key, 8)

    def u(k, shape, fan_in):
        bound = 1.0 / (fan_in ** 0.5)
        return jax.random.uniform(k, shape, jnp.float32, -bound, bound)

    return {
        "conv1_w": u(ks[0], (10, num_channels, K, K), num_channels * K * K),
        "conv1_b": u(ks[1], (10,), num_channels * K * K),
        "conv2_w": u(ks[2], (20, 10, K, K), 10 * K * K),
        "conv2_b": u(ks[3], (20,), 10 * K * K),
        "fc1_w":   u(ks[4], (50, 320), 320),
        "fc1_b":   u(ks[5], (50,), 320),
        "fc2_w":   u(ks[6], (num_classes, 50), 50),
        "fc2_b":   u(ks[7], (num_classes,), 50),
    }


if __name__ == "__main__":
    key = jax.random.PRNGKey(0)
    k_param, k_x = jax.random.split(key)
    num_channels, num_classes, batch = 1, 10, 2

    params = init_params(k_param, num_channels=num_channels, num_classes=num_classes)
    x = jax.random.normal(k_x, (batch, num_channels, 28, 28), dtype=jnp.float32)

    logits = jax.jit(cnn_mnist_forward)(params, x)
    jax.block_until_ready(logits)
    assert logits.shape == (batch, num_classes), logits.shape
    print("KERNEL_OK")
</pallas_src>

<mosaic_0001>
module attributes {stable_mosaic.version = 11 : i64} {
  func.func @_fused_forward_kernel(%arg0: i32, %arg1: memref<7x4x8x28xbf16, #tpu.memory_space<vmem>>, %arg2: memref<5x28x256xbf16, #tpu.memory_space<vmem>>, %arg3: memref<1x128xf32, #tpu.memory_space<vmem>>, %arg4: memref<5x128x256xbf16, #tpu.memory_space<vmem>>, %arg5: memref<1x128xf32, #tpu.memory_space<vmem>>, %arg6: memref<4x128x128xbf16, #tpu.memory_space<vmem>>, %arg7: memref<1x128xf32, #tpu.memory_space<vmem>>, %arg8: memref<128x128xbf16, #tpu.memory_space<vmem>>, %arg9: memref<1x128xf32, #tpu.memory_space<vmem>>, %arg10: memref<8x128xf32, #tpu.memory_space<vmem>>) attributes {dimension_semantics = [#tpu.dimension_semantics<parallel>], iteration_bounds = array<i64: 2>, scalar_prefetch = 0 : i64, scratch_operands = 0 : i64, tpu.core_type = #tpu.core_type<tc>, window_params = [{transform_indices = @transform_0, window_bounds = array<i64: 7, 4, 8, 28>}, {pipeline_mode = #tpu.pipeline_mode<synchronous>, transform_indices = @transform_1, window_bounds = array<i64: 5, 28, 256>}, {pipeline_mode = #tpu.pipeline_mode<synchronous>, transform_indices = @transform_2, window_bounds = array<i64: 1, 128>}, {pipeline_mode = #tpu.pipeline_mode<synchronous>, transform_indices = @transform_3, window_bounds = array<i64: 5, 128, 256>}, {pipeline_mode = #tpu.pipeline_mode<synchronous>, transform_indices = @transform_4, window_bounds = array<i64: 1, 128>}, {pipeline_mode = #tpu.pipeline_mode<synchronous>, transform_indices = @transform_5, window_bounds = array<i64: 4, 128, 128>}, {pipeline_mode = #tpu.pipeline_mode<synchronous>, transform_indices = @transform_6, window_bounds = array<i64: 1, 128>}, {pipeline_mode = #tpu.pipeline_mode<synchronous>, transform_indices = @transform_7, window_bounds = array<i64: 128, 128>}, {pipeline_mode = #tpu.pipeline_mode<synchronous>, transform_indices = @transform_8, window_bounds = array<i64: 1, 128>}, {transform_indices = @transform_9, window_bounds = array<i64: 8, 128>}]} {
    %c0 = arith.constant 0 : index
    %c0_0 = arith.constant 0 : index
    %c0_1 = arith.constant 0 : index
    %c0_2 = arith.constant 0 : index
    %0 = vector.load %arg1[%c0, %c0_0, %c0_1, %c0_2] : memref<7x4x8x28xbf16, #tpu.memory_space<vmem>>, vector<6x1x8x28xbf16>
    %1 = vector.shape_cast %0 : vector<6x1x8x28xbf16> to vector<6x8x28xbf16>
    %2 = vector.shape_cast %1 : vector<6x8x28xbf16> to vector<48x28xbf16>
    %c0_3 = arith.constant 0 : index
    %c0_4 = arith.constant 0 : index
    %c0_5 = arith.constant 0 : index
    %3 = vector.load %arg2[%c0_3, %c0_4, %c0_5] : memref<5x28x256xbf16, #tpu.memory_space<vmem>>, vector<1x28x256xbf16>
    %4 = vector.shape_cast %3 : vector<1x28x256xbf16> to vector<28x256xbf16>
    %cst = arith.constant dense<0.000000e+00> : vector<48x256xf32>
    %5 = tpu.matmul %2, %4, %cst {dimension_numbers = #tpu.dot_dimension_numbers<[1], [0], [0], [1], [0, 0, 1, 1], [], []>} : vector<48x28xbf16>, vector<28x256xbf16>, vector<48x256xf32> -> vector<48x256xf32>
    %c0_6 = arith.constant 0 : index
    %c1 = arith.constant 1 : index
    %c0_7 = arith.constant 0 : index
    %c0_8 = arith.constant 0 : index
    %6 = vector.load %arg1[%c0_6, %c1, %c0_7, %c0_8] : memref<7x4x8x28xbf16, #tpu.memory_space<vmem>>, vector<6x1x8x28xbf16>
    %7 = vector.shape_cast %6 : vector<6x1x8x28xbf16> to vector<6x8x28xbf16>
    %8 = vector.shape_cast %7 : vector<6x8x28xbf16> to vector<48x28xbf16>
    %c1_9 = arith.constant 1 : index
    %c0_10 = arith.constant 0 : index
    %c0_11 = arith.constant 0 : index
    %9 = vector.load %arg2[%c1_9, %c0_10, %c0_11] : memref<5x28x256xbf16, #tpu.memory_space<vmem>>, vector<1x28x256xbf16>
    %10 = vector.shape_cast %9 : vector<1x28x256xbf16> to vector<28x256xbf16>
    %cst_12 = arith.constant dense<0.000000e+00> : vector<48x256xf32>
    %11 = tpu.matmul %8, %10, %cst_12 {dimension_numbers = #tpu.dot_dimension_numbers<[1], [0], [0], [1], [0, 0, 1, 1], [], []>} : vector<48x28xbf16>, vector<28x256xbf16>, vector<48x256xf32> -> vector<48x256xf32>
    %12 = arith.addf %5, %11 : vector<48x256xf32>
    %c0_13 = arith.constant 0 : index
    %c2 = arith.constant 2 : index
    %c0_14 = arith.constant 0 : index
    %c0_15 = arith.constant 0 : index
    %13 = vector.load %arg1[%c0_13, %c2, %c0_14, %c0_15] : memref<7x4x8x28xbf16, #tpu.memory_space<vmem>>, vector<6x1x8x28xbf16>
    %14 = vector.shape_cast %13 : vector<6x1x8x28xbf16> to vector<6x8x28xbf16>
    %15 = vector.shape_cast %14 : vector<6x8x28xbf16> to vector<48x28xbf16>
    %c2_16 = arith.constant 2 : index
    %c0_17 = arith.constant 0 : index
    %c0_18 = arith.constant 0 : index
    %16 = vector.load %arg2[%c2_16, %c0_17, %c0_18] : memref<5x28x256xbf16, #tpu.memory_space<vmem>>, vector<1x28x256xbf16>
    %17 = vector.shape_cast %16 : vector<1x28x256xbf16> to vector<28x256xbf16>
    %cst_19 = arith.constant dense<0.000000e+00> : vector<48x256xf32>
    %18 = tpu.matmul %15, %17, %cst_19 {dimension_numbers = #tpu.dot_dimension_numbers<[1], [0], [0], [1], [0, 0, 1, 1], [], []>} : vector<48x28xbf16>, vector<28x256xbf16>, vector<48x256xf32> -> vector<48x256xf32>
    %19 = arith.addf %12, %18 : vector<48x256xf32>
    %c0_20 = arith.constant 0 : index
    %c3 = arith.constant 3 : index
    %c0_21 = arith.constant 0 : index
    %c0_22 = arith.constant 0 : index
    %20 = vector.load %arg1[%c0_20, %c3, %c0_21, %c0_22] : memref<7x4x8x28xbf16, #tpu.memory_space<vmem>>, vector<6x1x8x28xbf16>
    %21 = vector.shape_cast %20 : vector<6x1x8x28xbf16> to vector<6x8x28xbf16>
    %22 = vector.shape_cast %21 : vector<6x8x28xbf16> to vector<48x28xbf16>
    %c3_23 = arith.constant 3 : index
    %c0_24 = arith.constant 0 : index
    %c0_25 = arith.constant 0 : index
    %23 = vector.load %arg2[%c3_23, %c0_24, %c0_25] : memref<5x28x256xbf16, #tpu.memory_space<vmem>>, vector<1x28x256xbf16>
    %24 = vector.shape_cast %23 : vector<1x28x256xbf16> to vector<28x256xbf16>
    %cst_26 = arith.constant dense<0.000000e+00> : vector<48x256xf32>
    %25 = tpu.matmul %22, %24, %cst_26 {dimension_numbers = #tpu.dot_dimension_numbers<[1], [0], [0], [1], [0, 0, 1, 1], [], []>} : vector<48x28xbf16>, vector<28x256xbf16>, vector<48x256xf32> -> vector<48x256xf32>
    %26 = arith.addf %19, %25 : vector<48x256xf32>
    %c1_27 = arith.constant 1 : index
    %c0_28 = arith.constant 0 : index
    %c0_29 = arith.constant 0 : index
    %c0_30 = arith.constant 0 : index
    %27 = vector.load %arg1[%c1_27, %c0_28, %c0_29, %c0_30] : memref<7x4x8x28xbf16, #tpu.memory_space<vmem>>, vector<6x1x8x28xbf16>
    %28 = vector.shape_cast %27 : vector<6x1x8x28xbf16> to vector<6x8x28xbf16>
    %29 = vector.shape_cast %28 : vector<6x8x28xbf16> to vector<48x28xbf16>
    %c4 = arith.constant 4 : index
    %c0_31 = arith.constant 0 : index
    %c0_32 = arith.constant 0 : index
    %30 = vector.load %arg2[%c4, %c0_31, %c0_32] : memref<5x28x256xbf16, #tpu.memory_space<vmem>>, vector<1x28x256xbf16>
    %31 = vector.shape_cast %30 : vector<1x28x256xbf16> to vector<28x256xbf16>
    %cst_33 = arith.constant dense<0.000000e+00> : vector<48x256xf32>
    %32 = tpu.matmul %29, %31, %cst_33 {dimension_numbers = #tpu.dot_dimension_numbers<[1], [0], [0], [1], [0, 0, 1, 1], [], []>} : vector<48x28xbf16>, vector<28x256xbf16>, vector<48x256xf32> -> vector<48x256xf32>
    %33 = arith.addf %26, %32 : vector<48x256xf32>
    %34 = vector.extract_strided_slice %33 {offsets = [0, 0], sizes = [48, 128], strides = [1, 1]} : vector<48x256xf32> to vector<48x128xf32>
    %35 = vector.extract_strided_slice %33 {offsets = [0, 128], sizes = [48, 128], strides = [1, 1]} : vector<48x256xf32> to vector<48x128xf32>
    %36 = arith.maximumf %34, %35 : vector<48x128xf32>
    %c0_34 = arith.constant 0 : index
    %c1_35 = arith.constant 1 : index
    %c0_36 = arith.constant 0 : index
    %c0_37 = arith.constant 0 : index
    %37 = vector.load %arg1[%c0_34, %c1_35, %c0_36, %c0_37] : memref<7x4x8x28xbf16, #tpu.memory_space<vmem>>, vector<6x1x8x28xbf16>
    %38 = vector.shape_cast %37 : vector<6x1x8x28xbf16> to vector<6x8x28xbf16>
    %39 = vector.shape_cast %38 : vector<6x8x28xbf16> to vector<48x28xbf16>
    %c0_38 = arith.constant 0 : index
    %c0_39 = arith.constant 0 : index
    %c0_40 = arith.constant 0 : index
    %40 = vector.load %arg2[%c0_38, %c0_39, %c0_40] : memref<5x28x256xbf16, #tpu.memory_space<vmem>>, vector<1x28x256xbf16>
    %41 = vector.shape_cast %40 : vector<1x28x256xbf16> to vector<28x256xbf16>
    %cst_41 = arith.constant dense<0.000000e+00> : vector<48x256xf32>
    %42 = tpu.matmul %39, %41, %cst_41 {dimension_numbers = #tpu.dot_dimension_numbers<[1], [0], [0], [1], [0, 0, 1, 1], [], []>} : vector<48x28xbf16>, vector<28x256xbf16>, vector<48x256xf32> -> vector<48x256xf32>
    %c0_42 = arith.constant 0 : index
    %c2_43 = arith.constant 2 : index
    %c0_44 = arith.constant 0 : index
    %c0_45 = arith.constant 0 : index
    %43 = vector.load %arg1[%c0_42, %c2_43, %c0_44, %c0_45] : memref<7x4x8x28xbf16, #tpu.memory_space<vmem>>, vector<6x1x8x28xbf16>
    %44 = vector.shape_cast %43 : vector<6x1x8x28xbf16> to vector<6x8x28xbf16>
    %45 = vector.shape_cast %44 : vector<6x8x28xbf16> to vector<48x28xbf16>
    %c1_46 = arith.constant 1 : index
    %c0_47 = arith.constant 0 : index
    %c0_48 = arith.constant 0 : index
    %46 = vector.load %arg2[%c1_46, %c0_47, %c0_48] : memref<5x28x256xbf16, #tpu.memory_space<vmem>>, vector<1x28x256xbf16>
    %47 = vector.shape_cast %46 : vector<1x28x256xbf16> to vector<28x256xbf16>
    %cst_49 = arith.constant dense<0.000000e+00> : vector<48x256xf32>
    %48 = tpu.matmul %45, %47, %cst_49 {dimension_numbers = #tpu.dot_dimension_numbers<[1], [0], [0], [1], [0, 0, 1, 1], [], []>} : vector<48x28xbf16>, vector<28x256xbf16>, vector<48x256xf32> -> vector<48x256xf32>
    %49 = arith.addf %42, %48 : vector<48x256xf32>
    %c0_50 = arith.constant 0 : index
    %c3_51 = arith.constant 3 : index
    %c0_52 = arith.constant 0 : index
    %c0_53 = arith.constant 0 : index
    %50 = vector.load %arg1[%c0_50, %c3_51, %c0_52, %c0_53] : memref<7x4x8x28xbf16, #tpu.memory_space<vmem>>, vector<6x1x8x28xbf16>
    %51 = vector.shape_cast %50 : vector<6x1x8x28xbf16> to vector<6x8x28xbf16>
    %52 = vector.shape_cast %51 : vector<6x8x28xbf16> to vector<48x28xbf16>
    %c2_54 = arith.constant 2 : index
    %c0_55 = arith.constant 0 : index
    %c0_56 = arith.constant 0 : index
    %53 = vector.load %arg2[%c2_54, %c0_55, %c0_56] : memref<5x28x256xbf16, #tpu.memory_space<vmem>>, vector<1x28x256xbf16>
    %54 = vector.shape_cast %53 : vector<1x28x256xbf16> to vector<28x256xbf16>
    %cst_57 = arith.constant dense<0.000000e+00> : vector<48x256xf32>
    %55 = tpu.matmul %52, %54, %cst_57 {dimension_numbers = #tpu.dot_dimension_numbers<[1], [0], [0], [1], [0, 0, 1, 1], [], []>} : vector<48x28xbf16>, vector<28x256xbf16>, vector<48x256xf32> -> vector<48x256xf32>
    %56 = arith.addf %49, %55 : vector<48x256xf32>
    %c1_58 = arith.constant 1 : index
    %c0_59 = arith.constant 0 : index
    %c0_60 = arith.constant 0 : index
    %c0_61 = arith.constant 0 : index
    %57 = vector.load %arg1[%c1_58, %c0_59, %c0_60, %c0_61] : memref<7x4x8x28xbf16, #tpu.memory_space<vmem>>, vector<6x1x8x28xbf16>
    %58 = vector.shape_cast %57 : vector<6x1x8x28xbf16> to vector<6x8x28xbf16>
    %59 = vector.shape_cast %58 : vector<6x8x28xbf16> to vector<48x28xbf16>
    %c3_62 = arith.constant 3 : index
    %c0_63 = arith.constant 0 : index
    %c0_64 = arith.constant 0 : index
    %60 = vector.load %arg2[%c3_62, %c0_63, %c0_64] : memref<5x28x256xbf16, #tpu.memory_space<vmem>>, vector<1x28x256xbf16>
    %61 = vector.shape_cast %60 : vector<1x28x256xbf16> to vector<28x256xbf16>
    %cst_65 = arith.constant dense<0.000000e+00> : vector<48x256xf32>
    %62 = tpu.matmul %59, %61, %cst_65 {dimension_numbers = #tpu.dot_dimension_numbers<[1], [0], [0], [1], [0, 0, 1, 1], [], []>} : vector<48x28xbf16>, vector<28x256xbf16>, vector<48x256xf32> -> vector<48x256xf32>
    %63 = arith.addf %56, %62 : vector<48x256xf32>
    %c1_66 = arith.constant 1 : index
    %c1_67 = arith.constant 1 : index
    %c0_68 = arith.constant 0 : index
    %c0_69 = arith.constant 0 : index
    %64 = vector.load %arg1[%c1_66, %c1_67, %c0_68, %c0_69] : memref<7x4x8x28xbf16, #tpu.memory_space<vmem>>, vector<6x1x8x28xbf16>
    %65 = vector.shape_cast %64 : vector<6x1x8x28xbf16> to vector<6x8x28xbf16>
    %66 = vector.shape_cast %65 : vector<6x8x28xbf16> to vector<48x28xbf16>
    %c4_70 = arith.constant 4 : index
    %c0_71 = arith.constant 0 : index
    %c0_72 = arith.constant 0 : index
    %67 = vector.load %arg2[%c4_70, %c0_71, %c0_72] : memref<5x28x256xbf16, #tpu.memory_space<vmem>>, vector<1x28x256xbf16>
    %68 = vector.shape_cast %67 : vector<1x28x256xbf16> to vector<28x256xbf16>
    %cst_73 = arith.constant dense<0.000000e+00> : vector<48x256xf32>
    %69 = tpu.matmul %66, %68, %cst_73 {dimension_numbers = #tpu.dot_dimension_numbers<[1], [0], [0], [1], [0, 0, 1, 1], [], []>} : vector<48x28xbf16>, vector<28x256xbf16>, vector<48x256xf32> -> vector<48x256xf32>
    %70 = arith.addf %63, %69 : vector<48x256xf32>
    %71 = vector.extract_strided_slice %70 {offsets = [0, 0], sizes = [48, 128], strides = [1, 1]} : vector<48x256xf32> to vector<48x128xf32>
    %72 = vector.extract_strided_slice %70 {offsets = [0, 128], sizes = [48, 128], strides = [1, 1]} : vector<48x256xf32> to vector<48x128xf32>
    %73 = arith.maximumf %71, %72 : vector<48x128xf32>
    %74 = arith.maximumf %36, %73 : vector<48x128xf32>
    %c0_74 = arith.constant 0 : index
    %c0_75 = arith.constant 0 : index
    %75 = vector.load %arg3[%c0_74, %c0_75] : memref<1x128xf32, #tpu.memory_space<vmem>>, vector<1x128xf32>
    %76 = vector.broadcast %75 : vector<1x128xf32> to vector<48x128xf32>
    %77 = arith.addf %74, %76 : vector<48x128xf32>
    %cst_76 = arith.constant 0.000000e+00 : f32
    %78 = vector.broadcast %cst_76 : f32 to vector<48x128xf32>
    %79 = arith.maximumf %77, %78 : vector<48x128xf32>
    %80 = arith.truncf %79 : vector<48x128xf32> to vector<48x128xbf16>
    %c0_77 = arith.constant 0 : index
    %c2_78 = arith.constant 2 : index
    %c0_79 = arith.constant 0 : index
    %c0_80 = arith.constant 0 : index
    %81 = vector.load %arg1[%c0_77, %c2_78, %c0_79, %c0_80] : memref<7x4x8x28xbf16, #tpu.memory_space<vmem>>, vector<6x1x8x28xbf16>
    %82 = vector.shape_cast %81 : vector<6x1x8x28xbf16> to vector<6x8x28xbf16>
    %83 = vector.shape_cast %82 : vector<6x8x28xbf16> to vector<48x28xbf16>
    %c0_81 = arith.constant 0 : index
    %c0_82 = arith.constant 0 : index
    %c0_83 = arith.constant 0 : index
    %84 = vector.load %arg2[%c0_81, %c0_82, %c0_83] : memref<5x28x256xbf16, #tpu.memory_space<vmem>>, vector<1x28x256xbf16>
    %85 = vector.shape_cast %84 : vector<1x28x256xbf16> to vector<28x256xbf16>
    %cst_84 = arith.constant dense<0.000000e+00> : vector<48x256xf32>
    %86 = tpu.matmul %83, %85, %cst_84 {dimension_numbers = #tpu.dot_dimension_numbers<[1], [0], [0], [1], [0, 0, 1, 1], [], []>} : vector<48x28xbf16>, vector<28x256xbf16>, vector<48x256xf32> -> vector<48x256xf32>
    %c0_85 = arith.constant 0 : index
    %c3_86 = arith.constant 3 : index
    %c0_87 = arith.constant 0 : index
    %c0_88 = arith.constant 0 : index
    %87 = vector.load %arg1[%c0_85, %c3_86, %c0_87, %c0_88] : memref<7x4x8x28xbf16, #tpu.memory_space<vmem>>, vector<6x1x8x28xbf16>
    %88 = vector.shape_cast %87 : vector<6x1x8x28xbf16> to vector<6x8x28xbf16>
    %89 = vector.shape_cast %88 : vector<6x8x28xbf16> to vector<48x28xbf16>
    %c1_89 = arith.constant 1 : index
    %c0_90 = arith.constant 0 : index
    %c0_91 = arith.constant 0 : index
    %90 = vector.load %arg2[%c1_89, %c0_90, %c0_91] : memref<5x28x256xbf16, #tpu.memory_space<vmem>>, vector<1x28x256xbf16>
    %91 = vector.shape_cast %90 : vector<1x28x256xbf16> to vector<28x256xbf16>
    %cst_92 = arith.constant dense<0.000000e+00> : vector<48x256xf32>
    %92 = tpu.matmul %89, %91, %cst_92 {dimension_numbers = #tpu.dot_dimension_numbers<[1], [0], [0], [1], [0, 0, 1, 1], [], []>} : vector<48x28xbf16>, vector<28x256xbf16>, vector<48x256xf32> -> vector<48x256xf32>
    %93 = arith.addf %86, %92 : vector<48x256xf32>
    %c1_93 = arith.constant 1 : index
    %c0_94 = arith.constant 0 : index
    %c0_95 = arith.constant 0 : index
    %c0_96 = arith.constant 0 : index
    %94 = vector.load %arg1[%c1_93, %c0_94, %c0_95, %c0_96] : memref<7x4x8x28xbf16, #tpu.memory_space<vmem>>, vector<6x1x8x28xbf16>
    %95 = vector.shape_cast %94 : vector<6x1x8x28xbf16> to vector<6x8x28xbf16>
    %96 = vector.shape_cast %95 : vector<6x8x28xbf16> to vector<48x28xbf16>
    %c2_97 = arith.constant 2 : index
    %c0_98 = arith.constant 0 : index
    %c0_99 = arith.constant 0 : index
    %97 = vector.load %arg2[%c2_97, %c0_98, %c0_99] : memref<5x28x256xbf16, #tpu.memory_space<vmem>>, vector<1x28x256xbf16>
    %98 = vector.shape_cast %97 : vector<1x28x256xbf16> to vector<28x256xbf16>
    %cst_100 = arith.constant dense<0.000000e+00> : vector<48x256xf32>
    %99 = tpu.matmul %96, %98, %cst_100 {dimension_numbers = #tpu.dot_dimension_numbers<[1], [0], [0], [1], [0, 0, 1, 1], [], []>} : vector<48x28xbf16>, vector<28x256xbf16>, vector<48x256xf32> -> vector<48x256xf32>
    %100 = arith.addf %93, %99 : vector<48x256xf32>
    %c1_101 = arith.constant 1 : index
    %c1_102 = arith.constant 1 : index
    %c0_103 = arith.constant 0 : index
    %c0_104 = arith.constant 0 : index
    %101 = vector.load %arg1[%c1_101, %c1_102, %c0_103, %c0_104] : memref<7x4x8x28xbf16, #tpu.memory_space<vmem>>, vector<6x1x8x28xbf16>
    %102 = vector.shape_cast %101 : vector<6x1x8x28xbf16> to vector<6x8x28xbf16>
    %103 = vector.shape_cast %102 : vector<6x8x28xbf16> to vector<48x28xbf16>
    %c3_105 = arith.constant 3 : index
    %c0_106 = arith.constant 0 : index
    %c0_107 = arith.constant 0 : index
    %104 = vector.load %arg2[%c3_105, %c0_106, %c0_107] : memref<5x28x256xbf16, #tpu.memory_space<vmem>>, vector<1x28x256xbf16>
    %105 = vector.shape_cast %104 : vector<1x28x256xbf16> to vector<28x256xbf16>
    %cst_108 = arith.constant dense<0.000000e+00> : vector<48x256xf32>
    %106 = tpu.matmul %103, %105, %cst_108 {dimension_numbers = #tpu.dot_dimension_numbers<[1], [0], [0], [1], [0, 0, 1, 1], [], []>} : vector<48x28xbf16>, vector<28x256xbf16>, vector<48x256xf32> -> vector<48x256xf32>
    %107 = arith.addf %100, %106 : vector<48x256xf32>
    %c1_109 = arith.constant 1 : index
    %c2_110 = arith.constant 2 : index
    %c0_111 = arith.constant 0 : index
    %c0_112 = arith.constant 0 : index
    %108 = vector.load %arg1[%c1_109, %c2_110, %c0_111, %c0_112] : memref<7x4x8x28xbf16, #tpu.memory_space<vmem>>, vector<6x1x8x28xbf16>
    %109 = vector.shape_cast %108 : vector<6x1x8x28xbf16> to vector<6x8x28xbf16>
    %110 = vector.shape_cast %109 : vector<6x8x28xbf16> to vector<48x28xbf16>
    %c4_113 = arith.constant 4 : index
    %c0_114 = arith.constant 0 : index
    %c0_115 = arith.constant 0 : index
    %111 = vector.load %arg2[%c4_113, %c0_114, %c0_115] : memref<5x28x256xbf16, #tpu.memory_space<vmem>>, vector<1x28x256xbf16>
    %112 = vector.shape_cast %111 : vector<1x28x256xbf16> to vector<28x256xbf16>
    %cst_116 = arith.constant dense<0.000000e+00> : vector<48x256xf32>
    %113 = tpu.matmul %110, %112, %cst_116 {dimension_numbers = #tpu.dot_dimension_numbers<[1], [0], [0], [1], [0, 0, 1, 1], [], []>} : vector<48x28xbf16>, vector<28x256xbf16>, vector<48x256xf32> -> vector<48x256xf32>
    %114 = arith.addf %107, %113 : vector<48x256xf32>
    %115 = vector.extract_strided_slice %114 {offsets = [0, 0], sizes = [48, 128], strides = [1, 1]} : vector<48x256xf32> to vector<48x128xf32>
    %116 = vector.extract_strided_slice %114 {offsets = [0, 128], sizes = [48, 128], strides = [1, 1]} : vector<48x256xf32> to vector<48x128xf32>
    %117 = arith.maximumf %115, %116 : vector<48x128xf32>
    %c0_117 = arith.constant 0 : index
    %c3_118 = arith.constant 3 : index
    %c0_119 = arith.constant 0 : index
    %c0_120 = arith.constant 0 : index
    %118 = vector.load %arg1[%c0_117, %c3_118, %c0_119, %c0_120] : memref<7x4x8x28xbf16, #tpu.memory_space<vmem>>, vector<6x1x8x28xbf16>
    %119 = vector.shape_cast %118 : vector<6x1x8x28xbf16> to vector<6x8x28xbf16>
    %120 = vector.shape_cast %119 : vector<6x8x28xbf16> to vector<48x28xbf16>
    %c0_121 = arith.constant 0 : index
    %c0_122 = arith.constant 0 : index
    %c0_123 = arith.constant 0 : index
    %121 = vector.load %arg2[%c0_121, %c0_122, %c0_123] : memref<5x28x256xbf16, #tpu.memory_space<vmem>>, vector<1x28x256xbf16>
    %122 = vector.shape_cast %121 : vector<1x28x256xbf16> to vector<28x256xbf16>
    %cst_124 = arith.constant dense<0.000000e+00> : vector<48x256xf32>
    %123 = tpu.matmul %120, %122, %cst_124 {dimension_numbers = #tpu.dot_dimension_numbers<[1], [0], [0], [1], [0, 0, 1, 1], [], []>} : vector<48x28xbf16>, vector<28x256xbf16>, vector<48x256xf32> -> vector<48x256xf32>
    %c1_125 = arith.constant 1 : index
    %c0_126 = arith.constant 0 : index
    %c0_127 = arith.constant 0 : index
    %c0_128 = arith.constant 0 : index
    %124 = vector.load %arg1[%c1_125, %c0_126, %c0_127, %c0_128] : memref<7x4x8x28xbf16, #tpu.memory_space<vmem>>, vector<6x1x8x28xbf16>
    %125 = vector.shape_cast %124 : vector<6x1x8x28xbf16> to vector<6x8x28xbf16>
    %126 = vector.shape_cast %125 : vector<6x8x28xbf16> to vector<48x28xbf16>
    %c1_129 = arith.constant 1 : index
    %c0_130 = arith.constant 0 : index
    %c0_131 = arith.constant 0 : index
    %127 = vector.load %arg2[%c1_129, %c0_130, %c0_131] : memref<5x28x256xbf16, #tpu.memory_space<vmem>>, vector<1x28x256xbf16>
    %128 = vector.shape_cast %127 : vector<1x28x256xbf16> to vector<28x256xbf16>
    %cst_132 = arith.constant dense<0.000000e+00> : vector<48x256xf32>
    %129 = tpu.matmul %126, %128, %cst_132 {dimension_numbers = #tpu.dot_dimension_numbers<[1], [0], [0], [1], [0, 0, 1, 1], [], []>} : vector<48x28xbf16>, vector<28x256xbf16>, vector<48x256xf32> -> vector<48x256xf32>
    %130 = arith.addf %123, %129 : vector<48x256xf32>
    %c1_133 = arith.constant 1 : index
    %c1_134 = arith.constant 1 : index
    %c0_135 = arith.constant 0 : index
    %c0_136 = arith.constant 0 : index
    %131 = vector.load %arg1[%c1_133, %c1_134, %c0_135, %c0_136] : memref<7x4x8x28xbf16, #tpu.memory_space<vmem>>, vector<6x1x8x28xbf16>
    %132 = vector.shape_cast %131 : vector<6x1x8x28xbf16> to vector<6x8x28xbf16>
    %133 = vector.shape_cast %132 : vector<6x8x28xbf16> to vector<48x28xbf16>
    %c2_137 = arith.constant 2 : index
    %c0_138 = arith.constant 0 : index
    %c0_139 = arith.constant 0 : index
    %134 = vector.load %arg2[%c2_137, %c0_138, %c0_139] : memref<5x28x256xbf16, #tpu.memory_space<vmem>>, vector<1x28x256xbf16>
    %135 = vector.shape_cast %134 : vector<1x28x256xbf16> to vector<28x256xbf16>
    %cst_140 = arith.constant dense<0.000000e+00> : vector<48x256xf32>
    %136 = tpu.matmul %133, %135, %cst_140 {dimension_numbers = #tpu.dot_dimension_numbers<[1], [0], [0], [1], [0, 0, 1, 1], [], []>} : vector<48x28xbf16>, vector<28x256xbf16>, vector<48x256xf32> -> vector<48x256xf32>
    %137 = arith.addf %130, %136 : vector<48x256xf32>
    %c1_141 = arith.constant 1 : index
    %c2_142 = arith.constant 2 : index
    %c0_143 = arith.constant 0 : index
    %c0_144 = arith.constant 0 : index
    %138 = vector.load %arg1[%c1_141, %c2_142, %c0_143, %c0_144] : memref<7x4x8x28xbf16, #tpu.memory_space<vmem>>, vector<6x1x8x28xbf16>
    %139 = vector.shape_cast %138 : vector<6x1x8x28xbf16> to vector<6x8x28xbf16>
    %140 = vector.shape_cast %139 : vector<6x8x28xbf16> to vector<48x28xbf16>
    %c3_145 = arith.constant 3 : index
    %c0_146 = arith.constant 0 : index
    %c0_147 = arith.constant 0 : index
    %141 = vector.load %arg2[%c3_145, %c0_146, %c0_147] : memref<5x28x256xbf16, #tpu.memory_space<vmem>>, vector<1x28x256xbf16>
    %142 = vector.shape_cast %141 : vector<1x28x256xbf16> to vector<28x256xbf16>
    %cst_148 = arith.constant dense<0.000000e+00> : vector<48x256xf32>
    %143 = tpu.matmul %140, %142, %cst_148 {dimension_numbers = #tpu.dot_dimension_numbers<[1], [0], [0], [1], [0, 0, 1, 1], [], []>} : vector<48x28xbf16>, vector<28x256xbf16>, vector<48x256xf32> -> vector<48x256xf32>
    %144 = arith.addf %137, %143 : vector<48x256xf32>
    %c1_149 = arith.constant 1 : index
    %c3_150 = arith.constant 3 : index
    %c0_151 = arith.constant 0 : index
    %c0_152 = arith.constant 0 : index
    %145 = vector.load %arg1[%c1_149, %c3_150, %c0_151, %c0_152] : memref<7x4x8x28xbf16, #tpu.memory_space<vmem>>, vector<6x1x8x28xbf16>
    %146 = vector.shape_cast %145 : vector<6x1x8x28xbf16> to vector<6x8x28xbf16>
    %147 = vector.shape_cast %146 : vector<6x8x28xbf16> to vector<48x28xbf16>
    %c4_153 = arith.constant 4 : index
    %c0_154 = arith.constant 0 : index
    %c0_155 = arith.constant 0 : index
    %148 = vector.load %arg2[%c4_153, %c0_154, %c0_155] : memref<5x28x256xbf16, #tpu.memory_space<vmem>>, vector<1x28x256xbf16>
    %149 = vector.shape_cast %148 : vector<1x28x256xbf16> to vector<28x256xbf16>
    %cst_156 = arith.constant dense<0.000000e+00> : vector<48x256xf32>
    %150 = tpu.matmul %147, %149, %cst_156 {dimension_numbers = #tpu.dot_dimension_numbers<[1], [0], [0], [1], [0, 0, 1, 1], [], []>} : vector<48x28xbf16>, vector<28x256xbf16>, vector<48x256xf32> -> vector<48x256xf32>
    %151 = arith.addf %144, %150 : vector<48x256xf32>
    %152 = vector.extract_strided_slice %151 {offsets = [0, 0], sizes = [48, 128], strides = [1, 1]} : vector<48x256xf32> to vector<48x128xf32>
    %153 = vector.extract_strided_slice %151 {offsets = [0, 128], sizes = [48, 128], strides = [1, 1]} : vector<48x256xf32> to vector<48x128xf32>
    %154 = arith.maximumf %152, %153 : vector<48x128xf32>
    %155 = arith.maximumf %117, %154 : vector<48x128xf32>
    %c0_157 = arith.constant 0 : index
    %c0_158 = arith.constant 0 : index
    %156 = vector.load %arg3[%c0_157, %c0_158] : memref<1x128xf32, #tpu.memory_space<vmem>>, vector<1x128xf32>
    %157 = vector.broadcast %156 : vector<1x128xf32> to vector<48x128xf32>
    %158 = arith.addf %155, %157 : vector<48x128xf32>
    %cst_159 = arith.constant 0.000000e+00 : f32
    %159 = vector.broadcast %cst_159 : f32 to vector<48x128xf32>
    %160 = arith.maximumf %158, %159 : vector<48x128xf32>
    %161 = arith.truncf %160 : vector<48x128xf32> to vector<48x128xbf16>
    %162 = vector.extract_strided_slice %80 {offsets = [0, 0], sizes = [8, 128], strides = [1, 1]} : vector<48x128xbf16> to vector<8x128xbf16>
    %c0_160 = arith.constant 0 : index
    %c0_161 = arith.constant 0 : index
    %c0_162 = arith.constant 0 : index
    %163 = vector.load %arg4[%c0_160, %c0_161, %c0_162] : memref<5x128x256xbf16, #tpu.memory_space<vmem>>, vector<1x128x256xbf16>
    %164 = vector.shape_cast %163 : vector<1x128x256xbf16> to vector<128x256xbf16>
    %cst_163 = arith.constant dense<0.000000e+00> : vector<8x256xf32>
    %165 = tpu.matmul %162, %164, %cst_163 {dimension_numbers = #tpu.dot_dimension_numbers<[1], [0], [0], [1], [0, 0, 1, 1], [], []>} : vector<8x128xbf16>, vector<128x256xbf16>, vector<8x256xf32> -> vector<8x256xf32>
    %166 = vector.extract_strided_slice %161 {offsets = [0, 0], sizes = [8, 128], strides = [1, 1]} : vector<48x128xbf16> to vector<8x128xbf16>
    %c1_164 = arith.constant 1 : index
    %c0_165 = arith.constant 0 : index
    %c0_166 = arith.constant 0 : index
    %167 = vector.load %arg4[%c1_164, %c0_165, %c0_166] : memref<5x128x256xbf16, #tpu.memory_space<vmem>>, vector<1x128x256xbf16>
    %168 = vector.shape_cast %167 : vector<1x128x256xbf16> to vector<128x256xbf16>
    %cst_167 = arith.constant dense<0.000000e+00> : vector<8x256xf32>
    %169 = tpu.matmul %166, %168, %cst_167 {dimension_numbers = #tpu.dot_dimension_numbers<[1], [0], [0], [1], [0, 0, 1, 1], [], []>} : vector<8x128xbf16>, vector<128x256xbf16>, vector<8x256xf32> -> vector<8x256xf32>
    %170 = arith.addf %165, %169 : vector<8x256xf32>
    %171 = vector.extract_strided_slice %80 {offsets = [8, 0], sizes = [8, 128], strides = [1, 1]} : vector<48x128xbf16> to vector<8x128xbf16>
    %c2_168 = arith.constant 2 : index
    %c0_169 = arith.constant 0 : index
    %c0_170 = arith.constant 0 : index
    %172 = vector.load %arg4[%c2_168, %c0_169, %c0_170] : memref<5x128x256xbf16, #tpu.memory_space<vmem>>, vector<1x128x256xbf16>
    %173 = vector.shape_cast %172 : vector<1x128x256xbf16> to vector<128x256xbf16>
    %cst_171 = arith.constant dense<0.000000e+00> : vector<8x256xf32>
    %174 = tpu.matmul %171, %173, %cst_171 {dimension_numbers = #tpu.dot_dimension_numbers<[1], [0], [0], [1], [0, 0, 1, 1], [], []>} : vector<8x128xbf16>, vector<128x256xbf16>, vector<8x256xf32> -> vector<8x256xf32>
    %175 = arith.addf %170, %174 : vector<8x256xf32>
    %176 = vector.extract_strided_slice %161 {offsets = [8, 0], sizes = [8, 128], strides = [1, 1]} : vector<48x128xbf16> to vector<8x128xbf16>
    %c3_172 = arith.constant 3 : index
    %c0_173 = arith.constant 0 : index
    %c0_174 = arith.constant 0 : index
    %177 = vector.load %arg4[%c3_172, %c0_173, %c0_174] : memref<5x128x256xbf16, #tpu.memory_space<vmem>>, vector<1x128x256xbf16>
    %178 = vector.shape_cast %177 : vector<1x128x256xbf16> to vector<128x256xbf16>
    %cst_175 = arith.constant dense<0.000000e+00> : vector<8x256xf32>
    %179 = tpu.matmul %176, %178, %cst_175 {dimension_numbers = #tpu.dot_dimension_numbers<[1], [0], [0], [1], [0, 0, 1, 1], [], []>} : vector<8x128xbf16>, vector<128x256xbf16>, vector<8x256xf32> -> vector<8x256xf32>
    %180 = arith.addf %175, %179 : vector<8x256xf32>
    %181 = vector.extract_strided_slice %80 {offsets = [16, 0], sizes = [8, 128], strides = [1, 1]} : vector<48x128xbf16> to vector<8x128xbf16>
    %c4_176 = arith.constant 4 : index
    %c0_177 = arith.constant 0 : index
    %c0_178 = arith.constant 0 : index
    %182 = vector.load %arg4[%c4_176, %c0_177, %c0_178] : memref<5x128x256xbf16, #tpu.memory_space<vmem>>, vector<1x128x256xbf16>
    %183 = vector.shape_cast %182 : vector<1x128x256xbf16> to vector<128x256xbf16>
    %cst_179 = arith.constant dense<0.000000e+00> : vector<8x256xf32>
    %184 = tpu.matmul %181, %183, %cst_179 {dimension_numbers = #tpu.dot_dimension_numbers<[1], [0], [0], [1], [0, 0, 1, 1], [], []>} : vector<8x128xbf16>, vector<128x256xbf16>, vector<8x256xf32> -> vector<8x256xf32>
    %185 = arith.addf %180, %184 : vector<8x256xf32>
    %186 = vector.extract_strided_slice %185 {offsets = [0, 0], sizes = [8, 128], strides = [1, 1]} : vector<8x256xf32> to vector<8x128xf32>
    %187 = vector.extract_strided_slice %185 {offsets = [0, 128], sizes = [8, 128], strides = [1, 1]} : vector<8x256xf32> to vector<8x128xf32>
    %188 = arith.maximumf %186, %187 : vector<8x128xf32>
    %189 = vector.extract_strided_slice %161 {offsets = [0, 0], sizes = [8, 128], strides = [1, 1]} : vector<48x128xbf16> to vector<8x128xbf16>
    %c0_180 = arith.constant 0 : index
    %c0_181 = arith.constant 0 : index
    %c0_182 = arith.constant 0 : index
    %190 = vector.load %arg4[%c0_180, %c0_181, %c0_182] : memref<5x128x256xbf16, #tpu.memory_space<vmem>>, vector<1x128x256xbf16>
    %191 = vector.shape_cast %190 : vector<1x128x256xbf16> to vector<128x256xbf16>
    %cst_183 = arith.constant dense<0.000000e+00> : vector<8x256xf32>
    %192 = tpu.matmul %189, %191, %cst_183 {dimension_numbers = #tpu.dot_dimension_numbers<[1], [0], [0], [1], [0, 0, 1, 1], [], []>} : vector<8x128xbf16>, vector<128x256xbf16>, vector<8x256xf32> -> vector<8x256xf32>
    %193 = vector.extract_strided_slice %80 {offsets = [8, 0], sizes = [8, 128], strides = [1, 1]} : vector<48x128xbf16> to vector<8x128xbf16>
    %c1_184 = arith.constant 1 : index
    %c0_185 = arith.constant 0 : index
    %c0_186 = arith.constant 0 : index
    %194 = vector.load %arg4[%c1_184, %c0_185, %c0_186] : memref<5x128x256xbf16, #tpu.memory_space<vmem>>, vector<1x128x256xbf16>
    %195 = vector.shape_cast %194 : vector<1x128x256xbf16> to vector<128x256xbf16>
    %cst_187 = arith.constant dense<0.000000e+00> : vector<8x256xf32>
    %196 = tpu.matmul %193, %195, %cst_187 {dimension_numbers = #tpu.dot_dimension_numbers<[1], [0], [0], [1], [0, 0, 1, 1], [], []>} : vector<8x128xbf16>, vector<128x256xbf16>, vector<8x256xf32> -> vector<8x256xf32>
    %197 = arith.addf %192, %196 : vector<8x256xf32>
    %198 = vector.extract_strided_slice %161 {offsets = [8, 0], sizes = [8, 128], strides = [1, 1]} : vector<48x128xbf16> to vector<8x128xbf16>
    %c2_188 = arith.constant 2 : index
    %c0_189 = arith.constant 0 : index
    %c0_190 = arith.constant 0 : index
    %199 = vector.load %arg4[%c2_188, %c0_189, %c0_190] : memref<5x128x256xbf16, #tpu.memory_space<vmem>>, vector<1x128x256xbf16>
    %200 = vector.shape_cast %199 : vector<1x128x256xbf16> to vector<128x256xbf16>
    %cst_191 = arith.constant dense<0.000000e+00> : vector<8x256xf32>
    %201 = tpu.matmul %198, %200, %cst_191 {dimension_numbers = #tpu.dot_dimension_numbers<[1], [0], [0], [1], [0, 0, 1, 1], [], []>} : vector<8x128xbf16>, vector<128x256xbf16>, vector<8x256xf32> -> vector<8x256xf32>
    %202 = arith.addf %197, %201 : vector<8x256xf32>
    %203 = vector.extract_strided_slice %80 {offsets = [16, 0], sizes = [8, 128], strides = [1, 1]} : vector<48x128xbf16> to vector<8x128xbf16>
    %c3_192 = arith.constant 3 : index
    %c0_193 = arith.constant 0 : index
    %c0_194 = arith.constant 0 : index
    %204 = vector.load %arg4[%c3_192, %c0_193, %c0_194] : memref<5x128x256xbf16, #tpu.memory_space<vmem>>, vector<1x128x256xbf16>
    %205 = vector.shape_cast %204 : vector<1x128x256xbf16> to vector<128x256xbf16>
    %cst_195 = arith.constant dense<0.000000e+00> : vector<8x256xf32>
    %206 = tpu.matmul %203, %205, %cst_195 {dimension_numbers = #tpu.dot_dimension_numbers<[1], [0], [0], [1], [0, 0, 1, 1], [], []>} : vector<8x128xbf16>, vector<128x256xbf16>, vector<8x256xf32> -> vector<8x256xf32>
    %207 = arith.addf %202, %206 : vector<8x256xf32>
    %208 = vector.extract_strided_slice %161 {offsets = [16, 0], sizes = [8, 128], strides = [1, 1]} : vector<48x128xbf16> to vector<8x128xbf16>
    %c4_196 = arith.constant 4 : index
    %c0_197 = arith.constant 0 : index
    %c0_198 = arith.constant 0 : index
    %209 = vector.load %arg4[%c4_196, %c0_197, %c0_198] : memref<5x128x256xbf16, #tpu.memory_space<vmem>>, vector<1x128x256xbf16>
    %210 = vector.shape_cast %209 : vector<1x128x256xbf16> to vector<128x256xbf16>
    %cst_199 = arith.constant dense<0.000000e+00> : vector<8x256xf32>
    %211 = tpu.matmul %208, %210, %cst_199 {dimension_numbers = #tpu.dot_dimension_numbers<[1], [0], [0], [1], [0, 0, 1, 1], [], []>} : vector<8x128xbf16>, vector<128x256xbf16>, vector<8x256xf32> -> vector<8x256xf32>
    %212 = arith.addf %207, %211 : vector<8x256xf32>
    %213 = vector.extract_strided_slice %212 {offsets = [0, 0], sizes = [8, 128], strides = [1, 1]} : vector<8x256xf32> to vector<8x128xf32>
    %214 = vector.extract_strided_slice %212 {offsets = [0, 128], sizes = [8, 128], strides = [1, 1]} : vector<8x256xf32> to vector<8x128xf32>
    %215 = arith.maximumf %213, %214 : vector<8x128xf32>
    %216 = arith.maximumf %188, %215 : vector<8x128xf32>
    %c0_200 = arith.constant 0 : index
    %c0_201 = arith.constant 0 : index
    %217 = vector.load %arg5[%c0_200, %c0_201] : memref<1x128xf32, #tpu.memory_space<vmem>>, vector<1x128xf32>
    %218 = vector.broadcast %217 : vector<1x128xf32> to vector<8x128xf32>
    %219 = arith.addf %216, %218 : vector<8x128xf32>
    %cst_202 = arith.constant 0.000000e+00 : f32
    %220 = vector.broadcast %cst_202 : f32 to vector<8x128xf32>
    %221 = arith.maximumf %219, %220 : vector<8x128xf32>
    %222 = arith.truncf %221 : vector<8x128xf32> to vector<8x128xbf16>
    %223 = vector.extract_strided_slice %80 {offsets = [8, 0], sizes = [8, 128], strides = [1, 1]} : vector<48x128xbf16> to vector<8x128xbf16>
    %c0_203 = arith.constant 0 : index
    %c0_204 = arith.constant 0 : index
    %c0_205 = arith.constant 0 : index
    %224 = vector.load %arg4[%c0_203, %c0_204, %c0_205] : memref<5x128x256xbf16, #tpu.memory_space<vmem>>, vector<1x128x256xbf16>
    %225 = vector.shape_cast %224 : vector<1x128x256xbf16> to vector<128x256xbf16>
    %cst_206 = arith.constant dense<0.000000e+00> : vector<8x256xf32>
    %226 = tpu.matmul %223, %225, %cst_206 {dimension_numbers = #tpu.dot_dimension_numbers<[1], [0], [0], [1], [0, 0, 1, 1], [], []>} : vector<8x128xbf16>, vector<128x256xbf16>, vector<8x256xf32> -> vector<8x256xf32>
    %227 = vector.extract_strided_slice %161 {offsets = [8, 0], sizes = [8, 128], strides = [1, 1]} : vector<48x128xbf16> to vector<8x128xbf16>
    %c1_207 = arith.constant 1 : index
    %c0_208 = arith.constant 0 : index
    %c0_209 = arith.constant 0 : index
    %228 = vector.load %arg4[%c1_207, %c0_208, %c0_209] : memref<5x128x256xbf16, #tpu.memory_space<vmem>>, vector<1x128x256xbf16>
    %229 = vector.shape_cast %228 : vector<1x128x256xbf16> to vector<128x256xbf16>
    %cst_210 = arith.constant dense<0.000000e+00> : vector<8x256xf32>
    %230 = tpu.matmul %227, %229, %cst_210 {dimension_numbers = #tpu.dot_dimension_numbers<[1], [0], [0], [1], [0, 0, 1, 1], [], []>} : vector<8x128xbf16>, vector<128x256xbf16>, vector<8x256xf32> -> vector<8x256xf32>
    %231 = arith.addf %226, %230 : vector<8x256xf32>
    %232 = vector.extract_strided_slice %80 {offsets = [16, 0], sizes = [8, 128], strides = [1, 1]} : vector<48x128xbf16> to vector<8x128xbf16>
    %c2_211 = arith.constant 2 : index
    %c0_212 = arith.constant 0 : index
    %c0_213 = arith.constant 0 : index
    %233 = vector.load %arg4[%c2_211, %c0_212, %c0_213] : memref<5x128x256xbf16, #tpu.memory_space<vmem>>, vector<1x128x256xbf16>
    %234 = vector.shape_cast %233 : vector<1x128x256xbf16> to vector<128x256xbf16>
    %cst_214 = arith.constant dense<0.000000e+00> : vector<8x256xf32>
    %235 = tpu.matmul %232, %234, %cst_214 {dimension_numbers = #tpu.dot_dimension_numbers<[1], [0], [0], [1], [0, 0, 1, 1], [], []>} : vector<8x128xbf16>, vector<128x256xbf16>, vector<8x256xf32> -> vector<8x256xf32>
    %236 = arith.addf %231, %235 : vector<8x256xf32>
    %237 = vector.extract_strided_slice %161 {offsets = [16, 0], sizes = [8, 128], strides = [1, 1]} : vector<48x128xbf16> to vector<8x128xbf16>
    %c3_215 = arith.constant 3 : index
    %c0_216 = arith.constant 0 : index
    %c0_217 = arith.constant 0 : index
    %238 = vector.load %arg4[%c3_215, %c0_216, %c0_217] : memref<5x128x256xbf16, #tpu.memory_space<vmem>>, vector<1x128x256xbf16>
    %239 = vector.shape_cast %238 : vector<1x128x256xbf16> to vector<128x256xbf16>
    %cst_218 = arith.constant dense<0.000000e+00> : vector<8x256xf32>
    %240 = tpu.matmul %237, %239, %cst_218 {dimension_numbers = #tpu.dot_dimension_numbers<[1], [0], [0], [1], [0, 0, 1, 1], [], []>} : vector<8x128xbf16>, vector<128x256xbf16>, vector<8x256xf32> -> vector<8x256xf32>
    %241 = arith.addf %236, %240 : vector<8x256xf32>
    %242 = vector.extract_strided_slice %80 {offsets = [24, 0], sizes = [8, 128], strides = [1, 1]} : vector<48x128xbf16> to vector<8x128xbf16>
    %c4_219 = arith.constant 4 : index
    %c0_220 = arith.constant 0 : index
    %c0_221 = arith.constant 0 : index
    %243 = vector.load %arg4[%c4_219, %c0_220, %c0_221] : memref<5x128x256xbf16, #tpu.memory_space<vmem>>, vector<1x128x256xbf16>
    %244 = vector.shape_cast %243 : vector<1x128x256xbf16> to vector<128x256xbf16>
    %cst_222 = arith.constant dense<0.000000e+00> : vector<8x256xf32>
    %245 = tpu.matmul %242, %244, %cst_222 {dimension_numbers = #tpu.dot_dimension_numbers<[1], [0], [0], [1], [0, 0, 1, 1], [], []>} : vector<8x128xbf16>, vector<128x256xbf16>, vector<8x256xf32> -> vector<8x256xf32>
    %246 = arith.addf %241, %245 : vector<8x256xf32>
    %247 = vector.extract_strided_slice %246 {offsets = [0, 0], sizes = [8, 128], strides = [1, 1]} : vector<8x256xf32> to vector<8x128xf32>
    %248 = vector.extract_strided_slice %246 {offsets = [0, 128], sizes = [8, 128], strides = [1, 1]} : vector<8x256xf32> to vector<8x128xf32>
    %249 = arith.maximumf %247, %248 : vector<8x128xf32>
    %250 = vector.extract_strided_slice %161 {offsets = [8, 0], sizes = [8, 128], strides = [1, 1]} : vector<48x128xbf16> to vector<8x128xbf16>
    %c0_223 = arith.constant 0 : index
    %c0_224 = arith.constant 0 : index
    %c0_225 = arith.constant 0 : index
    %251 = vector.load %arg4[%c0_223, %c0_224, %c0_225] : memref<5x128x256xbf16, #tpu.memory_space<vmem>>, vector<1x128x256xbf16>
    %252 = vector.shape_cast %251 : vector<1x128x256xbf16> to vector<128x256xbf16>
    %cst_226 = arith.constant dense<0.000000e+00> : vector<8x256xf32>
    %253 = tpu.matmul %250, %252, %cst_226 {dimension_numbers = #tpu.dot_dimension_numbers<[1], [0], [0], [1], [0, 0, 1, 1], [], []>} : vector<8x128xbf16>, vector<128x256xbf16>, vector<8x256xf32> -> vector<8x256xf32>
    %254 = vector.extract_strided_slice %80 {offsets = [16, 0], sizes = [8, 128], strides = [1, 1]} : vector<48x128xbf16> to vector<8x128xbf16>
    %c1_227 = arith.constant 1 : index
    %c0_228 = arith.constant 0 : index
    %c0_229 = arith.constant 0 : index
    %255 = vector.load %arg4[%c1_227, %c0_228, %c0_229] : memref<5x128x256xbf16, #tpu.memory_space<vmem>>, vector<1x128x256xbf16>
    %256 = vector.shape_cast %255 : vector<1x128x256xbf16> to vector<128x256xbf16>
    %cst_230 = arith.constant dense<0.000000e+00> : vector<8x256xf32>
    %257 = tpu.matmul %254, %256, %cst_230 {dimension_numbers = #tpu.dot_dimension_numbers<[1], [0], [0], [1], [0, 0, 1, 1], [], []>} : vector<8x128xbf16>, vector<128x256xbf16>, vector<8x256xf32> -> vector<8x256xf32>
    %258 = arith.addf %253, %257 : vector<8x256xf32>
    %259 = vector.extract_strided_slice %161 {offsets = [16, 0], sizes = [8, 128], strides = [1, 1]} : vector<48x128xbf16> to vector<8x128xbf16>
    %c2_231 = arith.constant 2 : index
    %c0_232 = arith.constant 0 : index
    %c0_233 = arith.constant 0 : index
    %260 = vector.load %arg4[%c2_231, %c0_232, %c0_233] : memref<5x128x256xbf16, #tpu.memory_space<vmem>>, vector<1x128x256xbf16>
    %261 = vector.shape_cast %260 : vector<1x128x256xbf16> to vector<128x256xbf16>
    %cst_234 = arith.constant dense<0.000000e+00> : vector<8x256xf32>
    %262 = tpu.matmul %259, %261, %cst_234 {dimension_numbers = #tpu.dot_dimension_numbers<[1], [0], [0], [1], [0, 0, 1, 1], [], []>} : vector<8x128xbf16>, vector<128x256xbf16>, vector<8x256xf32> -> vector<8x256xf32>
    %263 = arith.addf %258, %262 : vector<8x256xf32>
    %264 = vector.extract_strided_slice %80 {offsets = [24, 0], sizes = [8, 128], strides = [1, 1]} : vector<48x128xbf16> to vector<8x128xbf16>
    %c3_235 = arith.constant 3 : index
    %c0_236 = arith.constant 0 : index
    %c0_237 = arith.constant 0 : index
    %265 = vector.load %arg4[%c3_235, %c0_236, %c0_237] : memref<5x128x256xbf16, #tpu.memory_space<vmem>>, vector<1x128x256xbf16>
    %266 = vector.shape_cast %265 : vector<1x128x256xbf16> to vector<128x256xbf16>
    %cst_238 = arith.constant dense<0.000000e+00> : vector<8x256xf32>
    %267 = tpu.matmul %264, %266, %cst_238 {dimension_numbers = #tpu.dot_dimension_numbers<[1], [0], [0], [1], [0, 0, 1, 1], [], []>} : vector<8x128xbf16>, vector<128x256xbf16>, vector<8x256xf32> -> vector<8x256xf32>
    %268 = arith.addf %263, %267 : vector<8x256xf32>
    %269 = vector.extract_strided_slice %161 {offsets = [24, 0], sizes = [8, 128], strides = [1, 1]} : vector<48x128xbf16> to vector<8x128xbf16>
    %c4_239 = arith.constant 4 : index
    %c0_240 = arith.constant 0 : index
    %c0_241 = arith.constant 0 : index
    %270 = vector.load %arg4[%c4_239, %c0_240, %c0_241] : memref<5x128x256xbf16, #tpu.memory_space<vmem>>, vector<1x128x256xbf16>
    %271 = vector.shape_cast %270 : vector<1x128x256xbf16> to vector<128x256xbf16>
    %cst_242 = arith.constant dense<0.000000e+00> : vector<8x256xf32>
    %272 = tpu.matmul %269, %271, %cst_242 {dimension_numbers = #tpu.dot_dimension_numbers<[1], [0], [0], [1], [0, 0, 1, 1], [], []>} : vector<8x128xbf16>, vector<128x256xbf16>, vector<8x256xf32> -> vector<8x256xf32>
    %273 = arith.addf %268, %272 : vector<8x256xf32>
    %274 = vector.extract_strided_slice %273 {offsets = [0, 0], sizes = [8, 128], strides = [1, 1]} : vector<8x256xf32> to vector<8x128xf32>
    %275 = vector.extract_strided_slice %273 {offsets = [0, 128], sizes = [8, 128], strides = [1, 1]} : vector<8x256xf32> to vector<8x128xf32>
    %276 = arith.maximumf %274, %275 : vector<8x128xf32>
    %277 = arith.maximumf %249, %276 : vector<8x128xf32>
    %c0_243 = arith.constant 0 : index
    %c0_244 = arith.constant 0 : index
    %278 = vector.load %arg5[%c0_243, %c0_244] : memref<1x128xf32, #tpu.memory_space<vmem>>, vector<1x128xf32>
    %279 = vector.broadcast %278 : vector<1x128xf32> to vector<8x128xf32>
    %280 = arith.addf %277, %279 : vector<8x128xf32>
    %cst_245 = arith.constant 0.000000e+00 : f32
    %281 = vector.broadcast %cst_245 : f32 to vector<8x128xf32>
    %282 = arith.maximumf %280, %281 : vector<8x128xf32>
    %283 = arith.truncf %282 : vector<8x128xf32> to vector<8x128xbf16>
    %284 = vector.extract_strided_slice %80 {offsets = [16, 0], sizes = [8, 128], strides = [1, 1]} : vector<48x128xbf16> to vector<8x128xbf16>
    %c0_246 = arith.constant 0 : index
    %c0_247 = arith.constant 0 : index
    %c0_248 = arith.constant 0 : index
    %285 = vector.load %arg4[%c0_246, %c0_247, %c0_248] : memref<5x128x256xbf16, #tpu.memory_space<vmem>>, vector<1x128x256xbf16>
    %286 = vector.shape_cast %285 : vector<1x128x256xbf16> to vector<128x256xbf16>
    %cst_249 = arith.constant dense<0.000000e+00> : vector<8x256xf32>
    %287 = tpu.matmul %284, %286, %cst_249 {dimension_numbers = #tpu.dot_dimension_numbers<[1], [0], [0], [1], [0, 0, 1, 1], [], []>} : vector<8x128xbf16>, vector<128x256xbf16>, vector<8x256xf32> -> vector<8x256xf32>
    %288 = vector.extract_strided_slice %161 {offsets = [16, 0], sizes = [8, 128], strides = [1, 1]} : vector<48x128xbf16> to vector<8x128xbf16>
    %c1_250 = arith.constant 1 : index
    %c0_251 = arith.constant 0 : index
    %c0_252 = arith.constant 0 : index
    %289 = vector.load %arg4[%c1_250, %c0_251, %c0_252] : memref<5x128x256xbf16, #tpu.memory_space<vmem>>, vector<1x128x256xbf16>
    %290 = vector.shape_cast %289 : vector<1x128x256xbf16> to vector<128x256xbf16>
    %cst_253 = arith.constant dense<0.000000e+00> : vector<8x256xf32>
    %291 = tpu.matmul %288, %290, %cst_253 {dimension_numbers = #tpu.dot_dimension_numbers<[1], [0], [0], [1], [0, 0, 1, 1], [], []>} : vector<8x128xbf16>, vector<128x256xbf16>, vector<8x256xf32> -> vector<8x256xf32>
    %292 = arith.addf %287, %291 : vector<8x256xf32>
    %293 = vector.extract_strided_slice %80 {offsets = [24, 0], sizes = [8, 128], strides = [1, 1]} : vector<48x128xbf16> to vector<8x128xbf16>
    %c2_254 = arith.constant 2 : index
    %c0_255 = arith.constant 0 : index
    %c0_256 = arith.constant 0 : index
    %294 = vector.load %arg4[%c2_254, %c0_255, %c0_256] : memref<5x128x256xbf16, #tpu.memory_space<vmem>>, vector<1x128x256xbf16>
    %295 = vector.shape_cast %294 : vector<1x128x256xbf16> to vector<128x256xbf16>
    %cst_257 = arith.constant dense<0.000000e+00> : vector<8x256xf32>
    %296 = tpu.matmul %293, %295, %cst_257 {dimension_numbers = #tpu.dot_dimension_numbers<[1], [0], [0], [1], [0, 0, 1, 1], [], []>} : vector<8x128xbf16>, vector<128x256xbf16>, vector<8x256xf32> -> vector<8x256xf32>
    %297 = arith.addf %292, %296 : vector<8x256xf32>
    %298 = vector.extract_strided_slice %161 {offsets = [24, 0], sizes = [8, 128], strides = [1, 1]} : vector<48x128xbf16> to vector<8x128xbf16>
    %c3_258 = arith.constant 3 : index
    %c0_259 = arith.constant 0 : index
    %c0_260 = arith.constant 0 : index
    %299 = vector.load %arg4[%c3_258, %c0_259, %c0_260] : memref<5x128x256xbf16, #tpu.memory_space<vmem>>, vector<1x128x256xbf16>
    %300 = vector.shape_cast %299 : vector<1x128x256xbf16> to vector<128x256xbf16>
    %cst_261 = arith.constant dense<0.000000e+00> : vector<8x256xf32>
    %301 = tpu.matmul %298, %300, %cst_261 {dimension_numbers = #tpu.dot_dimension_numbers<[1], [0], [0], [1], [0, 0, 1, 1], [], []>} : vector<8x128xbf16>, vector<128x256xbf16>, vector<8x256xf32> -> vector<8x256xf32>
    %302 = arith.addf %297, %301 : vector<8x256xf32>
    %303 = vector.extract_strided_slice %80 {offsets = [32, 0], sizes = [8, 128], strides = [1, 1]} : vector<48x128xbf16> to vector<8x128xbf16>
    %c4_262 = arith.constant 4 : index
    %c0_263 = arith.constant 0 : index
    %c0_264 = arith.constant 0 : index
    %304 = vector.load %arg4[%c4_262, %c0_263, %c0_264] : memref<5x128x256xbf16, #tpu.memory_space<vmem>>, vector<1x128x256xbf16>
    %305 = vector.shape_cast %304 : vector<1x128x256xbf16> to vector<128x256xbf16>
    %cst_265 = arith.constant dense<0.000000e+00> : vector<8x256xf32>
    %306 = tpu.matmul %303, %305, %cst_265 {dimension_numbers = #tpu.dot_dimension_numbers<[1], [0], [0], [1], [0, 0, 1, 1], [], []>} : vector<8x128xbf16>, vector<128x256xbf16>, vector<8x256xf32> -> vector<8x256xf32>
    %307 = arith.addf %302, %306 : vector<8x256xf32>
    %308 = vector.extract_strided_slice %307 {offsets = [0, 0], sizes = [8, 128], strides = [1, 1]} : vector<8x256xf32> to vector<8x128xf32>
    %309 = vector.extract_strided_slice %307 {offsets = [0, 128], sizes = [8, 128], strides = [1, 1]} : vector<8x256xf32> to vector<8x128xf32>
    %310 = arith.maximumf %308, %309 : vector<8x128xf32>
    %311 = vector.extract_strided_slice %161 {offsets = [16, 0], sizes = [8, 128], strides = [1, 1]} : vector<48x128xbf16> to vector<8x128xbf16>
    %c0_266 = arith.constant 0 : index
    %c0_267 = arith.constant 0 : index
    %c0_268 = arith.constant 0 : index
    %312 = vector.load %arg4[%c0_266, %c0_267, %c0_268] : memref<5x128x256xbf16, #tpu.memory_space<vmem>>, vector<1x128x256xbf16>
    %313 = vector.shape_cast %312 : vector<1x128x256xbf16> to vector<128x256xbf16>
    %cst_269 = arith.constant dense<0.000000e+00> : vector<8x256xf32>
    %314 = tpu.matmul %311, %313, %cst_269 {dimension_numbers = #tpu.dot_dimension_numbers<[1], [0], [0], [1], [0, 0, 1, 1], [], []>} : vector<8x128xbf16>, vector<128x256xbf16>, vector<8x256xf32> -> vector<8x256xf32>
    %315 = vector.extract_strided_slice %80 {offsets = [24, 0], sizes = [8, 128], strides = [1, 1]} : vector<48x128xbf16> to vector<8x128xbf16>
    %c1_270 = arith.constant 1 : index
    %c0_271 = arith.constant 0 : index
    %c0_272 = arith.constant 0 : index
    %316 = vector.load %arg4[%c1_270, %c0_271, %c0_272] : memref<5x128x256xbf16, #tpu.memory_space<vmem>>, vector<1x128x256xbf16>
    %317 = vector.shape_cast %316 : vector<1x128x256xbf16> to vector<128x256xbf16>
    %cst_273 = arith.constant dense<0.000000e+00> : vector<8x256xf32>
    %318 = tpu.matmul %315, %317, %cst_273 {dimension_numbers = #tpu.dot_dimension_numbers<[1], [0], [0], [1], [0, 0, 1, 1], [], []>} : vector<8x128xbf16>, vector<128x256xbf16>, vector<8x256xf32> -> vector<8x256xf32>
    %319 = arith.addf %314, %318 : vector<8x256xf32>
    %320 = vector.extract_strided_slice %161 {offsets = [24, 0], sizes = [8, 128], strides = [1, 1]} : vector<48x128xbf16> to vector<8x128xbf16>
    %c2_274 = arith.constant 2 : index
    %c0_275 = arith.constant 0 : index
    %c0_276 = arith.constant 0 : index
    %321 = vector.load %arg4[%c2_274, %c0_275, %c0_276] : memref<5x128x256xbf16, #tpu.memory_space<vmem>>, vector<1x128x256xbf16>
    %322 = vector.shape_cast %321 : vector<1x128x256xbf16> to vector<128x256xbf16>
    %cst_277 = arith.constant dense<0.000000e+00> : vector<8x256xf32>
    %323 = tpu.matmul %320, %322, %cst_277 {dimension_numbers = #tpu.dot_dimension_numbers<[1], [0], [0], [1], [0, 0, 1, 1], [], []>} : vector<8x128xbf16>, vector<128x256xbf16>, vector<8x256xf32> -> vector<8x256xf32>
    %324 = arith.addf %319, %323 : vector<8x256xf32>
    %325 = vector.extract_strided_slice %80 {offsets = [32, 0], sizes = [8, 128], strides = [1, 1]} : vector<48x128xbf16> to vector<8x128xbf16>
    %c3_278 = arith.constant 3 : index
    %c0_279 = arith.constant 0 : index
    %c0_280 = arith.constant 0 : index
    %326 = vector.load %arg4[%c3_278, %c0_279, %c0_280] : memref<5x128x256xbf16, #tpu.memory_space<vmem>>, vector<1x128x256xbf16>
    %327 = vector.shape_cast %326 : vector<1x128x256xbf16> to vector<128x256xbf16>
    %cst_281 = arith.constant dense<0.000000e+00> : vector<8x256xf32>
    %328 = tpu.matmul %325, %327, %cst_281 {dimension_numbers = #tpu.dot_dimension_numbers<[1], [0], [0], [1], [0, 0, 1, 1], [], []>} : vector<8x128xbf16>, vector<128x256xbf16>, vector<8x256xf32> -> vector<8x256xf32>
    %329 = arith.addf %324, %328 : vector<8x256xf32>
    %330 = vector.extract_strided_slice %161 {offsets = [32, 0], sizes = [8, 128], strides = [1, 1]} : vector<48x128xbf16> to vector<8x128xbf16>
    %c4_282 = arith.constant 4 : index
    %c0_283 = arith.constant 0 : index
    %c0_284 = arith.constant 0 : index
    %331 = vector.load %arg4[%c4_282, %c0_283, %c0_284] : memref<5x128x256xbf16, #tpu.memory_space<vmem>>, vector<1x128x256xbf16>
    %332 = vector.shape_cast %331 : vector<1x128x256xbf16> to vector<128x256xbf16>
    %cst_285 = arith.constant dense<0.000000e+00> : vector<8x256xf32>
    %333 = tpu.matmul %330, %332, %cst_285 {dimension_numbers = #tpu.dot_dimension_numbers<[1], [0], [0], [1], [0, 0, 1, 1], [], []>} : vector<8x128xbf16>, vector<128x256xbf16>, vector<8x256xf32> -> vector<8x256xf32>
    %334 = arith.addf %329, %333 : vector<8x256xf32>
    %335 = vector.extract_strided_slice %334 {offsets = [0, 0], sizes = [8, 128], strides = [1, 1]} : vector<8x256xf32> to vector<8x128xf32>
    %336 = vector.extract_strided_slice %334 {offsets = [0, 128], sizes = [8, 128], strides = [1, 1]} : vector<8x256xf32> to vector<8x128xf32>
    %337 = arith.maximumf %335, %336 : vector<8x128xf32>
    %338 = arith.maximumf %310, %337 : vector<8x128xf32>
    %c0_286 = arith.constant 0 : index
    %c0_287 = arith.constant 0 : index
    %339 = vector.load %arg5[%c0_286, %c0_287] : memref<1x128xf32, #tpu.memory_space<vmem>>, vector<1x128xf32>
    %340 = vector.broadcast %339 : vector<1x128xf32> to vector<8x128xf32>
    %341 = arith.addf %338, %340 : vector<8x128xf32>
    %cst_288 = arith.constant 0.000000e+00 : f32
    %342 = vector.broadcast %cst_288 : f32 to vector<8x128xf32>
    %343 = arith.maximumf %341, %342 : vector<8x128xf32>
    %344 = arith.truncf %343 : vector<8x128xf32> to vector<8x128xbf16>
    %345 = vector.extract_strided_slice %80 {offsets = [24, 0], sizes = [8, 128], strides = [1, 1]} : vector<48x128xbf16> to vector<8x128xbf16>
    %c0_289 = arith.constant 0 : index
    %c0_290 = arith.constant 0 : index
    %c0_291 = arith.constant 0 : index
    %346 = vector.load %arg4[%c0_289, %c0_290, %c0_291] : memref<5x128x256xbf16, #tpu.memory_space<vmem>>, vector<1x128x256xbf16>
    %347 = vector.shape_cast %346 : vector<1x128x256xbf16> to vector<128x256xbf16>
    %cst_292 = arith.constant dense<0.000000e+00> : vector<8x256xf32>
    %348 = tpu.matmul %345, %347, %cst_292 {dimension_numbers = #tpu.dot_dimension_numbers<[1], [0], [0], [1], [0, 0, 1, 1], [], []>} : vector<8x128xbf16>, vector<128x256xbf16>, vector<8x256xf32> -> vector<8x256xf32>
    %349 = vector.extract_strided_slice %161 {offsets = [24, 0], sizes = [8, 128], strides = [1, 1]} : vector<48x128xbf16> to vector<8x128xbf16>
    %c1_293 = arith.constant 1 : index
    %c0_294 = arith.constant 0 : index
    %c0_295 = arith.constant 0 : index
    %350 = vector.load %arg4[%c1_293, %c0_294, %c0_295] : memref<5x128x256xbf16, #tpu.memory_space<vmem>>, vector<1x128x256xbf16>
    %351 = vector.shape_cast %350 : vector<1x128x256xbf16> to vector<128x256xbf16>
    %cst_296 = arith.constant dense<0.000000e+00> : vector<8x256xf32>
    %352 = tpu.matmul %349, %351, %cst_296 {dimension_numbers = #tpu.dot_dimension_numbers<[1], [0], [0], [1], [0, 0, 1, 1], [], []>} : vector<8x128xbf16>, vector<128x256xbf16>, vector<8x256xf32> -> vector<8x256xf32>
    %353 = arith.addf %348, %352 : vector<8x256xf32>
    %354 = vector.extract_strided_slice %80 {offsets = [32, 0], sizes = [8, 128], strides = [1, 1]} : vector<48x128xbf16> to vector<8x128xbf16>
    %c2_297 = arith.constant 2 : index
    %c0_298 = arith.constant 0 : index
    %c0_299 = arith.constant 0 : index
    %355 = vector.load %arg4[%c2_297, %c0_298, %c0_299] : memref<5x128x256xbf16, #tpu.memory_space<vmem>>, vector<1x128x256xbf16>
    %356 = vector.shape_cast %355 : vector<1x128x256xbf16> to vector<128x256xbf16>
    %cst_300 = arith.constant dense<0.000000e+00> : vector<8x256xf32>
    %357 = tpu.matmul %354, %356, %cst_300 {dimension_numbers = #tpu.dot_dimension_numbers<[1], [0], [0], [1], [0, 0, 1, 1], [], []>} : vector<8x128xbf16>, vector<128x256xbf16>, vector<8x256xf32> -> vector<8x256xf32>
    %358 = arith.addf %353, %357 : vector<8x256xf32>
    %359 = vector.extract_strided_slice %161 {offsets = [32, 0], sizes = [8, 128], strides = [1, 1]} : vector<48x128xbf16> to vector<8x128xbf16>
    %c3_301 = arith.constant 3 : index
    %c0_302 = arith.constant 0 : index
    %c0_303 = arith.constant 0 : index
    %360 = vector.load %arg4[%c3_301, %c0_302, %c0_303] : memref<5x128x256xbf16, #tpu.memory_space<vmem>>, vector<1x128x256xbf16>
    %361 = vector.shape_cast %360 : vector<1x128x256xbf16> to vector<128x256xbf16>
    %cst_304 = arith.constant dense<0.000000e+00> : vector<8x256xf32>
    %362 = tpu.matmul %359, %361, %cst_304 {dimension_numbers = #tpu.dot_dimension_numbers<[1], [0], [0], [1], [0, 0, 1, 1], [], []>} : vector<8x128xbf16>, vector<128x256xbf16>, vector<8x256xf32> -> vector<8x256xf32>
    %363 = arith.addf %358, %362 : vector<8x256xf32>
    %364 = vector.extract_strided_slice %80 {offsets = [40, 0], sizes = [8, 128], strides = [1, 1]} : vector<48x128xbf16> to vector<8x128xbf16>
    %c4_305 = arith.constant 4 : index
    %c0_306 = arith.constant 0 : index
    %c0_307 = arith.constant 0 : index
    %365 = vector.load %arg4[%c4_305, %c0_306, %c0_307] : memref<5x128x256xbf16, #tpu.memory_space<vmem>>, vector<1x128x256xbf16>
    %366 = vector.shape_cast %365 : vector<1x128x256xbf16> to vector<128x256xbf16>
    %cst_308 = arith.constant dense<0.000000e+00> : vector<8x256xf32>
    %367 = tpu.matmul %364, %366, %cst_308 {dimension_numbers = #tpu.dot_dimension_numbers<[1], [0], [0], [1], [0, 0, 1, 1], [], []>} : vector<8x128xbf16>, vector<128x256xbf16>, vector<8x256xf32> -> vector<8x256xf32>
    %368 = arith.addf %363, %367 : vector<8x256xf32>
    %369 = vector.extract_strided_slice %368 {offsets = [0, 0], sizes = [8, 128], strides = [1, 1]} : vector<8x256xf32> to vector<8x128xf32>
    %370 = vector.extract_strided_slice %368 {offsets = [0, 128], sizes = [8, 128], strides = [1, 1]} : vector<8x256xf32> to vector<8x128xf32>
    %371 = arith.maximumf %369, %370 : vector<8x128xf32>
    %372 = vector.extract_strided_slice %161 {offsets = [24, 0], sizes = [8, 128], strides = [1, 1]} : vector<48x128xbf16> to vector<8x128xbf16>
    %c0_309 = arith.constant 0 : index
    %c0_310 = arith.constant 0 : index
    %c0_311 = arith.constant 0 : index
    %373 = vector.load %arg4[%c0_309, %c0_310, %c0_311] : memref<5x128x256xbf16, #tpu.memory_space<vmem>>, vector<1x128x256xbf16>
    %374 = vector.shape_cast %373 : vector<1x128x256xbf16> to vector<128x256xbf16>
    %cst_312 = arith.constant dense<0.000000e+00> : vector<8x256xf32>
    %375 = tpu.matmul %372, %374, %cst_312 {dimension_numbers = #tpu.dot_dimension_numbers<[1], [0], [0], [1], [0, 0, 1, 1], [], []>} : vector<8x128xbf16>, vector<128x256xbf16>, vector<8x256xf32> -> vector<8x256xf32>
    %376 = vector.extract_strided_slice %80 {offsets = [32, 0], sizes = [8, 128], strides = [1, 1]} : vector<48x128xbf16> to vector<8x128xbf16>
    %c1_313 = arith.constant 1 : index
    %c0_314 = arith.constant 0 : index
    %c0_315 = arith.constant 0 : index
    %377 = vector.load %arg4[%c1_313, %c0_314, %c0_315] : memref<5x128x256xbf16, #tpu.memory_space<vmem>>, vector<1x128x256xbf16>
    %378 = vector.shape_cast %377 : vector<1x128x256xbf16> to vector<128x256xbf16>
    %cst_316 = arith.constant dense<0.000000e+00> : vector<8x256xf32>
    %379 = tpu.matmul %376, %378, %cst_316 {dimension_numbers = #tpu.dot_dimension_numbers<[1], [0], [0], [1], [0, 0, 1, 1], [], []>} : vector<8x128xbf16>, vector<128x256xbf16>, vector<8x256xf32> -> vector<8x256xf32>
    %380 = arith.addf %375, %379 : vector<8x256xf32>
    %381 = vector.extract_strided_slice %161 {offsets = [32, 0], sizes = [8, 128], strides = [1, 1]} : vector<48x128xbf16> to vector<8x128xbf16>
    %c2_317 = arith.constant 2 : index
    %c0_318 = arith.constant 0 : index
    %c0_319 = arith.constant 0 : index
    %382 = vector.load %arg4[%c2_317, %c0_318, %c0_319] : memref<5x128x256xbf16, #tpu.memory_space<vmem>>, vector<1x128x256xbf16>
    %383 = vector.shape_cast %382 : vector<1x128x256xbf16> to vector<128x256xbf16>
    %cst_320 = arith.constant dense<0.000000e+00> : vector<8x256xf32>
    %384 = tpu.matmul %381, %383, %cst_320 {dimension_numbers = #tpu.dot_dimension_numbers<[1], [0], [0], [1], [0, 0, 1, 1], [], []>} : vector<8x128xbf16>, vector<128x256xbf16>, vector<8x256xf32> -> vector<8x256xf32>
    %385 = arith.addf %380, %384 : vector<8x256xf32>
    %386 = vector.extract_strided_slice %80 {offsets = [40, 0], sizes = [8, 128], strides = [1, 1]} : vector<48x128xbf16> to vector<8x128xbf16>
    %c3_321 = arith.constant 3 : index
    %c0_322 = arith.constant 0 : index
    %c0_323 = arith.constant 0 : index
    %387 = vector.load %arg4[%c3_321, %c0_322, %c0_323] : memref<5x128x256xbf16, #tpu.memory_space<vmem>>, vector<1x128x256xbf16>
    %388 = vector.shape_cast %387 : vector<1x128x256xbf16> to vector<128x256xbf16>
    %cst_324 = arith.constant dense<0.000000e+00> : vector<8x256xf32>
    %389 = tpu.matmul %386, %388, %cst_324 {dimension_numbers = #tpu.dot_dimension_numbers<[1], [0], [0], [1], [0, 0, 1, 1], [], []>} : vector<8x128xbf16>, vector<128x256xbf16>, vector<8x256xf32> -> vector<8x256xf32>
    %390 = arith.addf %385, %389 : vector<8x256xf32>
    %391 = vector.extract_strided_slice %161 {offsets = [40, 0], sizes = [8, 128], strides = [1, 1]} : vector<48x128xbf16> to vector<8x128xbf16>
    %c4_325 = arith.constant 4 : index
    %c0_326 = arith.constant 0 : index
    %c0_327 = arith.constant 0 : index
    %392 = vector.load %arg4[%c4_325, %c0_326, %c0_327] : memref<5x128x256xbf16, #tpu.memory_space<vmem>>, vector<1x128x256xbf16>
    %393 = vector.shape_cast %392 : vector<1x128x256xbf16> to vector<128x256xbf16>
    %cst_328 = arith.constant dense<0.000000e+00> : vector<8x256xf32>
    %394 = tpu.matmul %391, %393, %cst_328 {dimension_numbers = #tpu.dot_dimension_numbers<[1], [0], [0], [1], [0, 0, 1, 1], [], []>} : vector<8x128xbf16>, vector<128x256xbf16>, vector<8x256xf32> -> vector<8x256xf32>
    %395 = arith.addf %390, %394 : vector<8x256xf32>
    %396 = vector.extract_strided_slice %395 {offsets = [0, 0], sizes = [8, 128], strides = [1, 1]} : vector<8x256xf32> to vector<8x128xf32>
    %397 = vector.extract_strided_slice %395 {offsets = [0, 128], sizes = [8, 128], strides = [1, 1]} : vector<8x256xf32> to vector<8x128xf32>
    %398 = arith.maximumf %396, %397 : vector<8x128xf32>
    %399 = arith.maximumf %371, %398 : vector<8x128xf32>
    %c0_329 = arith.constant 0 : index
    %c0_330 = arith.constant 0 : index
    %400 = vector.load %arg5[%c0_329, %c0_330] : memref<1x128xf32, #tpu.memory_space<vmem>>, vector<1x128xf32>
    %401 = vector.broadcast %400 : vector<1x128xf32> to vector<8x128xf32>
    %402 = arith.addf %399, %401 : vector<8x128xf32>
    %cst_331 = arith.constant 0.000000e+00 : f32
    %403 = vector.broadcast %cst_331 : f32 to vector<8x128xf32>
    %404 = arith.maximumf %402, %403 : vector<8x128xf32>
    %405 = arith.truncf %404 : vector<8x128xf32> to vector<8x128xbf16>
    %c0_332 = arith.constant 0 : index
    %c0_333 = arith.constant 0 : index
    %c0_334 = arith.constant 0 : index
    %406 = vector.load %arg6[%c0_332, %c0_333, %c0_334] : memref<4x128x128xbf16, #tpu.memory_space<vmem>>, vector<1x128x128xbf16>
    %407 = vector.shape_cast %406 : vector<1x128x128xbf16> to vector<128x128xbf16>
    %cst_335 = arith.constant dense<0.000000e+00> : vector<8x128xf32>
    %408 = tpu.matmul %222, %407, %cst_335 {dimension_numbers = #tpu.dot_dimension_numbers<[1], [0], [0], [1], [0, 0, 1, 1], [], []>} : vector<8x128xbf16>, vector<128x128xbf16>, vector<8x128xf32> -> vector<8x128xf32>
    %c1_336 = arith.constant 1 : index
    %c0_337 = arith.constant 0 : index
    %c0_338 = arith.constant 0 : index
    %409 = vector.load %arg6[%c1_336, %c0_337, %c0_338] : memref<4x128x128xbf16, #tpu.memory_space<vmem>>, vector<1x128x128xbf16>
    %410 = vector.shape_cast %409 : vector<1x128x128xbf16> to vector<128x128xbf16>
    %cst_339 = arith.constant dense<0.000000e+00> : vector<8x128xf32>
    %411 = tpu.matmul %283, %410, %cst_339 {dimension_numbers = #tpu.dot_dimension_numbers<[1], [0], [0], [1], [0, 0, 1, 1], [], []>} : vector<8x128xbf16>, vector<128x128xbf16>, vector<8x128xf32> -> vector<8x128xf32>
    %412 = arith.addf %408, %411 : vector<8x128xf32>
    %c2_340 = arith.constant 2 : index
    %c0_341 = arith.constant 0 : index
    %c0_342 = arith.constant 0 : index
    %413 = vector.load %arg6[%c2_340, %c0_341, %c0_342] : memref<4x128x128xbf16, #tpu.memory_space<vmem>>, vector<1x128x128xbf16>
    %414 = vector.shape_cast %413 : vector<1x128x128xbf16> to vector<128x128xbf16>
    %cst_343 = arith.constant dense<0.000000e+00> : vector<8x128xf32>
    %415 = tpu.matmul %344, %414, %cst_343 {dimension_numbers = #tpu.dot_dimension_numbers<[1], [0], [0], [1], [0, 0, 1, 1], [], []>} : vector<8x128xbf16>, vector<128x128xbf16>, vector<8x128xf32> -> vector<8x128xf32>
    %416 = arith.addf %412, %415 : vector<8x128xf32>
    %c3_344 = arith.constant 3 : index
    %c0_345 = arith.constant 0 : index
    %c0_346 = arith.constant 0 : index
    %417 = vector.load %arg6[%c3_344, %c0_345, %c0_346] : memref<4x128x128xbf16, #tpu.memory_space<vmem>>, vector<1x128x128xbf16>
    %418 = vector.shape_cast %417 : vector<1x128x128xbf16> to vector<128x128xbf16>
    %cst_347 = arith.constant dense<0.000000e+00> : vector<8x128xf32>
    %419 = tpu.matmul %405, %418, %cst_347 {dimension_numbers = #tpu.dot_dimension_numbers<[1], [0], [0], [1], [0, 0, 1, 1], [], []>} : vector<8x128xbf16>, vector<128x128xbf16>, vector<8x128xf32> -> vector<8x128xf32>
    %420 = arith.addf %416, %419 : vector<8x128xf32>
    %c0_348 = arith.constant 0 : index
    %c0_349 = arith.constant 0 : index
    %421 = vector.load %arg7[%c0_348, %c0_349] : memref<1x128xf32, #tpu.memory_space<vmem>>, vector<1x128xf32>
    %422 = vector.broadcast %421 : vector<1x128xf32> to vector<8x128xf32>
    %423 = arith.addf %420, %422 : vector<8x128xf32>
    %cst_350 = arith.constant 0.000000e+00 : f32
    %424 = vector.broadcast %cst_350 : f32 to vector<8x128xf32>
    %425 = arith.maximumf %423, %424 : vector<8x128xf32>
    %426 = arith.truncf %425 : vector<8x128xf32> to vector<8x128xbf16>
    %c0_351 = arith.constant 0 : index
    %c0_352 = arith.constant 0 : index
    %427 = vector.load %arg8[%c0_351, %c0_352] : memref<128x128xbf16, #tpu.memory_space<vmem>>, vector<128x128xbf16>
    %cst_353 = arith.constant dense<0.000000e+00> : vector<8x128xf32>
    %428 = tpu.matmul %426, %427, %cst_353 {dimension_numbers = #tpu.dot_dimension_numbers<[1], [0], [0], [1], [0, 0, 1, 1], [], []>} : vector<8x128xbf16>, vector<128x128xbf16>, vector<8x128xf32> -> vector<8x128xf32>
    %c0_354 = arith.constant 0 : index
    %c0_355 = arith.constant 0 : index
    %429 = vector.load %arg9[%c0_354, %c0_355] : memref<1x128xf32, #tpu.memory_space<vmem>>, vector<1x128xf32>
    %430 = vector.broadcast %429 : vector<1x128xf32> to vector<8x128xf32>
    %431 = arith.addf %428, %430 : vector<8x128xf32>
    %c0_356 = arith.constant 0 : index
    %c0_357 = arith.constant 0 : index
    %432 = vector.load %arg10[%c0_356, %c0_357] : memref<8x128xf32, #tpu.memory_space<vmem>>, vector<8x128xf32>
    tpu.vector_store %arg10[%c0_356, %c0_357], %431 {strides = array<i32>} : memref<8x128xf32, #tpu.memory_space<vmem>>, vector<8x128xf32>,
    return
  }
  func.func @transform_0(%arg0: i32) -> (i32, i32, i32, i32) {
    %c0_i32 = arith.constant 0 : i32
    %c0_i32_0 = arith.constant 0 : i32
    %c0_i32_1 = arith.constant 0 : i32
    %c0_i32_2 = arith.constant 0 : i32
    return %c0_i32, %c0_i32_0, %arg0, %c0_i32_1 : i32, i32, i32, i32
  }
  func.func @transform_1(%arg0: i32) -> (i32, i32, i32) {
    %c0_i32 = arith.constant 0 : i32
    %c0_i32_0 = arith.constant 0 : i32
    %c0_i32_1 = arith.constant 0 : i32
    %c0_i32_2 = arith.constant 0 : i32
    return %c0_i32, %c0_i32_0, %c0_i32_1 : i32, i32, i32
  }
  func.func @transform_2(%arg0: i32) -> (i32, i32) {
    %c0_i32 = arith.constant 0 : i32
    %c0_i32_0 = arith.constant 0 : i32
    %c0_i32_1 = arith.constant 0 : i32
    return %c0_i32, %c0_i32_0 : i32, i32
  }
  func.func @transform_3(%arg0: i32) -> (i32, i32, i32) {
    %c0_i32 = arith.constant 0 : i32
    %c0_i32_0 = arith.constant 0 : i32
    %c0_i32_1 = arith.constant 0 : i32
    %c0_i32_2 = arith.constant 0 : i32
    return %c0_i32, %c0_i32_0, %c0_i32_1 : i32, i32, i32
  }
  func.func @transform_4(%arg0: i32) -> (i32, i32) {
    %c0_i32 = arith.constant 0 : i32
    %c0_i32_0 = arith.constant 0 : i32
    %c0_i32_1 = arith.constant 0 : i32
    return %c0_i32, %c0_i32_0 : i32, i32
  }
  func.func @transform_5(%arg0: i32) -> (i32, i32, i32) {
    %c0_i32 = arith.constant 0 : i32
    %c0_i32_0 = arith.constant 0 : i32
    %c0_i32_1 = arith.constant 0 : i32
    %c0_i32_2 = arith.constant 0 : i32
    return %c0_i32, %c0_i32_0, %c0_i32_1 : i32, i32, i32
  }
  func.func @transform_6(%arg0: i32) -> (i32, i32) {
    %c0_i32 = arith.constant 0 : i32
    %c0_i32_0 = arith.constant 0 : i32
    %c0_i32_1 = arith.constant 0 : i32
    return %c0_i32, %c0_i32_0 : i32, i32
  }
  func.func @transform_7(%arg0: i32) -> (i32, i32) {
    %c0_i32 = arith.constant 0 : i32
    %c0_i32_0 = arith.constant 0 : i32
    %c0_i32_1 = arith.constant 0 : i32
    return %c0_i32, %c0_i32_0 : i32, i32
  }
  func.func @transform_8(%arg0: i32) -> (i32, i32) {
    %c0_i32 = arith.constant 0 : i32
    %c0_i32_0 = arith.constant 0 : i32
    %c0_i32_1 = arith.constant 0 : i32
    return %c0_i32, %c0_i32_0 : i32, i32
  }
  func.func @transform_9(%arg0: i32) -> (i32, i32) {
    %c0_i32 = arith.constant 0 : i32
    %c0_i32_0 = arith.constant 0 : i32
    return %arg0, %c0_i32 : i32, i32
  }
}

</mosaic_0001>

<llo_original>
// kernel: tile.13
$region0: #{tile.13}
  #allocation0 [shape = 's32[1]{0}', space=sflag, size = 0x4, scoped, tag = 'scoped memory for tile.13']
  %s0 = inlined_call_operand.vmem [shape: f32[10], index: 0, kind: input, shape index: {}]
  %s1 = inlined_call_operand.vmem [shape: f32[12,10], index: 1, kind: output, shape index: {}]
  // Predicated region
  $region2: #{tile.13} parent=0 // pred_check
    _
  $region3: #{tile.13} parent=0 // pred_check_branch
    %3 = sbr.rel (0) target = $region5
  $region4: #{tile.13} parent=0 // pred_region
    _
  $region5: #{tile.13} parent=0 // pred_fallthru
    _
  %v4 = vld [vmem:[%s0] ss:$0 sm:$0xff]
  %5 = vst [vmem:[%s1] sm:$0xff] %v4
  %s6 = scalar_lea.vmem %s1, 8
  %7 = vst [vmem:[%s6] sm:$0xff] %v4

// kernel: tile.14
$region0: #{tile.14}
  %s0 = inlined_call_operand.vmem [shape: f32[12,10], index: 0, kind: input, shape index: {}]
  %s1 = inlined_call_operand.vmem [shape: f32[120], index: 1, kind: output, shape index: {}]
  $region1: #{tile.14} parent=0
    #allocation0 [shape = 'u8[4096]{0}', space=vmem, size = 0x1000, scoped, tag = 'scoped mem for output reshape']
    %v2 = vld [vmem:[%s0] sm:$0x1]
    %vm3 = vcmask 80896
    %4 = vst.msk [vmem:[#allocation0] sm:$0x1] %vm3, %v2
    %s5 = scalar_lea.vmem %s0, 11
    %v6 = vld [vmem:[%s5] sm:$0x1]
    %7 = vrot.lane.b32.xlu0 %v6, 110
    %v8 = vpop.permute.xlu0 %7
    %vm9 = vcmask 982896
    %10 = vst.msk [vmem:[#allocation0] sm:$0x1] %vm9, %v8
    %s11 = scalar_lea.vmem %s0, 10
    %v12 = vld [vmem:[%s11] sm:$0x1]
    %13 = vrot.lane.b32.xlu0 %v12, 100
    %v14 = vpop.permute.xlu0 %13
    %vm15 = vcmask 900896
    %16 = vst.msk [vmem:[#allocation0] sm:$0x1] %vm15, %v14
    %s17 = scalar_lea.vmem %s0, 9
    %v18 = vld [vmem:[%s17] sm:$0x1]
    %19 = vrot.lane.b32.xlu0 %v18, 90
    %v20 = vpop.permute.xlu0 %19
    %vm21 = vcmask 818896
    %22 = vst.msk [vmem:[#allocation0] sm:$0x1] %vm21, %v20
    %s23 = scalar_lea.vmem %s0, 8
    %v24 = vld [vmem:[%s23] sm:$0x1]
    %25 = vrot.lane.b32.xlu0 %v24, 80
    %v26 = vpop.permute.xlu0 %25
    %vm27 = vcmask 736896
    %28 = vst.msk [vmem:[#allocation0] sm:$0x1] %vm27, %v26
    %s29 = scalar_lea.vmem %s0, 7
    %v30 = vld [vmem:[%s29] sm:$0x1]
    %31 = vrot.lane.b32.xlu0 %v30, 70
    %v32 = vpop.permute.xlu0 %31
    %vm33 = vcmask 654896
    %34 = vst.msk [vmem:[#allocation0] sm:$0x1] %vm33, %v32
    %s35 = scalar_lea.vmem %s0, 6
    %v36 = vld [vmem:[%s35] sm:$0x1]
    %37 = vrot.lane.b32.xlu0 %v36, 60
    %v38 = vpop.permute.xlu0 %37
    %vm39 = vcmask 572896
    %40 = vst.msk [vmem:[#allocation0] sm:$0x1] %vm39, %v38
    %s41 = scalar_lea.vmem %s0, 5
    %v42 = vld [vmem:[%s41] sm:$0x1]
    %43 = vrot.lane.b32.xlu0 %v42, 50
    %v44 = vpop.permute.xlu0 %43
    %vm45 = vcmask 490896
    %46 = vst.msk [vmem:[#allocation0] sm:$0x1] %vm45, %v44
    %s47 = scalar_lea.vmem %s0, 4
    %v48 = vld [vmem:[%s47] sm:$0x1]
    %49 = vrot.lane.b32.xlu0 %v48, 40
    %v50 = vpop.permute.xlu0 %49
    %vm51 = vcmask 408896
    %52 = vst.msk [vmem:[#allocation0] sm:$0x1] %vm51, %v50
    %s53 = scalar_lea.vmem %s0, 3
    %v54 = vld [vmem:[%s53] sm:$0x1]
    %55 = vrot.lane.b32.xlu0 %v54, 30
    %v56 = vpop.permute.xlu0 %55
    %vm57 = vcmask 326896
    %58 = vst.msk [vmem:[#allocation0] sm:$0x1] %vm57, %v56
    %s59 = scalar_lea.vmem %s0, 2
    %v60 = vld [vmem:[%s59] sm:$0x1]
    %61 = vrot.lane.b32.xlu0 %v60, 20
    %v62 = vpop.permute.xlu0 %61
    %vm63 = vcmask 244896
    %64 = vst.msk [vmem:[#allocation0] sm:$0x1] %vm63, %v62
    %s65 = scalar_lea.vmem %s0, 1
    %v66 = vld [vmem:[%s65] sm:$0x1]
    %67 = vrot.lane.b32.xlu0 %v66, 10
    %v68 = vpop.permute.xlu0 %67
    %vm69 = vcmask 162896
    %70 = vst.msk [vmem:[#allocation0] sm:$0x1] %vm69, %v68
    %s72 = ssub.s32 2, 1
    %v73 = vld [vmem:[#allocation0] sm:%s72]
    %s75 = ssub.s32 2, 1
    %76 = vst [vmem:[%s1] sm:%s75] %v73

// kernel: tile.18
$region0: #{tile.18}
  #allocation0 [shape = 's32[1]{0}', space=sflag, size = 0x4, scoped, tag = 'scoped memory for tile.18']
  %s0 = inlined_call_operand.vmem [shape: f32[20], index: 0, kind: input, shape index: {}]
  %s1 = inlined_call_operand.vmem [shape: f32[4,20], index: 1, kind: output, shape index: {}]
  // Predicated region
  $region2: #{tile.18} parent=0 // pred_check
    _
  $region3: #{tile.18} parent=0 // pred_check_branch
    %3 = sbr.rel (0) target = $region5
  $region4: #{tile.18} parent=0 // pred_region
    _
  $region5: #{tile.18} parent=0 // pred_fallthru
    _
  %v4 = vld [vmem:[%s0] ss:$0 sm:$0xff]
  %5 = vst [vmem:[%s1] sm:$0xf] %v4

// kernel: tile.19
$region0: #{tile.19}
  %s0 = inlined_call_operand.vmem [shape: f32[4,20], index: 0, kind: input, shape index: {}]
  %s1 = inlined_call_operand.vmem [shape: f32[80], index: 1, kind: output, shape index: {}]
  $region1: #{tile.19} parent=0
    #allocation0 [shape = 'u8[4096]{0}', space=vmem, size = 0x1000, scoped, tag = 'scoped mem for output reshape']
    #allocation1 [shape = 'u8[4096]{0}', space=vmem, size = 0x1000, scoped, tag = 'scoped mem for input reshape']
    %s3 = ssub.s32 16, 1
    %v4 = vld [vmem:[%s0] sm:%s3]
    %5 = vst [vmem:[#allocation1] sm:%s3] %v4
    %v6 = vld [vmem:[#allocation1] sm:$0x1]
    %vm7 = vcmask 162816
    %8 = vst.msk [vmem:[#allocation0] sm:$0x1] %vm7, %v6
    %s9 = scalar_lea.vmem [#allocation1], 3
    %v10 = vld [vmem:[%s9] sm:$0x1]
    %11 = vrot.lane.b32.xlu0 %v10, 60
    %v12 = vpop.permute.xlu0 %11
    %vm13 = vcmask 654816
    %14 = vst.msk [vmem:[#allocation0] sm:$0x1] %vm13, %v12
    %s15 = scalar_lea.vmem [#allocation1], 2
    %v16 = vld [vmem:[%s15] sm:$0x1]
    %17 = vrot.lane.b32.xlu0 %v16, 40
    %v18 = vpop.permute.xlu0 %17
    %vm19 = vcmask 490816
    %20 = vst.msk [vmem:[#allocation0] sm:$0x1] %vm19, %v18
    %s21 = scalar_lea.vmem [#allocation1], 1
    %v22 = vld [vmem:[%s21] sm:$0x1]
    %23 = vrot.lane.b32.xlu0 %v22, 20
    %v24 = vpop.permute.xlu0 %23
    %vm25 = vcmask 326816
    %26 = vst.msk [vmem:[#allocation0] sm:$0x1] %vm25, %v24
    %s28 = ssub.s32 2, 1
    %v29 = vld [vmem:[#allocation0] sm:%s28]
    %s31 = ssub.s32 2, 1
    %32 = vst [vmem:[%s1] sm:%s31] %v29

// kernel: cnn_mnist_forward.1
$region0: #{cnn_mnist_forward.1}
  #allocation0 [shape = 'u32[]', space=smem, size = 0x4, offset = 0x4, fixed_abs, tag = 'smem constant byte address 0x4 - core index']
  #allocation1 [shape = 'u32[72,128]{1,0:T(1,128)}', space=vmem, size = 0x9000, scoped, tag = 'internal scratch']
  %s0 = inlined_call_operand.vmem [shape: bf16[7,4,16,28], index: 0, kind: input, shape index: {}]
  %s1 = inlined_call_operand.vmem [shape: bf16[5,28,256], index: 1, kind: input, shape index: {}]
  %s2 = inlined_call_operand.vmem [shape: f32[1,128], index: 2, kind: input, shape index: {}]
  %s3 = inlined_call_operand.vmem [shape: bf16[5,128,256], index: 3, kind: input, shape index: {}]
  %s4 = inlined_call_operand.vmem [shape: f32[1,128], index: 4, kind: input, shape index: {}]
  %s5 = inlined_call_operand.vmem [shape: bf16[4,128,128], index: 5, kind: input, shape index: {}]
  %s6 = inlined_call_operand.vmem [shape: f32[1,128], index: 6, kind: input, shape index: {}]
  %s7 = inlined_call_operand.vmem [shape: bf16[128,128], index: 7, kind: input, shape index: {}]
  %s8 = inlined_call_operand.vmem [shape: f32[1,128], index: 8, kind: input, shape index: {}]
  %s9 = inlined_call_operand.vmem [shape: f32[16,128], index: 9, kind: output, shape index: {}]
  %s10 = sld [smem:[#allocation0]]
  $region110: #{cnn_mnist_forward.1} parent=0
    _
  %s12 = ssub.s32 1, %s10
  %s13 = scalar_select 0, %s12, %s10
  $region1: #{cnn_mnist_forward.1} parent=0
    #allocation2 [shape = 'u8[114688]{0}', space=vmem, size = 0x1c000, scoped, tag = 'input window, operand 0']
    loop: start=0, step=1, limit=4
    $region2: #{cnn_mnist_forward.1} parent=1 // loop_pre_header
      _
    $region3: #{cnn_mnist_forward.1} parent=1 // loop_header
      %s15 = sphi 0, %s19
      %p16 = scmp.ge.s32.totalorder %s15, 4
      %s25 = sphi 0, %s27
      %s28 = sphi 0, %s25
      %s29 = sphi 0, %s28
      %s45 = sphi 0, %s29
      %s49 = sphi 0, %s49
      %s51 = sphi 0, %s49
      %s52 = sphi 0, %s51
      %s66 = sphi 0, %s52
      %s70 = sphi 0, %s70
      %s72 = sphi 0, %s70
      %s73 = sphi 0, %s72
      %s87 = sphi 0, %s73
      %s91 = sphi 0, %s91
      %s93 = sphi 0, %s91
      %s94 = sphi 0, %s93
      %s108 = sphi 0, %s94
      %s112 = sphi 0, %s112
      %s114 = sphi 0, %s112
      %s115 = sphi 0, %s114
      %s129 = sphi 0, %s115
      %s133 = sphi 0, %s133
      %s135 = sphi 0, %s133
      %s136 = sphi 0, %s135
      %s150 = sphi 0, %s136
      %s154 = sphi 0, %s154
      %s156 = sphi 0, %s154
      %s157 = sphi 0, %s156
      %s171 = sphi 0, %s157
      %s175 = sphi 0, %s175
      %s177 = sphi 0, %s175
      %s178 = sphi 0, %s177
      %s192 = sphi 0, %s178
      %s196 = sphi 0, %s196
      %s198 = sphi 0, %s196
      %s199 = sphi 0, %s198
      %s213 = sphi 0, %s199
      %s219 = sphi 0, %s221
      %s222 = sphi 0, %s219
      %s223 = sphi 0, %s222
      %s239 = sphi 0, %s223
    $region4: #{cnn_mnist_forward.1} parent=1 // loop_header_branch
      %18 = sbr.rel (%p16) target = $region8
    $region5: #{cnn_mnist_forward.1} parent=1 // loop_body
      %s20 = ssub.s32 %s15, 1
      %s21 = ssub.s32 %s15, 2
      %s22 = sadd.s32 %s15, 1
      %s23 = ssub.s32 %s15, %s22
      %p24 = scmp.eq.s32.totalorder %s23, 0
      %s26 = sadd.s32 %s25, 1
      %s27 = scalar_select %p24, %s25, %s26
      %p30 = pneg %p24
      %p31 = scmp.eq.s32.totalorder %s15, 1
      %p32 = por %p30, %p31
      %p33 = scmp.ne.s32.totalorder %s25, %s28
      %p34 = scmp.eq.s32.totalorder %s15, 0
      %p35 = por %p33, %p34
      %p36 = scmp.ne.s32.totalorder %s25, %s28
      %p37 = scmp.eq.s32.totalorder %s20, 1
      %p38 = por %p36, %p37
      %p39 = scmp.ne.s32.totalorder %s28, %s29
      %p40 = scmp.eq.s32.totalorder %s20, 0
      %p41 = por %p39, %p40
      %p42 = scmp.ne.s32.totalorder %s28, %s29
      %p43 = scmp.eq.s32.totalorder %s21, 1
      %p44 = por %p42, %p43
      %p46 = scmp.ne.s32.totalorder %s29, %s45
      %p47 = scmp.eq.s32.totalorder %s21, 0
      %p48 = por %p46, %p47
      %s50 = sadd.s32 %s49, 1
      %p53 = scmp.eq.s32.totalorder %s15, 1
      %p54 = scmp.ne.s32.totalorder %s49, %s51
      %p55 = scmp.eq.s32.totalorder %s15, 0
      %p56 = por %p54, %p55
      %p57 = scmp.ne.s32.totalorder %s49, %s51
      %p58 = scmp.eq.s32.totalorder %s20, 1
      %p59 = por %p57, %p58
      %p60 = scmp.ne.s32.totalorder %s51, %s52
      %p61 = scmp.eq.s32.totalorder %s20, 0
      %p62 = por %p60, %p61
      %p63 = scmp.ne.s32.totalorder %s51, %s52
      %p64 = scmp.eq.s32.totalorder %s21, 1
      %p65 = por %p63, %p64
      %p67 = scmp.ne.s32.totalorder %s52, %s66
      %p68 = scmp.eq.s32.totalorder %s21, 0
      %p69 = por %p67, %p68
      %s71 = sadd.s32 %s70, 1
      %p74 = scmp.eq.s32.totalorder %s15, 1
      %p75 = scmp.ne.s32.totalorder %s70, %s72
      %p76 = scmp.eq.s32.totalorder %s15, 0
      %p77 = por %p75, %p76
      %p78 = scmp.ne.s32.totalorder %s70, %s72
      %p79 = scmp.eq.s32.totalorder %s20, 1
      %p80 = por %p78, %p79
      %p81 = scmp.ne.s32.totalorder %s72, %s73
      %p82 = scmp.eq.s32.totalorder %s20, 0
      %p83 = por %p81, %p82
      %p84 = scmp.ne.s32.totalorder %s72, %s73
      %p85 = scmp.eq.s32.totalorder %s21, 1
      %p86 = por %p84, %p85
      %p88 = scmp.ne.s32.totalorder %s73, %s87
      %p89 = scmp.eq.s32.totalorder %s21, 0
      %p90 = por %p88, %p89
      %s92 = sadd.s32 %s91, 1
      %p95 = scmp.eq.s32.totalorder %s15, 1
      %p96 = scmp.ne.s32.totalorder %s91, %s93
      %p97 = scmp.eq.s32.totalorder %s15, 0
      %p98 = por %p96, %p97
      %p99 = scmp.ne.s32.totalorder %s91, %s93
      %p100 = scmp.eq.s32.totalorder %s20, 1
      %p101 = por %p99, %p100
      %p102 = scmp.ne.s32.totalorder %s93, %s94
      %p103 = scmp.eq.s32.totalorder %s20, 0
      %p104 = por %p102, %p103
      %p105 = scmp.ne.s32.totalorder %s93, %s94
      %p106 = scmp.eq.s32.totalorder %s21, 1
      %p107 = por %p105, %p106
      %p109 = scmp.ne.s32.totalorder %s94, %s108
      %p110 = scmp.eq.s32.totalorder %s21, 0
      %p111 = por %p109, %p110
      %s113 = sadd.s32 %s112, 1
      %p116 = scmp.eq.s32.totalorder %s15, 1
      %p117 = scmp.ne.s32.totalorder %s112, %s114
      %p118 = scmp.eq.s32.totalorder %s15, 0
      %p119 = por %p117, %p118
      %p120 = scmp.ne.s32.totalorder %s112, %s114
      %p121 = scmp.eq.s32.totalorder %s20, 1
      %p122 = por %p120, %p121
      %p123 = scmp.ne.s32.totalorder %s114, %s115
      %p124 = scmp.eq.s32.totalorder %s20, 0
      %p125 = por %p123, %p124
      %p126 = scmp.ne.s32.totalorder %s114, %s115
      %p127 = scmp.eq.s32.totalorder %s21, 1
      %p128 = por %p126, %p127
      %p130 = scmp.ne.s32.totalorder %s115, %s129
      %p131 = scmp.eq.s32.totalorder %s21, 0
      %p132 = por %p130, %p131
      %s134 = sadd.s32 %s133, 1
      %p137 = scmp.eq.s32.totalorder %s15, 1
      %p138 = scmp.ne.s32.totalorder %s133, %s135
      %p139 = scmp.eq.s32.totalorder %s15, 0
      %p140 = por %p138, %p139
      %p141 = scmp.ne.s32.totalorder %s133, %s135
      %p142 = scmp.eq.s32.totalorder %s20, 1
      %p143 = por %p141, %p142
      %p144 = scmp.ne.s32.totalorder %s135, %s136
      %p145 = scmp.eq.s32.totalorder %s20, 0
      %p146 = por %p144, %p145
      %p147 = scmp.ne.s32.totalorder %s135, %s136
      %p148 = scmp.eq.s32.totalorder %s21, 1
      %p149 = por %p147, %p148
      %p151 = scmp.ne.s32.totalorder %s136, %s150
      %p152 = scmp.eq.s32.totalorder %s21, 0
      %p153 = por %p151, %p152
      %s155 = sadd.s32 %s154, 1
      %p158 = scmp.eq.s32.totalorder %s15, 1
      %p159 = scmp.ne.s32.totalorder %s154, %s156
      %p160 = scmp.eq.s32.totalorder %s15, 0
      %p161 = por %p159, %p160
      %p162 = scmp.ne.s32.totalorder %s154, %s156
      %p163 = scmp.eq.s32.totalorder %s20, 1
      %p164 = por %p162, %p163
      %p165 = scmp.ne.s32.totalorder %s156, %s157
      %p166 = scmp.eq.s32.totalorder %s20, 0
      %p167 = por %p165, %p166
      %p168 = scmp.ne.s32.totalorder %s156, %s157
      %p169 = scmp.eq.s32.totalorder %s21, 1
      %p170 = por %p168, %p169
      %p172 = scmp.ne.s32.totalorder %s157, %s171
      %p173 = scmp.eq.s32.totalorder %s21, 0
      %p174 = por %p172, %p173
      %s176 = sadd.s32 %s175, 1
      %p179 = scmp.eq.s32.totalorder %s15, 1
      %p180 = scmp.ne.s32.totalorder %s175, %s177
      %p181 = scmp.eq.s32.totalorder %s15, 0
      %p182 = por %p180, %p181
      %p183 = scmp.ne.s32.totalorder %s175, %s177
      %p184 = scmp.eq.s32.totalorder %s20, 1
      %p185 = por %p183, %p184
      %p186 = scmp.ne.s32.totalorder %s177, %s178
      %p187 = scmp.eq.s32.totalorder %s20, 0
      %p188 = por %p186, %p187
      %p189 = scmp.ne.s32.totalorder %s177, %s178
      %p190 = scmp.eq.s32.totalorder %s21, 1
      %p191 = por %p189, %p190
      %p193 = scmp.ne.s32.totalorder %s178, %s192
      %p194 = scmp.eq.s32.totalorder %s21, 0
      %p195 = por %p193, %p194
      %s197 = sadd.s32 %s196, 1
      %p200 = scmp.eq.s32.totalorder %s15, 1
      %p201 = scmp.ne.s32.totalorder %s196, %s198
      %p202 = scmp.eq.s32.totalorder %s15, 0
      %p203 = por %p201, %p202
      %p204 = scmp.ne.s32.totalorder %s196, %s198
      %p205 = scmp.eq.s32.totalorder %s20, 1
      %p206 = por %p204, %p205
      %p207 = scmp.ne.s32.totalorder %s198, %s199
      %p208 = scmp.eq.s32.totalorder %s20, 0
      %p209 = por %p207, %p208
      %p210 = scmp.ne.s32.totalorder %s198, %s199
      %p211 = scmp.eq.s32.totalorder %s21, 1
      %p212 = por %p210, %p211
      %p214 = scmp.ne.s32.totalorder %s199, %s213
      %p215 = scmp.eq.s32.totalorder %s21, 0
      %p216 = por %p214, %p215
      %s217 = ssub.s32 %s15, %s22
      %p218 = scmp.eq.s32.totalorder %s217, 0
      %s220 = sadd.s32 %s219, 1
      %s221 = scalar_select %p218, %s219, %s220
      %p224 = pneg %p218
      %p225 = scmp.eq.s32.totalorder %s15, 1
      %p226 = por %p224, %p225
      %p227 = scmp.ne.s32.totalorder %s219, %s222
      %p228 = scmp.eq.s32.totalorder %s15, 0
      %p229 = por %p227, %p228
      %p230 = scmp.ne.s32.totalorder %s219, %s222
      %p231 = scmp.eq.s32.totalorder %s20, 1
      %p232 = por %p230, %p231
      %p233 = scmp.ne.s32.totalorder %s222, %s223
      %p234 = scmp.eq.s32.totalorder %s20, 0
      %p235 = por %p233, %p234
      %p236 = scmp.ne.s32.totalorder %s222, %s223
      %p237 = scmp.eq.s32.totalorder %s21, 1
      %p238 = por %p236, %p237
      %p240 = scmp.ne.s32.totalorder %s223, %s239
      %p241 = scmp.eq.s32.totalorder %s21, 0
      %p242 = por %p240, %p241
      %p243 = scmp.le.s32.totalorder 1, %s15
      %p244 = scmp.lt.s32.totalorder %s15, 3
      %p245 = pnand %p243, %p244
      %p246 = pneg %p245
      // Predicated region
      $region9: #{cnn_mnist_forward.1} parent=5 // pred_check
        _
      $region10: #{cnn_mnist_forward.1} parent=5 // pred_check_branch
        %248 = sbr.rel (%p245) target = $region12
      $region11: #{cnn_mnist_forward.1} parent=5 // pred_region
        %s249 = ssub.s32 %s15, 1
        // Predicated region
        $region13: #{cnn_mnist_forward.1} parent=11 // pred_check
          %p250 = pneg %p62
        $region14: #{cnn_mnist_forward.1} parent=11 // pred_check_branch
          %252 = sbr.rel (%p250) target = $region16
        $region15: #{cnn_mnist_forward.1} parent=11 // pred_region
          _
        $region16: #{cnn_mnist_forward.1} parent=11 // pred_fallthru
          _
        // Predicated region
        $region17: #{cnn_mnist_forward.1} parent=11 // pred_check
          %p253 = pneg %p83
        $region18: #{cnn_mnist_forward.1} parent=11 // pred_check_branch
          %255 = sbr.rel (%p253) target = $region20
        $region19: #{cnn_mnist_forward.1} parent=11 // pred_region
          _
        $region20: #{cnn_mnist_forward.1} parent=11 // pred_fallthru
          _
        // Predicated region
        $region21: #{cnn_mnist_forward.1} parent=11 // pred_check
          %p256 = pneg %p104
        $region22: #{cnn_mnist_forward.1} parent=11 // pred_check_branch
          %258 = sbr.rel (%p256) target = $region24
        $region23: #{cnn_mnist_forward.1} parent=11 // pred_region
          _
        $region24: #{cnn_mnist_forward.1} parent=11 // pred_fallthru
          _
        // Predicated region
        $region25: #{cnn_mnist_forward.1} parent=11 // pred_check
          %p259 = pneg %p125
        $region26: #{cnn_mnist_forward.1} parent=11 // pred_check_branch
          %261 = sbr.rel (%p259) target = $region28
        $region27: #{cnn_mnist_forward.1} parent=11 // pred_region
          _
        $region28: #{cnn_mnist_forward.1} parent=11 // pred_fallthru
          _
        // Predicated region
        $region29: #{cnn_mnist_forward.1} parent=11 // pred_check
          %p262 = pneg %p146
        $region30: #{cnn_mnist_forward.1} parent=11 // pred_check_branch
          %264 = sbr.rel (%p262) target = $region32
        $region31: #{cnn_mnist_forward.1} parent=11 // pred_region
          _
        $region32: #{cnn_mnist_forward.1} parent=11 // pred_fallthru
          _
        // Predicated region
        $region33: #{cnn_mnist_forward.1} parent=11 // pred_check
          %p265 = pneg %p167
        $region34: #{cnn_mnist_forward.1} parent=11 // pred_check_branch
          %267 = sbr.rel (%p265) target = $region36
        $region35: #{cnn_mnist_forward.1} parent=11 // pred_region
          _
        $region36: #{cnn_mnist_forward.1} parent=11 // pred_fallthru
          _
        // Predicated region
        $region37: #{cnn_mnist_forward.1} parent=11 // pred_check
          %p268 = pneg %p188
        $region38: #{cnn_mnist_forward.1} parent=11 // pred_check_branch
          %270 = sbr.rel (%p268) target = $region40
        $region39: #{cnn_mnist_forward.1} parent=11 // pred_region
          _
        $region40: #{cnn_mnist_forward.1} parent=11 // pred_fallthru
          _
        // Predicated region
        $region41: #{cnn_mnist_forward.1} parent=11 // pred_check
          %p271 = pneg %p209
        $region42: #{cnn_mnist_forward.1} parent=11 // pred_check_branch
          %273 = sbr.rel (%p271) target = $region44
        $region43: #{cnn_mnist_forward.1} parent=11 // pred_region
          _
        $region44: #{cnn_mnist_forward.1} parent=11 // pred_fallthru
          _
      $region12: #{cnn_mnist_forward.1} parent=5 // pred_fallthru
        _
      %p274 = scmp.lt.s32.totalorder %s15, 2
      // Predicated region
      $region45: #{cnn_mnist_forward.1} parent=5 // pred_check
        %p275 = pneg %p274
      $region46: #{cnn_mnist_forward.1} parent=5 // pred_check_branch
        %277 = sbr.rel (%p275) target = $region48
      $region47: #{cnn_mnist_forward.1} parent=5 // pred_region
        // Predicated region
        $region49: #{cnn_mnist_forward.1} parent=47 // pred_check
          %p278 = pneg %p35
        $region50: #{cnn_mnist_forward.1} parent=47 // pred_check_branch
          %280 = sbr.rel (%p278) target = $region52
        $region51: #{cnn_mnist_forward.1} parent=47 // pred_region
          %s281 = sand.u32 %s25, 1
          %s282 = sand.u32 %s25, 1
          %s283 = smul.addr %s282, 112
          %s284 = scalar_lea.vmem [#allocation2], %s283
          %s285 = smul.addr %s15, 4
          %s286 = scalar_lea.vmem %s0, %s285
          // Predicated region
          $region53: #{cnn_mnist_forward.1} parent=51 // pred_check
            _
          $region54: #{cnn_mnist_forward.1} parent=51 // pred_check_branch
            %288 = sbr.rel (0) target = $region56
          $region55: #{cnn_mnist_forward.1} parent=51 // pred_region
            // Predicated region
            $region57: #{cnn_mnist_forward.1} parent=55 // pred_check
              _
            $region58: #{cnn_mnist_forward.1} parent=55 // pred_check_branch
              %290 = sbr.rel target = $region60
            $region59: #{cnn_mnist_forward.1} parent=55 // pred_region
              // Predicated region
              $region72: #{cnn_mnist_forward.1} parent=59 // pred_check
                _
              $region73: #{cnn_mnist_forward.1} parent=59 // pred_check_branch
                %360 = sbr.rel (0) target = $region75
              $region74: #{cnn_mnist_forward.1} parent=59 // pred_region
                loop: start=0, step=1, limit=1
                $region76: #{cnn_mnist_forward.1} parent=74 // loop_pre_header
                  _
                $region77: #{cnn_mnist_forward.1} parent=74 // loop_header
                  %s362 = sphi 0, %s366
                  %p363 = scmp.ge.s32.totalorder %s362, 1
                  %s367 = sphi %s286, %s286
                  %s368 = sphi %s284, %s284
                $region78: #{cnn_mnist_forward.1} parent=74 // loop_header_branch
                  %365 = sbr.rel (%p363) target = $region82
                $region79: #{cnn_mnist_forward.1} parent=74 // loop_body
                  _
                $region80: #{cnn_mnist_forward.1} parent=74 // loop_footer
                  %s366 = sadd.s32 1, %s362
                $region81: #{cnn_mnist_forward.1} parent=74 // loop_footer_branch
                  %361 = sbr.rel target = $region77
                $region82: #{cnn_mnist_forward.1} parent=74 // loop_exit
                  _
                %s370 = ssub.s32 16, 1
                loop: start=0, step=1, limit=1
                $region83: #{cnn_mnist_forward.1} parent=74 // loop_pre_header
                  _
                $region84: #{cnn_mnist_forward.1} parent=74 // loop_header
                  %s372 = sphi 0, %s376
                  %p373 = scmp.ge.s32.totalorder %s372, 1
                  %s377 = sphi %s286, %s286
                  %s378 = sphi %s284, %s284
                $region85: #{cnn_mnist_forward.1} parent=74 // loop_header_branch
                  %375 = sbr.rel (%p373) target = $region89
                $region86: #{cnn_mnist_forward.1} parent=74 // loop_body
                  %v379 = vld [vmem:[%s377] sm:%s370]
                  %380 = vst [vmem:[%s378] sm:%s370] %v379
                  %v381 = vld [vmem:[%s377 + $0x8] sm:%s370]
                  %382 = vst [vmem:[%s378 + $0x4] sm:%s370] %v381
                  %v383 = vld [vmem:[%s377 + $0x10] sm:%s370]
                  %384 = vst [vmem:[%s378 + $0x8] sm:%s370] %v383
                  %v385 = vld [vmem:[%s377 + $0x18] sm:%s370]
                  %386 = vst [vmem:[%s378 + $0xc] sm:%s370] %v385
                  %v387 = vld [vmem:[%s377 + $0x20] sm:%s370]
                  %388 = vst [vmem:[%s378 + $0x10] sm:%s370] %v387
                  %v389 = vld [vmem:[%s377 + $0x28] sm:%s370]
                  %390 = vst [vmem:[%s378 + $0x14] sm:%s370] %v389
                  %v391 = vld [vmem:[%s377 + $0x30] sm:%s370]
                  %392 = vst [vmem:[%s378 + $0x18] sm:%s370] %v391
                  %v393 = vld [vmem:[%s377 + $0x38] sm:%s370]
                  %394 = vst [vmem:[%s378 + $0x1c] sm:%s370] %v393
                  %v395 = vld [vmem:[%s377 + $0x40] sm:%s370]
                  %396 = vst [vmem:[%s378 + $0x20] sm:%s370] %v395
                  %v397 = vld [vmem:[%s377 + $0x48] sm:%s370]
                  %398 = vst [vmem:[%s378 + $0x24] sm:%s370] %v397
                  %v399 = vld [vmem:[%s377 + $0x50] sm:%s370]
                  %400 = vst [vmem:[%s378 + $0x28] sm:%s370] %v399
                  %v401 = vld [vmem:[%s377 + $0x58] sm:%s370]
                  %402 = vst [vmem:[%s378 + $0x2c] sm:%s370] %v401
                  %v403 = vld [vmem:[%s377 + $0x60] sm:%s370]
                  %404 = vst [vmem:[%s378 + $0x30] sm:%s370] %v403
                  %v405 = vld [vmem:[%s377 + $0x68] sm:%s370]
                  %406 = vst [vmem:[%s378 + $0x34] sm:%s370] %v405
                  %v407 = vld [vmem:[%s377 + $0x70] sm:%s370]
                  %408 = vst [vmem:[%s378 + $0x38] sm:%s370] %v407
                  %v409 = vld [vmem:[%s377 + $0x78] sm:%s370]
                  %410 = vst [vmem:[%s378 + $0x3c] sm:%s370] %v409
                  %v411 = vld [vmem:[%s377 + $0x80] sm:%s370]
                  %412 = vst [vmem:[%s378 + $0x40] sm:%s370] %v411
                  %v413 = vld [vmem:[%s377 + $0x88] sm:%s370]
                  %414 = vst [vmem:[%s378 + $0x44] sm:%s370] %v413
                  %v415 = vld [vmem:[%s377 + $0x90] sm:%s370]
                  %416 = vst [vmem:[%s378 + $0x48] sm:%s370] %v415
                  %v417 = vld [vmem:[%s377 + $0x98] sm:%s370]
                  %418 = vst [vmem:[%s378 + $0x4c] sm:%s370] %v417
                  %v419 = vld [vmem:[%s377 + $0xa0] sm:%s370]
                  %420 = vst [vmem:[%s378 + $0x50] sm:%s370] %v419
                  %v421 = vld [vmem:[%s377 + $0xa8] sm:%s370]
                  %422 = vst [vmem:[%s378 + $0x54] sm:%s370] %v421
                  %v423 = vld [vmem:[%s377 + $0xb0] sm:%s370]
                  %424 = vst [vmem:[%s378 + $0x58] sm:%s370] %v423
                  %v425 = vld [vmem:[%s377 + $0xb8] sm:%s370]
                  %426 = vst [vmem:[%s378 + $0x5c] sm:%s370] %v425
                  %v427 = vld [vmem:[%s377 + $0xc0] sm:%s370]
                  %428 = vst [vmem:[%s378 + $0x60] sm:%s370] %v427
                  %v429 = vld [vmem:[%s377 + $0xc8] sm:%s370]
                  %430 = vst [vmem:[%s378 + $0x64] sm:%s370] %v429
                  %v431 = vld [vmem:[%s377 + $0xd0] sm:%s370]
                  %432 = vst [vmem:[%s378 + $0x68] sm:%s370] %v431
                  %v433 = vld [vmem:[%s377 + $0xd8] sm:%s370]
                  %434 = vst [vmem:[%s378 + $0x6c] sm:%s370] %v433
                $region87: #{cnn_mnist_forward.1} parent=74 // loop_footer
                  %s376 = sadd.s32 1, %s372
                $region88: #{cnn_mnist_forward.1} parent=74 // loop_footer_branch
                  %371 = sbr.rel target = $region84
                $region89: #{cnn_mnist_forward.1} parent=74 // loop_exit
                  _
              $region75: #{cnn_mnist_forward.1} parent=59 // pred_fallthru
                _
            $region60: #{cnn_mnist_forward.1} parent=55 // pred_fallthru
              _
            // Predicated region
            $region61: #{cnn_mnist_forward.1} parent=55 // pred_check
              _
            $region62: #{cnn_mnist_forward.1} parent=55 // pred_check_branch
              %292 = sbr.rel (0) target = $region64
            $region63: #{cnn_mnist_forward.1} parent=55 // pred_region
              %s294 = ssub.s32 16, 1
              loop: start=0, step=1, limit=1
              $region65: #{cnn_mnist_forward.1} parent=63 // loop_pre_header
                _
              $region66: #{cnn_mnist_forward.1} parent=63 // loop_header
                %s296 = sphi 0, %s300
                %p297 = scmp.ge.s32.totalorder %s296, 1
                %s301 = sphi %s286, %s286
                %s302 = sphi %s284, %s284
              $region67: #{cnn_mnist_forward.1} parent=63 // loop_header_branch
                %299 = sbr.rel (%p297) target = $region71
              $region68: #{cnn_mnist_forward.1} parent=63 // loop_body
                %v303 = vld [vmem:[%s301] sm:%s294]
                %304 = vst [vmem:[%s302] sm:%s294] %v303
                %v305 = vld [vmem:[%s301 + $0x8] sm:%s294]
                %306 = vst [vmem:[%s302 + $0x4] sm:%s294] %v305
                %v307 = vld [vmem:[%s301 + $0x10] sm:%s294]
                %308 = vst [vmem:[%s302 + $0x8] sm:%s294] %v307
                %v309 = vld [vmem:[%s301 + $0x18] sm:%s294]
                %310 = vst [vmem:[%s302 + $0xc] sm:%s294] %v309
                %v311 = vld [vmem:[%s301 + $0x20] sm:%s294]
                %312 = vst [vmem:[%s302 + $0x10] sm:%s294] %v311
                %v313 = vld [vmem:[%s301 + $0x28] sm:%s294]
                %314 = vst [vmem:[%s302 + $0x14] sm:%s294] %v313
                %v315 = vld [vmem:[%s301 + $0x30] sm:%s294]
                %316 = vst [vmem:[%s302 + $0x18] sm:%s294] %v315
                %v317 = vld [vmem:[%s301 + $0x38] sm:%s294]
                %318 = vst [vmem:[%s302 + $0x1c] sm:%s294] %v317
                %v319 = vld [vmem:[%s301 + $0x40] sm:%s294]
                %320 = vst [vmem:[%s302 + $0x20] sm:%s294] %v319
                %v321 = vld [vmem:[%s301 + $0x48] sm:%s294]
                %322 = vst [vmem:[%s302 + $0x24] sm:%s294] %v321
                %v323 = vld [vmem:[%s301 + $0x50] sm:%s294]
                %324 = vst [vmem:[%s302 + $0x28] sm:%s294] %v323
                %v325 = vld [vmem:[%s301 + $0x58] sm:%s294]
                %326 = vst [vmem:[%s302 + $0x2c] sm:%s294] %v325
                %v327 = vld [vmem:[%s301 + $0x60] sm:%s294]
                %328 = vst [vmem:[%s302 + $0x30] sm:%s294] %v327
                %v329 = vld [vmem:[%s301 + $0x68] sm:%s294]
                %330 = vst [vmem:[%s302 + $0x34] sm:%s294] %v329
                %v331 = vld [vmem:[%s301 + $0x70] sm:%s294]
                %332 = vst [vmem:[%s302 + $0x38] sm:%s294] %v331
                %v333 = vld [vmem:[%s301 + $0x78] sm:%s294]
                %334 = vst [vmem:[%s302 + $0x3c] sm:%s294] %v333
                %v335 = vld [vmem:[%s301 + $0x80] sm:%s294]
                %336 = vst [vmem:[%s302 + $0x40] sm:%s294] %v335
                %v337 = vld [vmem:[%s301 + $0x88] sm:%s294]
                %338 = vst [vmem:[%s302 + $0x44] sm:%s294] %v337
                %v339 = vld [vmem:[%s301 + $0x90] sm:%s294]
                %340 = vst [vmem:[%s302 + $0x48] sm:%s294] %v339
                %v341 = vld [vmem:[%s301 + $0x98] sm:%s294]
                %342 = vst [vmem:[%s302 + $0x4c] sm:%s294] %v341
                %v343 = vld [vmem:[%s301 + $0xa0] sm:%s294]
                %344 = vst [vmem:[%s302 + $0x50] sm:%s294] %v343
                %v345 = vld [vmem:[%s301 + $0xa8] sm:%s294]
                %346 = vst [vmem:[%s302 + $0x54] sm:%s294] %v345
                %v347 = vld [vmem:[%s301 + $0xb0] sm:%s294]
                %348 = vst [vmem:[%s302 + $0x58] sm:%s294] %v347
                %v349 = vld [vmem:[%s301 + $0xb8] sm:%s294]
                %350 = vst [vmem:[%s302 + $0x5c] sm:%s294] %v349
                %v351 = vld [vmem:[%s301 + $0xc0] sm:%s294]
                %352 = vst [vmem:[%s302 + $0x60] sm:%s294] %v351
                %v353 = vld [vmem:[%s301 + $0xc8] sm:%s294]
                %354 = vst [vmem:[%s302 + $0x64] sm:%s294] %v353
                %v355 = vld [vmem:[%s301 + $0xd0] sm:%s294]
                %356 = vst [vmem:[%s302 + $0x68] sm:%s294] %v355
                %v357 = vld [vmem:[%s301 + $0xd8] sm:%s294]
                %358 = vst [vmem:[%s302 + $0x6c] sm:%s294] %v357
              $region69: #{cnn_mnist_forward.1} parent=63 // loop_footer
                %s300 = sadd.s32 1, %s296
              $region70: #{cnn_mnist_forward.1} parent=63 // loop_footer_branch
                %295 = sbr.rel target = $region66
              $region71: #{cnn_mnist_forward.1} parent=63 // loop_exit
                _
            $region64: #{cnn_mnist_forward.1} parent=55 // pred_fallthru
              _
          $region56: #{cnn_mnist_forward.1} parent=51 // pred_fallthru
            _
          %435 = vnop
        $region52: #{cnn_mnist_forward.1} parent=47 // pred_fallthru
          _
      $region48: #{cnn_mnist_forward.1} parent=5 // pred_fallthru
        _
      %p436 = scmp.le.s32.totalorder 1, %s15
      %p437 = scmp.lt.s32.totalorder %s15, 3
      %p438 = pnand %p436, %p437
      %p439 = pneg %p438
      // Predicated region
      $region90: #{cnn_mnist_forward.1} parent=5 // pred_check
        _
      $region91: #{cnn_mnist_forward.1} parent=5 // pred_check_branch
        %441 = sbr.rel (%p438) target = $region93
      $region92: #{cnn_mnist_forward.1} parent=5 // pred_region
        %s442 = ssub.s32 %s15, 1
        %s443 = sand.u32 %s28, 1
        %s444 = sand.u32 %s28, 1
        %s445 = smul.addr %s444, 112
        %s446 = scalar_lea.vmem [#allocation2], %s445
        // Predicated region
        $region94: #{cnn_mnist_forward.1} parent=92 // pred_check
          %p447 = pneg %p41
        $region95: #{cnn_mnist_forward.1} parent=92 // pred_check_branch
          %449 = sbr.rel (%p447) target = $region97
        $region96: #{cnn_mnist_forward.1} parent=92 // pred_region
          _
        $region97: #{cnn_mnist_forward.1} parent=92 // pred_fallthru
          _
        %s450 = sand.u32 %s28, 1
        %s451 = sand.u32 %s28, 1
        %s452 = smul.addr %s451, 112
        %s453 = scalar_lea.vmem [#allocation2], %s452
        %p454 = pneg %p41
        %p455 = pneg %p38
        %p456 = pneg %p62
        %p457 = pneg %p59
        %p458 = pneg %p83
        %p459 = pneg %p80
        %p460 = pneg %p104
        %p461 = pneg %p101
        %p462 = pneg %p125
        %p463 = pneg %p122
        %p464 = pneg %p146
        %p465 = pneg %p143
        %p466 = pneg %p167
        %p467 = pneg %p164
        %p468 = pneg %p188
        %p469 = pneg %p185
        %p470 = pneg %p209
        %p471 = pneg %p206
        %p472 = pneg %p235
        %p473 = pneg %p232
        %p474 = scmp.lt.s32.totalorder %s20, 1
        %s475 = scalar_select %p474, %s20, 1
        %s476 = smul.addr %s475, 8
        %s477 = scalar_lea.vmem %s9, %s476
        %p478 = scmp.lt.s32.totalorder %s20, 1
        %s479 = scalar_select %p478, %s20, 1
        %s480 = smul.addr %s479, 8
        %s481 = scalar_lea.vmem %s9, %s480
        %v483 = vld [vmem:[%s446] sm:$0xf]
        %v484 = vld [vmem:[%s446 + $0x10] sm:$0xf]
        %v485 = vld [vmem:[%s446 + $0x20] sm:$0xf]
        %v486 = vld [vmem:[%s446 + $0x30] sm:$0xf]
        %v487 = vld [vmem:[%s446 + $0x40] sm:$0xf]
        %v488 = vld [vmem:[%s446 + $0x50] sm:$0xf]
        %v489 = vld [vmem:[%s1] sm:$0xff]
        %v490 = vld [vmem:[%s1 + $0x8] sm:$0xff]
        %v491 = vld [vmem:[%s1 + $0x10] sm:$0xff]
        %v492 = vld [vmem:[%s1 + $0x18] sm:$0x33]
        %s493 = scalar_lea.vmem %s446, 4 [#allocation2]
        %v494 = vld [vmem:[%s493] sm:$0xf]
        %v495 = vld [vmem:[%s493 + $0x10] sm:$0xf]
        %v496 = vld [vmem:[%s493 + $0x20] sm:$0xf]
        %v497 = vld [vmem:[%s493 + $0x30] sm:$0xf]
        %v498 = vld [vmem:[%s493 + $0x40] sm:$0xf]
        %v499 = vld [vmem:[%s493 + $0x50] sm:$0xf]
        %s500 = scalar_lea.vmem %s1, 32
        %v501 = vld [vmem:[%s500] sm:$0xff]
        %v502 = vld [vmem:[%s500 + $0x8] sm:$0xff]
        %v503 = vld [vmem:[%s500 + $0x10] sm:$0xff]
        %v504 = vld [vmem:[%s500 + $0x18] sm:$0x33]
        %v511 = vunpack.c.l.b16 %v494
        %v512 = vunpack.c.l.b16 %v495
        %v513 = vunpack.c.l.b16 %v496
        %v514 = vunpack.c.l.b16 %v497
        %v515 = vunpack.c.l.b16 %v498
        %v516 = vunpack.c.l.b16 %v499
        %v517 = vpack.c.b16 %v512, %v511
        %v518 = vpack.c.b16 %v514, %v513
        %v519 = vpack.c.b16 %v516, %v515
        %v524 = vunpack.c.l.b16 %v501
        %v525 = vunpack.c.h.b16 %v501
        %v526 = vunpack.c.l.b16 %v502
        %v527 = vunpack.c.h.b16 %v502
        %v528 = vunpack.c.l.b16 %v503
        %v529 = vunpack.c.h.b16 %v503
        %v530 = vunpack.c.l.b16 %v504
        %v531 = vunpack.c.h.b16 %v504
        %v532 = vpack.c.b16 %v526, %v524
        %v533 = vpack.c.b16 %v527, %v525
        %v534 = vpack.c.b16 %v530, %v528
        %v535 = vpack.c.b16 %v531, %v529
        %vm538 = vcmask 228352
        %v540 = vsel %vm538, %v517, 0
        %v543 = vsel %vm538, %v518, 0
        %v546 = vsel %vm538, %v519, 0
        %vm548 = vcmask 1045504
        %v550 = vsel %vm548, %v534, 0
        %v553 = vsel %vm548, %v535, 0
        %555 = vmatpush.bf16.msra.mxu0 0
        %556 = vmatpush.bf16.msra.mxu0 0
        %557 = vmatpush.bf16.msra.mxu0 0
        %558 = vmatpush.bf16.msra.mxu0 0
        %559 = vmatpush.bf16.msra.mxu0 0
        %560 = vmatpush.bf16.msra.mxu0 0
        %561 = vmatpush.bf16.msra.mxu0 %v550
        %562 = vmatpush.bf16.msra.mxu0 %v532
        %563 = vmatmul.bf16.gmra.mxu0 %v540
        %v564 = vpop.f32.mrf.mxu0
        %v565 = vadd.f32 0.0, %v564
        %v566 = vpop.f32.mrf.mxu0
        %v567 = vadd.f32 0.0, %v566
        %568 = vmatmul.bf16.gmra.mxu0 %v543
        %v569 = vpop.f32.mrf.mxu0
        %v570 = vadd.f32 0.0, %v569
        %v571 = vpop.f32.mrf.mxu0
        %v572 = vadd.f32 0.0, %v571
        %573 = vmatmul.bf16.gmra.mxu0 %v546
        %v574 = vpop.f32.mrf.mxu0
        %v575 = vadd.f32 0.0, %v574
        %v576 = vpop.f32.mrf.mxu0
        %v577 = vadd.f32 0.0, %v576
        %578 = vdwg.mxu0
        %579 = vmatpush.bf16.msra.mxu0 0
        %580 = vmatpush.bf16.msra.mxu0 0
        %581 = vmatpush.bf16.msra.mxu0 0
        %582 = vmatpush.bf16.msra.mxu0 0
        %583 = vmatpush.bf16.msra.mxu0 0
        %584 = vmatpush.bf16.msra.mxu0 0
        %585 = vmatpush.bf16.msra.mxu0 %v553
        %586 = vmatpush.bf16.msra.mxu0 %v533
        %587 = vmatmul.bf16.gmra.mxu0 %v540
        %v588 = vpop.f32.mrf.mxu0
        %v589 = vadd.f32 0.0, %v588
        %v590 = vpop.f32.mrf.mxu0
        %v591 = vadd.f32 0.0, %v590
        %592 = vmatmul.bf16.gmra.mxu0 %v543
        %v593 = vpop.f32.mrf.mxu0
        %v594 = vadd.f32 0.0, %v593
        %v595 = vpop.f32.mrf.mxu0
        %v596 = vadd.f32 0.0, %v595
        %597 = vmatmul.bf16.gmra.mxu0 %v546
        %v598 = vpop.f32.mrf.mxu0
        %v599 = vadd.f32 0.0, %v598
        %v600 = vpop.f32.mrf.mxu0
        %v601 = vadd.f32 0.0, %v600
        %602 = vdwg.mxu0
        %v609 = vunpack.c.l.b16 %v483
        %v610 = vunpack.c.l.b16 %v484
        %v611 = vunpack.c.l.b16 %v485
        %v612 = vunpack.c.l.b16 %v486
        %v613 = vunpack.c.l.b16 %v487
        %v614 = vunpack.c.l.b16 %v488
        %v615 = vpack.c.b16 %v610, %v609
        %v616 = vpack.c.b16 %v612, %v611
        %v617 = vpack.c.b16 %v614, %v613
        %v622 = vunpack.c.l.b16 %v489
        %v623 = vunpack.c.h.b16 %v489
        %v624 = vunpack.c.l.b16 %v490
        %v625 = vunpack.c.h.b16 %v490
        %v626 = vunpack.c.l.b16 %v491
        %v627 = vunpack.c.h.b16 %v491
        %v628 = vunpack.c.l.b16 %v492
        %v629 = vunpack.c.h.b16 %v492
        %v630 = vpack.c.b16 %v624, %v622
        %v631 = vpack.c.b16 %v625, %v623
        %v632 = vpack.c.b16 %v628, %v626
        %v633 = vpack.c.b16 %v629, %v627
        %v637 = vsel %vm538, %v615, 0
        %v640 = vsel %vm538, %v616, 0
        %v643 = vsel %vm538, %v617, 0
        %v646 = vsel %vm548, %v632, 0
        %v649 = vsel %vm548, %v633, 0
        %651 = vmatpush.bf16.msra.mxu0 0
        %652 = vmatpush.bf16.msra.mxu0 0
        %653 = vmatpush.bf16.msra.mxu0 0
        %654 = vmatpush.bf16.msra.mxu0 0
        %655 = vmatpush.bf16.msra.mxu0 0
        %656 = vmatpush.bf16.msra.mxu0 0
        %657 = vmatpush.bf16.msra.mxu0 %v646
        %658 = vmatpush.bf16.msra.mxu0 %v630
        %659 = vmatmul.bf16.gmra.mxu0 %v637
        %v660 = vpop.f32.mrf.mxu0
        %v661 = vadd.f32 %v565, %v660
        %v662 = vpop.f32.mrf.mxu0
        %v663 = vadd.f32 %v567, %v662
        %664 = vmatmul.bf16.gmra.mxu0 %v640
        %v665 = vpop.f32.mrf.mxu0
        %v666 = vadd.f32 %v570, %v665
        %v667 = vpop.f32.mrf.mxu0
        %v668 = vadd.f32 %v572, %v667
        %669 = vmatmul.bf16.gmra.mxu0 %v643
        %v670 = vpop.f32.mrf.mxu0
        %v671 = vadd.f32 %v575, %v670
        %v672 = vpop.f32.mrf.mxu0
        %v673 = vadd.f32 %v577, %v672
        %674 = vdwg.mxu0
        %675 = vmatpush.bf16.msra.mxu0 0
        %676 = vmatpush.bf16.msra.mxu0 0
        %677 = vmatpush.bf16.msra.mxu0 0
        %678 = vmatpush.bf16.msra.mxu0 0
        %679 = vmatpush.bf16.msra.mxu0 0
        %680 = vmatpush.bf16.msra.mxu0 0
        %681 = vmatpush.bf16.msra.mxu0 %v649
        %682 = vmatpush.bf16.msra.mxu0 %v631
        %683 = vmatmul.bf16.gmra.mxu0 %v637
        %v684 = vpop.f32.mrf.mxu0
        %v685 = vadd.f32 %v589, %v684
        %v686 = vpop.f32.mrf.mxu0
        %v687 = vadd.f32 %v591, %v686
        %688 = vmatmul.bf16.gmra.mxu0 %v640
        %v689 = vpop.f32.mrf.mxu0
        %v690 = vadd.f32 %v594, %v689
        %v691 = vpop.f32.mrf.mxu0
        %v692 = vadd.f32 %v596, %v691
        %693 = vmatmul.bf16.gmra.mxu0 %v643
        %v694 = vpop.f32.mrf.mxu0
        %v695 = vadd.f32 %v599, %v694
        %v696 = vpop.f32.mrf.mxu0
        %v697 = vadd.f32 %v601, %v696
        %698 = vdwg.mxu0
        %s699 = scalar_lea.vmem %s446, 8 [#allocation2]
        %v700 = vld [vmem:[%s699] sm:$0xf]
        %v701 = vld [vmem:[%s699 + $0x10] sm:$0xf]
        %v702 = vld [vmem:[%s699 + $0x20] sm:$0xf]
        %v703 = vld [vmem:[%s699 + $0x30] sm:$0xf]
        %v704 = vld [vmem:[%s699 + $0x40] sm:$0xf]
        %v705 = vld [vmem:[%s699 + $0x50] sm:$0xf]
        %s706 = scalar_lea.vmem %s1, 64
        %v707 = vld [vmem:[%s706] sm:$0xff]
        %v708 = vld [vmem:[%s706 + $0x8] sm:$0xff]
        %v709 = vld [vmem:[%s706 + $0x10] sm:$0xff]
        %v710 = vld [vmem:[%s706 + $0x18] sm:$0x33]
        %v717 = vunpack.c.l.b16 %v700
        %v718 = vunpack.c.l.b16 %v701
        %v719 = vunpack.c.l.b16 %v702
        %v720 = vunpack.c.l.b16 %v703
        %v721 = vunpack.c.l.b16 %v704
        %v722 = vunpack.c.l.b16 %v705
        %v723 = vpack.c.b16 %v718, %v717
        %v724 = vpack.c.b16 %v720, %v719
        %v725 = vpack.c.b16 %v722, %v721
        %v730 = vunpack.c.l.b16 %v707
        %v731 = vunpack.c.h.b16 %v707
        %v732 = vunpack.c.l.b16 %v708
        %v733 = vunpack.c.h.b16 %v708
        %v734 = vunpack.c.l.b16 %v709
        %v735 = vunpack.c.h.b16 %v709
        %v736 = vunpack.c.l.b16 %v710
        %v737 = vunpack.c.h.b16 %v710
        %v738 = vpack.c.b16 %v732, %v730
        %v739 = vpack.c.b16 %v733, %v731
        %v740 = vpack.c.b16 %v736, %v734
        %v741 = vpack.c.b16 %v737, %v735
        %v745 = vsel %vm538, %v723, 0
        %v748 = vsel %vm538, %v724, 0
        %v751 = vsel %vm538, %v725, 0
        %v754 = vsel %vm548, %v740, 0
        %v757 = vsel %vm548, %v741, 0
        %759 = vmatpush.bf16.msra.mxu0 0
        %760 = vmatpush.bf16.msra.mxu0 0
        %761 = vmatpush.bf16.msra.mxu0 0
        %762 = vmatpush.bf16.msra.mxu0 0
        %763 = vmatpush.bf16.msra.mxu0 0
        %764 = vmatpush.bf16.msra.mxu0 0
        %765 = vmatpush.bf16.msra.mxu0 %v754
        %766 = vmatpush.bf16.msra.mxu0 %v738
        %767 = vmatmul.bf16.gmra.mxu0 %v745
        %v768 = vpop.f32.mrf.mxu0
        %v769 = vadd.f32 0.0, %v768
        %v770 = vpop.f32.mrf.mxu0
        %v771 = vadd.f32 0.0, %v770
        %772 = vmatmul.bf16.gmra.mxu0 %v748
        %v773 = vpop.f32.mrf.mxu0
        %v774 = vadd.f32 0.0, %v773
        %v775 = vpop.f32.mrf.mxu0
        %v776 = vadd.f32 0.0, %v775
        %777 = vmatmul.bf16.gmra.mxu0 %v751
        %v778 = vpop.f32.mrf.mxu0
        %v779 = vadd.f32 0.0, %v778
        %v780 = vpop.f32.mrf.mxu0
        %v781 = vadd.f32 0.0, %v780
        %782 = vdwg.mxu0
        %783 = vmatpush.bf16.msra.mxu0 0
        %784 = vmatpush.bf16.msra.mxu0 0
        %785 = vmatpush.bf16.msra.mxu0 0
        %786 = vmatpush.bf16.msra.mxu0 0
        %787 = vmatpush.bf16.msra.mxu0 0
        %788 = vmatpush.bf16.msra.mxu0 0
        %789 = vmatpush.bf16.msra.mxu0 %v757
        %790 = vmatpush.bf16.msra.mxu0 %v739
        %791 = vmatmul.bf16.gmra.mxu0 %v745
        %v792 = vpop.f32.mrf.mxu0
        %v793 = vadd.f32 0.0, %v792
        %v794 = vpop.f32.mrf.mxu0
        %v795 = vadd.f32 0.0, %v794
        %796 = vmatmul.bf16.gmra.mxu0 %v748
        %v797 = vpop.f32.mrf.mxu0
        %v798 = vadd.f32 0.0, %v797
        %v799 = vpop.f32.mrf.mxu0
        %v800 = vadd.f32 0.0, %v799
        %801 = vmatmul.bf16.gmra.mxu0 %v751
        %v802 = vpop.f32.mrf.mxu0
        %v803 = vadd.f32 0.0, %v802
        %v804 = vpop.f32.mrf.mxu0
        %v805 = vadd.f32 0.0, %v804
        %806 = vdwg.mxu0
        %v807 = vadd.f32 %v661, %v769
        %v808 = vadd.f32 %v685, %v793
        %v809 = vadd.f32 %v663, %v771
        %v810 = vadd.f32 %v687, %v795
        %v811 = vadd.f32 %v666, %v774
        %v812 = vadd.f32 %v690, %v798
        %v813 = vadd.f32 %v668, %v776
        %v814 = vadd.f32 %v692, %v800
        %v815 = vadd.f32 %v671, %v779
        %v816 = vadd.f32 %v695, %v803
        %v817 = vadd.f32 %v673, %v781
        %v818 = vadd.f32 %v697, %v805
        %s819 = scalar_lea.vmem %s446, 12 [#allocation2]
        %v820 = vld [vmem:[%s819] sm:$0xf]
        %v821 = vld [vmem:[%s819 + $0x10] sm:$0xf]
        %v822 = vld [vmem:[%s819 + $0x20] sm:$0xf]
        %v823 = vld [vmem:[%s819 + $0x30] sm:$0xf]
        %v824 = vld [vmem:[%s819 + $0x40] sm:$0xf]
        %v825 = vld [vmem:[%s819 + $0x50] sm:$0xf]
        %s826 = scalar_lea.vmem %s1, 96
        %v827 = vld [vmem:[%s826] sm:$0xff]
        %v828 = vld [vmem:[%s826 + $0x8] sm:$0xff]
        %v829 = vld [vmem:[%s826 + $0x10] sm:$0xff]
        %v830 = vld [vmem:[%s826 + $0x18] sm:$0x33]
        %v837 = vunpack.c.l.b16 %v820
        %v838 = vunpack.c.l.b16 %v821
        %v839 = vunpack.c.l.b16 %v822
        %v840 = vunpack.c.l.b16 %v823
        %v841 = vunpack.c.l.b16 %v824
        %v842 = vunpack.c.l.b16 %v825
        %v843 = vpack.c.b16 %v838, %v837
        %v844 = vpack.c.b16 %v840, %v839
        %v845 = vpack.c.b16 %v842, %v841
        %v850 = vunpack.c.l.b16 %v827
        %v851 = vunpack.c.h.b16 %v827
        %v852 = vunpack.c.l.b16 %v828
        %v853 = vunpack.c.h.b16 %v828
        %v854 = vunpack.c.l.b16 %v829
        %v855 = vunpack.c.h.b16 %v829
        %v856 = vunpack.c.l.b16 %v830
        %v857 = vunpack.c.h.b16 %v830
        %v858 = vpack.c.b16 %v852, %v850
        %v859 = vpack.c.b16 %v853, %v851
        %v860 = vpack.c.b16 %v856, %v854
        %v861 = vpack.c.b16 %v857, %v855
        %v865 = vsel %vm538, %v843, 0
        %v868 = vsel %vm538, %v844, 0
        %v871 = vsel %vm538, %v845, 0
        %v874 = vsel %vm548, %v860, 0
        %v877 = vsel %vm548, %v861, 0
        %879 = vmatpush.bf16.msra.mxu0 0
        %880 = vmatpush.bf16.msra.mxu0 0
        %881 = vmatpush.bf16.msra.mxu0 0
        %882 = vmatpush.bf16.msra.mxu0 0
        %883 = vmatpush.bf16.msra.mxu0 0
        %884 = vmatpush.bf16.msra.mxu0 0
        %885 = vmatpush.bf16.msra.mxu0 %v874
        %886 = vmatpush.bf16.msra.mxu0 %v858
        %887 = vmatmul.bf16.gmra.mxu0 %v865
        %v888 = vpop.f32.mrf.mxu0
        %v889 = vadd.f32 0.0, %v888
        %v890 = vpop.f32.mrf.mxu0
        %v891 = vadd.f32 0.0, %v890
        %892 = vmatmul.bf16.gmra.mxu0 %v868
        %v893 = vpop.f32.mrf.mxu0
        %v894 = vadd.f32 0.0, %v893
        %v895 = vpop.f32.mrf.mxu0
        %v896 = vadd.f32 0.0, %v895
        %897 = vmatmul.bf16.gmra.mxu0 %v871
        %v898 = vpop.f32.mrf.mxu0
        %v899 = vadd.f32 0.0, %v898
        %v900 = vpop.f32.mrf.mxu0
        %v901 = vadd.f32 0.0, %v900
        %902 = vdwg.mxu0
        %903 = vmatpush.bf16.msra.mxu0 0
        %904 = vmatpush.bf16.msra.mxu0 0
        %905 = vmatpush.bf16.msra.mxu0 0
        %906 = vmatpush.bf16.msra.mxu0 0
        %907 = vmatpush.bf16.msra.mxu0 0
        %908 = vmatpush.bf16.msra.mxu0 0
        %909 = vmatpush.bf16.msra.mxu0 %v877
        %910 = vmatpush.bf16.msra.mxu0 %v859
        %911 = vmatmul.bf16.gmra.mxu0 %v865
        %v912 = vpop.f32.mrf.mxu0
        %v913 = vadd.f32 0.0, %v912
        %v914 = vpop.f32.mrf.mxu0
        %v915 = vadd.f32 0.0, %v914
        %916 = vmatmul.bf16.gmra.mxu0 %v868
        %v917 = vpop.f32.mrf.mxu0
        %v918 = vadd.f32 0.0, %v917
        %v919 = vpop.f32.mrf.mxu0
        %v920 = vadd.f32 0.0, %v919
        %921 = vmatmul.bf16.gmra.mxu0 %v871
        %v922 = vpop.f32.mrf.mxu0
        %v923 = vadd.f32 0.0, %v922
        %v924 = vpop.f32.mrf.mxu0
        %v925 = vadd.f32 0.0, %v924
        %926 = vdwg.mxu0
        %v927 = vadd.f32 %v807, %v889
        %v928 = vadd.f32 %v808, %v913
        %v929 = vadd.f32 %v809, %v891
        %v930 = vadd.f32 %v810, %v915
        %v931 = vadd.f32 %v811, %v894
        %v932 = vadd.f32 %v812, %v918
        %v933 = vadd.f32 %v813, %v896
        %v934 = vadd.f32 %v814, %v920
        %v935 = vadd.f32 %v815, %v899
        %v936 = vadd.f32 %v816, %v923
        %v937 = vadd.f32 %v817, %v901
        %v938 = vadd.f32 %v818, %v925
        %s939 = scalar_lea.vmem %s446, 16 [#allocation2]
        %v940 = vld [vmem:[%s939] sm:$0xf]
        %v941 = vld [vmem:[%s939 + $0x10] sm:$0xf]
        %v942 = vld [vmem:[%s939 + $0x20] sm:$0xf]
        %v943 = vld [vmem:[%s939 + $0x30] sm:$0xf]
        %v944 = vld [vmem:[%s939 + $0x40] sm:$0xf]
        %v945 = vld [vmem:[%s939 + $0x50] sm:$0xf]
        %s946 = scalar_lea.vmem %s1, 128
        %v947 = vld [vmem:[%s946] sm:$0xff]
        %v948 = vld [vmem:[%s946 + $0x8] sm:$0xff]
        %v949 = vld [vmem:[%s946 + $0x10] sm:$0xff]
        %v950 = vld [vmem:[%s946 + $0x18] sm:$0x33]
        %v957 = vunpack.c.l.b16 %v940
        %v958 = vunpack.c.l.b16 %v941
        %v959 = vunpack.c.l.b16 %v942
        %v960 = vunpack.c.l.b16 %v943
        %v961 = vunpack.c.l.b16 %v944
        %v962 = vunpack.c.l.b16 %v945
        %v963 = vpack.c.b16 %v958, %v957
        %v964 = vpack.c.b16 %v960, %v959
        %v965 = vpack.c.b16 %v962, %v961
        %v970 = vunpack.c.l.b16 %v947
        %v971 = vunpack.c.h.b16 %v947
        %v972 = vunpack.c.l.b16 %v948
        %v973 = vunpack.c.h.b16 %v948
        %v974 = vunpack.c.l.b16 %v949
        %v975 = vunpack.c.h.b16 %v949
        %v976 = vunpack.c.l.b16 %v950
        %v977 = vunpack.c.h.b16 %v950
        %v978 = vpack.c.b16 %v972, %v970
        %v979 = vpack.c.b16 %v973, %v971
        %v980 = vpack.c.b16 %v976, %v974
        %v981 = vpack.c.b16 %v977, %v975
        %v985 = vsel %vm538, %v963, 0
        %v988 = vsel %vm538, %v964, 0
        %v991 = vsel %vm538, %v965, 0
        %v994 = vsel %vm548, %v980, 0
        %v997 = vsel %vm548, %v981, 0
        %999 = vmatpush.bf16.msra.mxu0 0
        %1000 = vmatpush.bf16.msra.mxu0 0
        %1001 = vmatpush.bf16.msra.mxu0 0
        %1002 = vmatpush.bf16.msra.mxu0 0
        %1003 = vmatpush.bf16.msra.mxu0 0
        %1004 = vmatpush.bf16.msra.mxu0 0
        %1005 = vmatpush.bf16.msra.mxu0 %v994
        %1006 = vmatpush.bf16.msra.mxu0 %v978
        %1007 = vmatmul.bf16.gmra.mxu0 %v985
        %v1008 = vpop.f32.mrf.mxu0
        %v1009 = vadd.f32 0.0, %v1008
        %v1010 = vpop.f32.mrf.mxu0
        %v1011 = vadd.f32 0.0, %v1010
        %1012 = vmatmul.bf16.gmra.mxu0 %v988
        %v1013 = vpop.f32.mrf.mxu0
        %v1014 = vadd.f32 0.0, %v1013
        %v1015 = vpop.f32.mrf.mxu0
        %v1016 = vadd.f32 0.0, %v1015
        %1017 = vmatmul.bf16.gmra.mxu0 %v991
        %v1018 = vpop.f32.mrf.mxu0
        %v1019 = vadd.f32 0.0, %v1018
        %v1020 = vpop.f32.mrf.mxu0
        %v1021 = vadd.f32 0.0, %v1020
        %1022 = vdwg.mxu0
        %1023 = vmatpush.bf16.msra.mxu0 0
        %1024 = vmatpush.bf16.msra.mxu0 0
        %1025 = vmatpush.bf16.msra.mxu0 0
        %1026 = vmatpush.bf16.msra.mxu0 0
        %1027 = vmatpush.bf16.msra.mxu0 0
        %1028 = vmatpush.bf16.msra.mxu0 0
        %1029 = vmatpush.bf16.msra.mxu0 %v997
        %1030 = vmatpush.bf16.msra.mxu0 %v979
        %1031 = vmatmul.bf16.gmra.mxu0 %v985
        %v1032 = vpop.f32.mrf.mxu0
        %v1033 = vadd.f32 0.0, %v1032
        %v1034 = vpop.f32.mrf.mxu0
        %v1035 = vadd.f32 0.0, %v1034
        %1036 = vmatmul.bf16.gmra.mxu0 %v988
        %v1037 = vpop.f32.mrf.mxu0
        %v1038 = vadd.f32 0.0, %v1037
        %v1039 = vpop.f32.mrf.mxu0
        %v1040 = vadd.f32 0.0, %v1039
        %1041 = vmatmul.bf16.gmra.mxu0 %v991
        %v1042 = vpop.f32.mrf.mxu0
        %v1043 = vadd.f32 0.0, %v1042
        %v1044 = vpop.f32.mrf.mxu0
        %v1045 = vadd.f32 0.0, %v1044
        %1046 = vdwg.mxu0
        %v1047 = vadd.f32 %v927, %v1009
        %v1048 = vadd.f32 %v928, %v1033
        %v1049 = vadd.f32 %v929, %v1011
        %v1050 = vadd.f32 %v930, %v1035
        %v1051 = vadd.f32 %v931, %v1014
        %v1052 = vadd.f32 %v932, %v1038
        %v1053 = vadd.f32 %v933, %v1016
        %v1054 = vadd.f32 %v934, %v1040
        %v1055 = vadd.f32 %v935, %v1019
        %v1056 = vadd.f32 %v936, %v1043
        %v1057 = vadd.f32 %v937, %v1021
        %v1058 = vadd.f32 %v938, %v1045
        %v1059 = vmax.f32 %v1047, %v1048
        %v1060 = vmax.f32 %v1049, %v1050
        %v1061 = vmax.f32 %v1051, %v1052
        %v1062 = vmax.f32 %v1053, %v1054
        %v1063 = vmax.f32 %v1055, %v1056
        %v1064 = vmax.f32 %v1057, %v1058
        %1065 = vmatpush.bf16.msra.mxu0 0
        %1066 = vmatpush.bf16.msra.mxu0 0
        %1067 = vmatpush.bf16.msra.mxu0 0
        %1068 = vmatpush.bf16.msra.mxu0 0
        %1069 = vmatpush.bf16.msra.mxu0 0
        %1070 = vmatpush.bf16.msra.mxu0 0
        %1071 = vmatpush.bf16.msra.mxu0 %v550
        %1072 = vmatpush.bf16.msra.mxu0 %v532
        %1073 = vmatmul.bf16.gmra.mxu0 %v745
        %v1074 = vpop.f32.mrf.mxu0
        %v1075 = vadd.f32 0.0, %v1074
        %v1076 = vpop.f32.mrf.mxu0
        %v1077 = vadd.f32 0.0, %v1076
        %1078 = vmatmul.bf16.gmra.mxu0 %v748
        %v1079 = vpop.f32.mrf.mxu0
        %v1080 = vadd.f32 0.0, %v1079
        %v1081 = vpop.f32.mrf.mxu0
        %v1082 = vadd.f32 0.0, %v1081
        %1083 = vmatmul.bf16.gmra.mxu0 %v751
        %v1084 = vpop.f32.mrf.mxu0
        %v1085 = vadd.f32 0.0, %v1084
        %v1086 = vpop.f32.mrf.mxu0
        %v1087 = vadd.f32 0.0, %v1086
        %1088 = vdwg.mxu0
        %1089 = vmatpush.bf16.msra.mxu0 0
        %1090 = vmatpush.bf16.msra.mxu0 0
        %1091 = vmatpush.bf16.msra.mxu0 0
        %1092 = vmatpush.bf16.msra.mxu0 0
        %1093 = vmatpush.bf16.msra.mxu0 0
        %1094 = vmatpush.bf16.msra.mxu0 0
        %1095 = vmatpush.bf16.msra.mxu0 %v553
        %1096 = vmatpush.bf16.msra.mxu0 %v533
        %1097 = vmatmul.bf16.gmra.mxu0 %v745
        %v1098 = vpop.f32.mrf.mxu0
        %v1099 = vadd.f32 0.0, %v1098
        %v1100 = vpop.f32.mrf.mxu0
        %v1101 = vadd.f32 0.0, %v1100
        %1102 = vmatmul.bf16.gmra.mxu0 %v748
        %v1103 = vpop.f32.mrf.mxu0
        %v1104 = vadd.f32 0.0, %v1103
        %v1105 = vpop.f32.mrf.mxu0
        %v1106 = vadd.f32 0.0, %v1105
        %1107 = vmatmul.bf16.gmra.mxu0 %v751
        %v1108 = vpop.f32.mrf.mxu0
        %v1109 = vadd.f32 0.0, %v1108
        %v1110 = vpop.f32.mrf.mxu0
        %v1111 = vadd.f32 0.0, %v1110
        %1112 = vdwg.mxu0
        %1113 = vmatpush.bf16.msra.mxu0 0
        %1114 = vmatpush.bf16.msra.mxu0 0
        %1115 = vmatpush.bf16.msra.mxu0 0
        %1116 = vmatpush.bf16.msra.mxu0 0
        %1117 = vmatpush.bf16.msra.mxu0 0
        %1118 = vmatpush.bf16.msra.mxu0 0
        %1119 = vmatpush.bf16.msra.mxu0 %v646
        %1120 = vmatpush.bf16.msra.mxu0 %v630
        %1121 = vmatmul.bf16.gmra.mxu0 %v540
        %v1122 = vpop.f32.mrf.mxu0
        %v1123 = vadd.f32 %v1075, %v1122
        %v1124 = vpop.f32.mrf.mxu0
        %v1125 = vadd.f32 %v1077, %v1124
        %1126 = vmatmul.bf16.gmra.mxu0 %v543
        %v1127 = vpop.f32.mrf.mxu0
        %v1128 = vadd.f32 %v1080, %v1127
        %v1129 = vpop.f32.mrf.mxu0
        %v1130 = vadd.f32 %v1082, %v1129
        %1131 = vmatmul.bf16.gmra.mxu0 %v546
        %v1132 = vpop.f32.mrf.mxu0
        %v1133 = vadd.f32 %v1085, %v1132
        %v1134 = vpop.f32.mrf.mxu0
        %v1135 = vadd.f32 %v1087, %v1134
        %1136 = vdwg.mxu0
        %1137 = vmatpush.bf16.msra.mxu0 0
        %1138 = vmatpush.bf16.msra.mxu0 0
        %1139 = vmatpush.bf16.msra.mxu0 0
        %1140 = vmatpush.bf16.msra.mxu0 0
        %1141 = vmatpush.bf16.msra.mxu0 0
        %1142 = vmatpush.bf16.msra.mxu0 0
        %1143 = vmatpush.bf16.msra.mxu0 %v649
        %1144 = vmatpush.bf16.msra.mxu0 %v631
        %1145 = vmatmul.bf16.gmra.mxu0 %v540
        %v1146 = vpop.f32.mrf.mxu0
        %v1147 = vadd.f32 %v1099, %v1146
        %v1148 = vpop.f32.mrf.mxu0
        %v1149 = vadd.f32 %v1101, %v1148
        %1150 = vmatmul.bf16.gmra.mxu0 %v543
        %v1151 = vpop.f32.mrf.mxu0
        %v1152 = vadd.f32 %v1104, %v1151
        %v1153 = vpop.f32.mrf.mxu0
        %v1154 = vadd.f32 %v1106, %v1153
        %1155 = vmatmul.bf16.gmra.mxu0 %v546
        %v1156 = vpop.f32.mrf.mxu0
        %v1157 = vadd.f32 %v1109, %v1156
        %v1158 = vpop.f32.mrf.mxu0
        %v1159 = vadd.f32 %v1111, %v1158
        %1160 = vdwg.mxu0
        %1161 = vmatpush.bf16.msra.mxu0 0
        %1162 = vmatpush.bf16.msra.mxu0 0
        %1163 = vmatpush.bf16.msra.mxu0 0
        %1164 = vmatpush.bf16.msra.mxu0 0
        %1165 = vmatpush.bf16.msra.mxu0 0
        %1166 = vmatpush.bf16.msra.mxu0 0
        %1167 = vmatpush.bf16.msra.mxu0 %v754
        %1168 = vmatpush.bf16.msra.mxu0 %v738
        %1169 = vmatmul.bf16.gmra.mxu0 %v865
        %v1170 = vpop.f32.mrf.mxu0
        %v1171 = vadd.f32 0.0, %v1170
        %v1172 = vpop.f32.mrf.mxu0
        %v1173 = vadd.f32 0.0, %v1172
        %1174 = vmatmul.bf16.gmra.mxu0 %v868
        %v1175 = vpop.f32.mrf.mxu0
        %v1176 = vadd.f32 0.0, %v1175
        %v1177 = vpop.f32.mrf.mxu0
        %v1178 = vadd.f32 0.0, %v1177
        %1179 = vmatmul.bf16.gmra.mxu0 %v871
        %v1180 = vpop.f32.mrf.mxu0
        %v1181 = vadd.f32 0.0, %v1180
        %v1182 = vpop.f32.mrf.mxu0
        %v1183 = vadd.f32 0.0, %v1182
        %1184 = vdwg.mxu0
        %1185 = vmatpush.bf16.msra.mxu0 0
        %1186 = vmatpush.bf16.msra.mxu0 0
        %1187 = vmatpush.bf16.msra.mxu0 0
        %1188 = vmatpush.bf16.msra.mxu0 0
        %1189 = vmatpush.bf16.msra.mxu0 0
        %1190 = vmatpush.bf16.msra.mxu0 0
        %1191 = vmatpush.bf16.msra.mxu0 %v757
        %1192 = vmatpush.bf16.msra.mxu0 %v739
        %1193 = vmatmul.bf16.gmra.mxu0 %v865
        %v1194 = vpop.f32.mrf.mxu0
        %v1195 = vadd.f32 0.0, %v1194
        %v1196 = vpop.f32.mrf.mxu0
        %v1197 = vadd.f32 0.0, %v1196
        %1198 = vmatmul.bf16.gmra.mxu0 %v868
        %v1199 = vpop.f32.mrf.mxu0
        %v1200 = vadd.f32 0.0, %v1199
        %v1201 = vpop.f32.mrf.mxu0
        %v1202 = vadd.f32 0.0, %v1201
        %1203 = vmatmul.bf16.gmra.mxu0 %v871
        %v1204 = vpop.f32.mrf.mxu0
        %v1205 = vadd.f32 0.0, %v1204
        %v1206 = vpop.f32.mrf.mxu0
        %v1207 = vadd.f32 0.0, %v1206
        %1208 = vdwg.mxu0
        %v1209 = vadd.f32 %v1123, %v1171
        %v1210 = vadd.f32 %v1147, %v1195
        %v1211 = vadd.f32 %v1125, %v1173
        %v1212 = vadd.f32 %v1149, %v1197
        %v1213 = vadd.f32 %v1128, %v1176
        %v1214 = vadd.f32 %v1152, %v1200
        %v1215 = vadd.f32 %v1130, %v1178
        %v1216 = vadd.f32 %v1154, %v1202
        %v1217 = vadd.f32 %v1133, %v1181
        %v1218 = vadd.f32 %v1157, %v1205
        %v1219 = vadd.f32 %v1135, %v1183
        %v1220 = vadd.f32 %v1159, %v1207
        %1221 = vmatpush.bf16.msra.mxu0 0
        %1222 = vmatpush.bf16.msra.mxu0 0
        %1223 = vmatpush.bf16.msra.mxu0 0
        %1224 = vmatpush.bf16.msra.mxu0 0
        %1225 = vmatpush.bf16.msra.mxu0 0
        %1226 = vmatpush.bf16.msra.mxu0 0
        %1227 = vmatpush.bf16.msra.mxu0 %v874
        %1228 = vmatpush.bf16.msra.mxu0 %v858
        %1229 = vmatmul.bf16.gmra.mxu0 %v985
        %v1230 = vpop.f32.mrf.mxu0
        %v1231 = vadd.f32 0.0, %v1230
        %v1232 = vpop.f32.mrf.mxu0
        %v1233 = vadd.f32 0.0, %v1232
        %1234 = vmatmul.bf16.gmra.mxu0 %v988
        %v1235 = vpop.f32.mrf.mxu0
        %v1236 = vadd.f32 0.0, %v1235
        %v1237 = vpop.f32.mrf.mxu0
        %v1238 = vadd.f32 0.0, %v1237
        %1239 = vmatmul.bf16.gmra.mxu0 %v991
        %v1240 = vpop.f32.mrf.mxu0
        %v1241 = vadd.f32 0.0, %v1240
        %v1242 = vpop.f32.mrf.mxu0
        %v1243 = vadd.f32 0.0, %v1242
        %1244 = vdwg.mxu0
        %1245 = vmatpush.bf16.msra.mxu0 0
        %1246 = vmatpush.bf16.msra.mxu0 0
        %1247 = vmatpush.bf16.msra.mxu0 0
        %1248 = vmatpush.bf16.msra.mxu0 0
        %1249 = vmatpush.bf16.msra.mxu0 0
        %1250 = vmatpush.bf16.msra.mxu0 0
        %1251 = vmatpush.bf16.msra.mxu0 %v877
        %1252 = vmatpush.bf16.msra.mxu0 %v859
        %1253 = vmatmul.bf16.gmra.mxu0 %v985
        %v1254 = vpop.f32.mrf.mxu0
        %v1255 = vadd.f32 0.0, %v1254
        %v1256 = vpop.f32.mrf.mxu0
        %v1257 = vadd.f32 0.0, %v1256
        %1258 = vmatmul.bf16.gmra.mxu0 %v988
        %v1259 = vpop.f32.mrf.mxu0
        %v1260 = vadd.f32 0.0, %v1259
        %v1261 = vpop.f32.mrf.mxu0
        %v1262 = vadd.f32 0.0, %v1261
        %1263 = vmatmul.bf16.gmra.mxu0 %v991
        %v1264 = vpop.f32.mrf.mxu0
        %v1265 = vadd.f32 0.0, %v1264
        %v1266 = vpop.f32.mrf.mxu0
        %v1267 = vadd.f32 0.0, %v1266
        %1268 = vdwg.mxu0
        %v1269 = vadd.f32 %v1209, %v1231
        %v1270 = vadd.f32 %v1210, %v1255
        %v1271 = vadd.f32 %v1211, %v1233
        %v1272 = vadd.f32 %v1212, %v1257
        %v1273 = vadd.f32 %v1213, %v1236
        %v1274 = vadd.f32 %v1214, %v1260
        %v1275 = vadd.f32 %v1215, %v1238
        %v1276 = vadd.f32 %v1216, %v1262
        %v1277 = vadd.f32 %v1217, %v1241
        %v1278 = vadd.f32 %v1218, %v1265
        %v1279 = vadd.f32 %v1219, %v1243
        %v1280 = vadd.f32 %v1220, %v1267
        %s1281 = scalar_lea.vmem %s446, 20 [#allocation2]
        %v1282 = vld [vmem:[%s1281] sm:$0xf]
        %v1283 = vld [vmem:[%s1281 + $0x10] sm:$0xf]
        %v1284 = vld [vmem:[%s1281 + $0x20] sm:$0xf]
        %v1285 = vld [vmem:[%s1281 + $0x30] sm:$0xf]
        %v1286 = vld [vmem:[%s1281 + $0x40] sm:$0xf]
        %v1287 = vld [vmem:[%s1281 + $0x50] sm:$0xf]
        %v1294 = vunpack.c.l.b16 %v1282
        %v1295 = vunpack.c.l.b16 %v1283
        %v1296 = vunpack.c.l.b16 %v1284
        %v1297 = vunpack.c.l.b16 %v1285
        %v1298 = vunpack.c.l.b16 %v1286
        %v1299 = vunpack.c.l.b16 %v1287
        %v1300 = vpack.c.b16 %v1295, %v1294
        %v1301 = vpack.c.b16 %v1297, %v1296
        %v1302 = vpack.c.b16 %v1299, %v1298
        %v1304 = vsel %vm538, %v1300, 0
        %v1307 = vsel %vm538, %v1301, 0
        %v1310 = vsel %vm538, %v1302, 0
        %1312 = vmatpush.bf16.msra.mxu0 0
        %1313 = vmatpush.bf16.msra.mxu0 0
        %1314 = vmatpush.bf16.msra.mxu0 0
        %1315 = vmatpush.bf16.msra.mxu0 0
        %1316 = vmatpush.bf16.msra.mxu0 0
        %1317 = vmatpush.bf16.msra.mxu0 0
        %1318 = vmatpush.bf16.msra.mxu0 %v994
        %1319 = vmatpush.bf16.msra.mxu0 %v978
        %1320 = vmatmul.bf16.gmra.mxu0 %v1304
        %v1321 = vpop.f32.mrf.mxu0
        %v1322 = vadd.f32 0.0, %v1321
        %v1323 = vpop.f32.mrf.mxu0
        %v1324 = vadd.f32 0.0, %v1323
        %1325 = vmatmul.bf16.gmra.mxu0 %v1307
        %v1326 = vpop.f32.mrf.mxu0
        %v1327 = vadd.f32 0.0, %v1326
        %v1328 = vpop.f32.mrf.mxu0
        %v1329 = vadd.f32 0.0, %v1328
        %1330 = vmatmul.bf16.gmra.mxu0 %v1310
        %v1331 = vpop.f32.mrf.mxu0
        %v1332 = vadd.f32 0.0, %v1331
        %v1333 = vpop.f32.mrf.mxu0
        %v1334 = vadd.f32 0.0, %v1333
        %1335 = vdwg.mxu0
        %1336 = vmatpush.bf16.msra.mxu0 0
        %1337 = vmatpush.bf16.msra.mxu0 0
        %1338 = vmatpush.bf16.msra.mxu0 0
        %1339 = vmatpush.bf16.msra.mxu0 0
        %1340 = vmatpush.bf16.msra.mxu0 0
        %1341 = vmatpush.bf16.msra.mxu0 0
        %1342 = vmatpush.bf16.msra.mxu0 %v997
        %1343 = vmatpush.bf16.msra.mxu0 %v979
        %1344 = vmatmul.bf16.gmra.mxu0 %v1304
        %v1345 = vpop.f32.mrf.mxu0
        %v1346 = vadd.f32 0.0, %v1345
        %v1347 = vpop.f32.mrf.mxu0
        %v1348 = vadd.f32 0.0, %v1347
        %1349 = vmatmul.bf16.gmra.mxu0 %v1307
        %v1350 = vpop.f32.mrf.mxu0
        %v1351 = vadd.f32 0.0, %v1350
        %v1352 = vpop.f32.mrf.mxu0
        %v1353 = vadd.f32 0.0, %v1352
        %1354 = vmatmul.bf16.gmra.mxu0 %v1310
        %v1355 = vpop.f32.mrf.mxu0
        %v1356 = vadd.f32 0.0, %v1355
        %v1357 = vpop.f32.mrf.mxu0
        %v1358 = vadd.f32 0.0, %v1357
        %1359 = vdwg.mxu0
        %v1360 = vadd.f32 %v1269, %v1322
        %v1361 = vadd.f32 %v1270, %v1346
        %v1362 = vadd.f32 %v1271, %v1324
        %v1363 = vadd.f32 %v1272, %v1348
        %v1364 = vadd.f32 %v1273, %v1327
        %v1365 = vadd.f32 %v1274, %v1351
        %v1366 = vadd.f32 %v1275, %v1329
        %v1367 = vadd.f32 %v1276, %v1353
        %v1368 = vadd.f32 %v1277, %v1332
        %v1369 = vadd.f32 %v1278, %v1356
        %v1370 = vadd.f32 %v1279, %v1334
        %v1371 = vadd.f32 %v1280, %v1358
        %v1372 = vmax.f32 %v1360, %v1361
        %v1373 = vmax.f32 %v1362, %v1363
        %v1374 = vmax.f32 %v1364, %v1365
        %v1375 = vmax.f32 %v1366, %v1367
        %v1376 = vmax.f32 %v1368, %v1369
        %v1377 = vmax.f32 %v1370, %v1371
        %v1378 = vmax.f32 %v1059, %v1372
        %v1379 = vmax.f32 %v1060, %v1373
        %v1380 = vmax.f32 %v1061, %v1374
        %v1381 = vmax.f32 %v1062, %v1375
        %v1382 = vmax.f32 %v1063, %v1376
        %v1383 = vmax.f32 %v1064, %v1377
        %v1384 = vld [vmem:[%s2] sm:$0x1]
        %v1386 = vperm.slane %v1384, 0
        %v1388 = vadd.f32 %v1378, %v1386
        %v1389 = vadd.f32 %v1379, %v1386
        %v1390 = vadd.f32 %v1380, %v1386
        %v1391 = vadd.f32 %v1381, %v1386
        %v1392 = vadd.f32 %v1382, %v1386
        %v1393 = vadd.f32 %v1383, %v1386
        %v1394 = vmax.f32 %v1388, 0.0
        %v1395 = vmax.f32 %v1389, 0.0
        %v1396 = vmax.f32 %v1390, 0.0
        %v1397 = vmax.f32 %v1391, 0.0
        %v1398 = vmax.f32 %v1392, 0.0
        %v1399 = vmax.f32 %v1393, 0.0
        %v1400 = vpack.c.bf16 %v1394, %v1394
        %v1401 = vpack.c.bf16 %v1395, %v1395
        %v1402 = vpack.c.bf16 %v1396, %v1396
        %v1403 = vpack.c.bf16 %v1397, %v1397
        %v1404 = vpack.c.bf16 %v1398, %v1398
        %v1405 = vpack.c.bf16 %v1399, %v1399
        %1406 = vmatpush.bf16.msra.mxu0 0
        %1407 = vmatpush.bf16.msra.mxu0 0
        %1408 = vmatpush.bf16.msra.mxu0 0
        %1409 = vmatpush.bf16.msra.mxu0 0
        %1410 = vmatpush.bf16.msra.mxu0 0
        %1411 = vmatpush.bf16.msra.mxu0 0
        %1412 = vmatpush.bf16.msra.mxu0 %v550
        %1413 = vmatpush.bf16.msra.mxu0 %v532
        %1414 = vmatmul.bf16.gmra.mxu0 %v865
        %v1415 = vpop.f32.mrf.mxu0
        %v1416 = vadd.f32 0.0, %v1415
        %v1417 = vpop.f32.mrf.mxu0
        %v1418 = vadd.f32 0.0, %v1417
        %1419 = vmatmul.bf16.gmra.mxu0 %v868
        %v1420 = vpop.f32.mrf.mxu0
        %v1421 = vadd.f32 0.0, %v1420
        %v1422 = vpop.f32.mrf.mxu0
        %v1423 = vadd.f32 0.0, %v1422
        %1424 = vmatmul.bf16.gmra.mxu0 %v871
        %v1425 = vpop.f32.mrf.mxu0
        %v1426 = vadd.f32 0.0, %v1425
        %v1427 = vpop.f32.mrf.mxu0
        %v1428 = vadd.f32 0.0, %v1427
        %1429 = vdwg.mxu0
        %1430 = vmatpush.bf16.msra.mxu0 0
        %1431 = vmatpush.bf16.msra.mxu0 0
        %1432 = vmatpush.bf16.msra.mxu0 0
        %1433 = vmatpush.bf16.msra.mxu0 0
        %1434 = vmatpush.bf16.msra.mxu0 0
        %1435 = vmatpush.bf16.msra.mxu0 0
        %1436 = vmatpush.bf16.msra.mxu0 %v553
        %1437 = vmatpush.bf16.msra.mxu0 %v533
        %1438 = vmatmul.bf16.gmra.mxu0 %v865
        %v1439 = vpop.f32.mrf.mxu0
        %v1440 = vadd.f32 0.0, %v1439
        %v1441 = vpop.f32.mrf.mxu0
        %v1442 = vadd.f32 0.0, %v1441
        %1443 = vmatmul.bf16.gmra.mxu0 %v868
        %v1444 = vpop.f32.mrf.mxu0
        %v1445 = vadd.f32 0.0, %v1444
        %v1446 = vpop.f32.mrf.mxu0
        %v1447 = vadd.f32 0.0, %v1446
        %1448 = vmatmul.bf16.gmra.mxu0 %v871
        %v1449 = vpop.f32.mrf.mxu0
        %v1450 = vadd.f32 0.0, %v1449
        %v1451 = vpop.f32.mrf.mxu0
        %v1452 = vadd.f32 0.0, %v1451
        %1453 = vdwg.mxu0
        %1454 = vmatpush.bf16.msra.mxu0 0
        %1455 = vmatpush.bf16.msra.mxu0 0
        %1456 = vmatpush.bf16.msra.mxu0 0
        %1457 = vmatpush.bf16.msra.mxu0 0
        %1458 = vmatpush.bf16.msra.mxu0 0
        %1459 = vmatpush.bf16.msra.mxu0 0
        %1460 = vmatpush.bf16.msra.mxu0 %v646
        %1461 = vmatpush.bf16.msra.mxu0 %v630
        %1462 = vmatmul.bf16.gmra.mxu0 %v745
        %v1463 = vpop.f32.mrf.mxu0
        %v1464 = vadd.f32 %v1416, %v1463
        %v1465 = vpop.f32.mrf.mxu0
        %v1466 = vadd.f32 %v1418, %v1465
        %1467 = vmatmul.bf16.gmra.mxu0 %v748
        %v1468 = vpop.f32.mrf.mxu0
        %v1469 = vadd.f32 %v1421, %v1468
        %v1470 = vpop.f32.mrf.mxu0
        %v1471 = vadd.f32 %v1423, %v1470
        %1472 = vmatmul.bf16.gmra.mxu0 %v751
        %v1473 = vpop.f32.mrf.mxu0
        %v1474 = vadd.f32 %v1426, %v1473
        %v1475 = vpop.f32.mrf.mxu0
        %v1476 = vadd.f32 %v1428, %v1475
        %1477 = vdwg.mxu0
        %1478 = vmatpush.bf16.msra.mxu0 0
        %1479 = vmatpush.bf16.msra.mxu0 0
        %1480 = vmatpush.bf16.msra.mxu0 0
        %1481 = vmatpush.bf16.msra.mxu0 0
        %1482 = vmatpush.bf16.msra.mxu0 0
        %1483 = vmatpush.bf16.msra.mxu0 0
        %1484 = vmatpush.bf16.msra.mxu0 %v649
        %1485 = vmatpush.bf16.msra.mxu0 %v631
        %1486 = vmatmul.bf16.gmra.mxu0 %v745
        %v1487 = vpop.f32.mrf.mxu0
        %v1488 = vadd.f32 %v1440, %v1487
        %v1489 = vpop.f32.mrf.mxu0
        %v1490 = vadd.f32 %v1442, %v1489
        %1491 = vmatmul.bf16.gmra.mxu0 %v748
        %v1492 = vpop.f32.mrf.mxu0
        %v1493 = vadd.f32 %v1445, %v1492
        %v1494 = vpop.f32.mrf.mxu0
        %v1495 = vadd.f32 %v1447, %v1494
        %1496 = vmatmul.bf16.gmra.mxu0 %v751
        %v1497 = vpop.f32.mrf.mxu0
        %v1498 = vadd.f32 %v1450, %v1497
        %v1499 = vpop.f32.mrf.mxu0
        %v1500 = vadd.f32 %v1452, %v1499
        %1501 = vdwg.mxu0
        %1502 = vmatpush.bf16.msra.mxu0 0
        %1503 = vmatpush.bf16.msra.mxu0 0
        %1504 = vmatpush.bf16.msra.mxu0 0
        %1505 = vmatpush.bf16.msra.mxu0 0
        %1506 = vmatpush.bf16.msra.mxu0 0
        %1507 = vmatpush.bf16.msra.mxu0 0
        %1508 = vmatpush.bf16.msra.mxu0 %v754
        %1509 = vmatpush.bf16.msra.mxu0 %v738
        %1510 = vmatmul.bf16.gmra.mxu0 %v985
        %v1511 = vpop.f32.mrf.mxu0
        %v1512 = vadd.f32 0.0, %v1511
        %v1513 = vpop.f32.mrf.mxu0
        %v1514 = vadd.f32 0.0, %v1513
        %1515 = vmatmul.bf16.gmra.mxu0 %v988
        %v1516 = vpop.f32.mrf.mxu0
        %v1517 = vadd.f32 0.0, %v1516
        %v1518 = vpop.f32.mrf.mxu0
        %v1519 = vadd.f32 0.0, %v1518
        %1520 = vmatmul.bf16.gmra.mxu0 %v991
        %v1521 = vpop.f32.mrf.mxu0
        %v1522 = vadd.f32 0.0, %v1521
        %v1523 = vpop.f32.mrf.mxu0
        %v1524 = vadd.f32 0.0, %v1523
        %1525 = vdwg.mxu0
        %1526 = vmatpush.bf16.msra.mxu0 0
        %1527 = vmatpush.bf16.msra.mxu0 0
        %1528 = vmatpush.bf16.msra.mxu0 0
        %1529 = vmatpush.bf16.msra.mxu0 0
        %1530 = vmatpush.bf16.msra.mxu0 0
        %1531 = vmatpush.bf16.msra.mxu0 0
        %1532 = vmatpush.bf16.msra.mxu0 %v757
        %1533 = vmatpush.bf16.msra.mxu0 %v739
        %1534 = vmatmul.bf16.gmra.mxu0 %v985
        %v1535 = vpop.f32.mrf.mxu0
        %v1536 = vadd.f32 0.0, %v1535
        %v1537 = vpop.f32.mrf.mxu0
        %v1538 = vadd.f32 0.0, %v1537
        %1539 = vmatmul.bf16.gmra.mxu0 %v988
        %v1540 = vpop.f32.mrf.mxu0
        %v1541 = vadd.f32 0.0, %v1540
        %v1542 = vpop.f32.mrf.mxu0
        %v1543 = vadd.f32 0.0, %v1542
        %1544 = vmatmul.bf16.gmra.mxu0 %v991
        %v1545 = vpop.f32.mrf.mxu0
        %v1546 = vadd.f32 0.0, %v1545
        %v1547 = vpop.f32.mrf.mxu0
        %v1548 = vadd.f32 0.0, %v1547
        %1549 = vdwg.mxu0
        %v1550 = vadd.f32 %v1464, %v1512
        %v1551 = vadd.f32 %v1488, %v1536
        %v1552 = vadd.f32 %v1466, %v1514
        %v1553 = vadd.f32 %v1490, %v1538
        %v1554 = vadd.f32 %v1469, %v1517
        %v1555 = vadd.f32 %v1493, %v1541
        %v1556 = vadd.f32 %v1471, %v1519
        %v1557 = vadd.f32 %v1495, %v1543
        %v1558 = vadd.f32 %v1474, %v1522
        %v1559 = vadd.f32 %v1498, %v1546
        %v1560 = vadd.f32 %v1476, %v1524
        %v1561 = vadd.f32 %v1500, %v1548
        %1562 = vmatpush.bf16.msra.mxu0 0
        %1563 = vmatpush.bf16.msra.mxu0 0
        %1564 = vmatpush.bf16.msra.mxu0 0
        %1565 = vmatpush.bf16.msra.mxu0 0
        %1566 = vmatpush.bf16.msra.mxu0 0
        %1567 = vmatpush.bf16.msra.mxu0 0
        %1568 = vmatpush.bf16.msra.mxu0 %v874
        %1569 = vmatpush.bf16.msra.mxu0 %v858
        %1570 = vmatmul.bf16.gmra.mxu0 %v1304
        %v1571 = vpop.f32.mrf.mxu0
        %v1572 = vadd.f32 0.0, %v1571
        %v1573 = vpop.f32.mrf.mxu0
        %v1574 = vadd.f32 0.0, %v1573
        %1575 = vmatmul.bf16.gmra.mxu0 %v1307
        %v1576 = vpop.f32.mrf.mxu0
        %v1577 = vadd.f32 0.0, %v1576
        %v1578 = vpop.f32.mrf.mxu0
        %v1579 = vadd.f32 0.0, %v1578
        %1580 = vmatmul.bf16.gmra.mxu0 %v1310
        %v1581 = vpop.f32.mrf.mxu0
        %v1582 = vadd.f32 0.0, %v1581
        %v1583 = vpop.f32.mrf.mxu0
        %v1584 = vadd.f32 0.0, %v1583
        %1585 = vdwg.mxu0
        %1586 = vmatpush.bf16.msra.mxu0 0
        %1587 = vmatpush.bf16.msra.mxu0 0
        %1588 = vmatpush.bf16.msra.mxu0 0
        %1589 = vmatpush.bf16.msra.mxu0 0
        %1590 = vmatpush.bf16.msra.mxu0 0
        %1591 = vmatpush.bf16.msra.mxu0 0
        %1592 = vmatpush.bf16.msra.mxu0 %v877
        %1593 = vmatpush.bf16.msra.mxu0 %v859
        %1594 = vmatmul.bf16.gmra.mxu0 %v1304
        %v1595 = vpop.f32.mrf.mxu0
        %v1596 = vadd.f32 0.0, %v1595
        %v1597 = vpop.f32.mrf.mxu0
        %v1598 = vadd.f32 0.0, %v1597
        %1599 = vmatmul.bf16.gmra.mxu0 %v1307
        %v1600 = vpop.f32.mrf.mxu0
        %v1601 = vadd.f32 0.0, %v1600
        %v1602 = vpop.f32.mrf.mxu0
        %v1603 = vadd.f32 0.0, %v1602
        %1604 = vmatmul.bf16.gmra.mxu0 %v1310
        %v1605 = vpop.f32.mrf.mxu0
        %v1606 = vadd.f32 0.0, %v1605
        %v1607 = vpop.f32.mrf.mxu0
        %v1608 = vadd.f32 0.0, %v1607
        %1609 = vdwg.mxu0
        %v1610 = vadd.f32 %v1550, %v1572
        %v1611 = vadd.f32 %v1551, %v1596
        %v1612 = vadd.f32 %v1552, %v1574
        %v1613 = vadd.f32 %v1553, %v1598
        %v1614 = vadd.f32 %v1554, %v1577
        %v1615 = vadd.f32 %v1555, %v1601
        %v1616 = vadd.f32 %v1556, %v1579
        %v1617 = vadd.f32 %v1557, %v1603
        %v1618 = vadd.f32 %v1558, %v1582
        %v1619 = vadd.f32 %v1559, %v1606
        %v1620 = vadd.f32 %v1560, %v1584
        %v1621 = vadd.f32 %v1561, %v1608
        %s1622 = scalar_lea.vmem %s446, 24 [#allocation2]
        %v1623 = vld [vmem:[%s1622] sm:$0xf]
        %v1624 = vld [vmem:[%s1622 + $0x10] sm:$0xf]
        %v1625 = vld [vmem:[%s1622 + $0x20] sm:$0xf]
        %v1626 = vld [vmem:[%s1622 + $0x30] sm:$0xf]
        %v1627 = vld [vmem:[%s1622 + $0x40] sm:$0xf]
        %v1628 = vld [vmem:[%s1622 + $0x50] sm:$0xf]
        %v1635 = vunpack.c.l.b16 %v1623
        %v1636 = vunpack.c.l.b16 %v1624
        %v1637 = vunpack.c.l.b16 %v1625
        %v1638 = vunpack.c.l.b16 %v1626
        %v1639 = vunpack.c.l.b16 %v1627
        %v1640 = vunpack.c.l.b16 %v1628
        %v1641 = vpack.c.b16 %v1636, %v1635
        %v1642 = vpack.c.b16 %v1638, %v1637
        %v1643 = vpack.c.b16 %v1640, %v1639
        %v1645 = vsel %vm538, %v1641, 0
        %v1648 = vsel %vm538, %v1642, 0
        %v1651 = vsel %vm538, %v1643, 0
        %1653 = vmatpush.bf16.msra.mxu0 0
        %1654 = vmatpush.bf16.msra.mxu0 0
        %1655 = vmatpush.bf16.msra.mxu0 0
        %1656 = vmatpush.bf16.msra.mxu0 0
        %1657 = vmatpush.bf16.msra.mxu0 0
        %1658 = vmatpush.bf16.msra.mxu0 0
        %1659 = vmatpush.bf16.msra.mxu0 %v994
        %1660 = vmatpush.bf16.msra.mxu0 %v978
        %1661 = vmatmul.bf16.gmra.mxu0 %v1645
        %v1662 = vpop.f32.mrf.mxu0
        %v1663 = vadd.f32 0.0, %v1662
        %v1664 = vpop.f32.mrf.mxu0
        %v1665 = vadd.f32 0.0, %v1664
        %1666 = vmatmul.bf16.gmra.mxu0 %v1648
        %v1667 = vpop.f32.mrf.mxu0
        %v1668 = vadd.f32 0.0, %v1667
        %v1669 = vpop.f32.mrf.mxu0
        %v1670 = vadd.f32 0.0, %v1669
        %1671 = vmatmul.bf16.gmra.mxu0 %v1651
        %v1672 = vpop.f32.mrf.mxu0
        %v1673 = vadd.f32 0.0, %v1672
        %v1674 = vpop.f32.mrf.mxu0
        %v1675 = vadd.f32 0.0, %v1674
        %1676 = vdwg.mxu0
        %1677 = vmatpush.bf16.msra.mxu0 0
        %1678 = vmatpush.bf16.msra.mxu0 0
        %1679 = vmatpush.bf16.msra.mxu0 0
        %1680 = vmatpush.bf16.msra.mxu0 0
        %1681 = vmatpush.bf16.msra.mxu0 0
        %1682 = vmatpush.bf16.msra.mxu0 0
        %1683 = vmatpush.bf16.msra.mxu0 %v997
        %1684 = vmatpush.bf16.msra.mxu0 %v979
        %1685 = vmatmul.bf16.gmra.mxu0 %v1645
        %v1686 = vpop.f32.mrf.mxu0
        %v1687 = vadd.f32 0.0, %v1686
        %v1688 = vpop.f32.mrf.mxu0
        %v1689 = vadd.f32 0.0, %v1688
        %1690 = vmatmul.bf16.gmra.mxu0 %v1648
        %v1691 = vpop.f32.mrf.mxu0
        %v1692 = vadd.f32 0.0, %v1691
        %v1693 = vpop.f32.mrf.mxu0
        %v1694 = vadd.f32 0.0, %v1693
        %1695 = vmatmul.bf16.gmra.mxu0 %v1651
        %v1696 = vpop.f32.mrf.mxu0
        %v1697 = vadd.f32 0.0, %v1696
        %v1698 = vpop.f32.mrf.mxu0
        %v1699 = vadd.f32 0.0, %v1698
        %1700 = vdwg.mxu0
        %v1701 = vadd.f32 %v1610, %v1663
        %v1702 = vadd.f32 %v1611, %v1687
        %v1703 = vadd.f32 %v1612, %v1665
        %v1704 = vadd.f32 %v1613, %v1689
        %v1705 = vadd.f32 %v1614, %v1668
        %v1706 = vadd.f32 %v1615, %v1692
        %v1707 = vadd.f32 %v1616, %v1670
        %v1708 = vadd.f32 %v1617, %v1694
        %v1709 = vadd.f32 %v1618, %v1673
        %v1710 = vadd.f32 %v1619, %v1697
        %v1711 = vadd.f32 %v1620, %v1675
        %v1712 = vadd.f32 %v1621, %v1699
        %v1713 = vmax.f32 %v1701, %v1702
        %v1714 = vmax.f32 %v1703, %v1704
        %v1715 = vmax.f32 %v1705, %v1706
        %v1716 = vmax.f32 %v1707, %v1708
        %v1717 = vmax.f32 %v1709, %v1710
        %v1718 = vmax.f32 %v1711, %v1712
        %1719 = vmatpush.bf16.msra.mxu0 0
        %1720 = vmatpush.bf16.msra.mxu0 0
        %1721 = vmatpush.bf16.msra.mxu0 0
        %1722 = vmatpush.bf16.msra.mxu0 0
        %1723 = vmatpush.bf16.msra.mxu0 0
        %1724 = vmatpush.bf16.msra.mxu0 0
        %1725 = vmatpush.bf16.msra.mxu0 %v550
        %1726 = vmatpush.bf16.msra.mxu0 %v532
        %1727 = vmatmul.bf16.gmra.mxu0 %v985
        %v1728 = vpop.f32.mrf.mxu0
        %v1729 = vadd.f32 0.0, %v1728
        %v1730 = vpop.f32.mrf.mxu0
        %v1731 = vadd.f32 0.0, %v1730
        %1732 = vmatmul.bf16.gmra.mxu0 %v988
        %v1733 = vpop.f32.mrf.mxu0
        %v1734 = vadd.f32 0.0, %v1733
        %v1735 = vpop.f32.mrf.mxu0
        %v1736 = vadd.f32 0.0, %v1735
        %1737 = vmatmul.bf16.gmra.mxu0 %v991
        %v1738 = vpop.f32.mrf.mxu0
        %v1739 = vadd.f32 0.0, %v1738
        %v1740 = vpop.f32.mrf.mxu0
        %v1741 = vadd.f32 0.0, %v1740
        %1742 = vdwg.mxu0
        %1743 = vmatpush.bf16.msra.mxu0 0
        %1744 = vmatpush.bf16.msra.mxu0 0
        %1745 = vmatpush.bf16.msra.mxu0 0
        %1746 = vmatpush.bf16.msra.mxu0 0
        %1747 = vmatpush.bf16.msra.mxu0 0
        %1748 = vmatpush.bf16.msra.mxu0 0
        %1749 = vmatpush.bf16.msra.mxu0 %v553
        %1750 = vmatpush.bf16.msra.mxu0 %v533
        %1751 = vmatmul.bf16.gmra.mxu0 %v985
        %v1752 = vpop.f32.mrf.mxu0
        %v1753 = vadd.f32 0.0, %v1752
        %v1754 = vpop.f32.mrf.mxu0
        %v1755 = vadd.f32 0.0, %v1754
        %1756 = vmatmul.bf16.gmra.mxu0 %v988
        %v1757 = vpop.f32.mrf.mxu0
        %v1758 = vadd.f32 0.0, %v1757
        %v1759 = vpop.f32.mrf.mxu0
        %v1760 = vadd.f32 0.0, %v1759
        %1761 = vmatmul.bf16.gmra.mxu0 %v991
        %v1762 = vpop.f32.mrf.mxu0
        %v1763 = vadd.f32 0.0, %v1762
        %v1764 = vpop.f32.mrf.mxu0
        %v1765 = vadd.f32 0.0, %v1764
        %1766 = vdwg.mxu0
        %1767 = vmatpush.bf16.msra.mxu0 0
        %1768 = vmatpush.bf16.msra.mxu0 0
        %1769 = vmatpush.bf16.msra.mxu0 0
        %1770 = vmatpush.bf16.msra.mxu0 0
        %1771 = vmatpush.bf16.msra.mxu0 0
        %1772 = vmatpush.bf16.msra.mxu0 0
        %1773 = vmatpush.bf16.msra.mxu0 %v646
        %1774 = vmatpush.bf16.msra.mxu0 %v630
        %1775 = vmatmul.bf16.gmra.mxu0 %v865
        %v1776 = vpop.f32.mrf.mxu0
        %v1777 = vadd.f32 %v1729, %v1776
        %v1778 = vpop.f32.mrf.mxu0
        %v1779 = vadd.f32 %v1731, %v1778
        %1780 = vmatmul.bf16.gmra.mxu0 %v868
        %v1781 = vpop.f32.mrf.mxu0
        %v1782 = vadd.f32 %v1734, %v1781
        %v1783 = vpop.f32.mrf.mxu0
        %v1784 = vadd.f32 %v1736, %v1783
        %1785 = vmatmul.bf16.gmra.mxu0 %v871
        %v1786 = vpop.f32.mrf.mxu0
        %v1787 = vadd.f32 %v1739, %v1786
        %v1788 = vpop.f32.mrf.mxu0
        %v1789 = vadd.f32 %v1741, %v1788
        %1790 = vdwg.mxu0
        %1791 = vmatpush.bf16.msra.mxu0 0
        %1792 = vmatpush.bf16.msra.mxu0 0
        %1793 = vmatpush.bf16.msra.mxu0 0
        %1794 = vmatpush.bf16.msra.mxu0 0
        %1795 = vmatpush.bf16.msra.mxu0 0
        %1796 = vmatpush.bf16.msra.mxu0 0
        %1797 = vmatpush.bf16.msra.mxu0 %v649
        %1798 = vmatpush.bf16.msra.mxu0 %v631
        %1799 = vmatmul.bf16.gmra.mxu0 %v865
        %v1800 = vpop.f32.mrf.mxu0
        %v1801 = vadd.f32 %v1753, %v1800
        %v1802 = vpop.f32.mrf.mxu0
        %v1803 = vadd.f32 %v1755, %v1802
        %1804 = vmatmul.bf16.gmra.mxu0 %v868
        %v1805 = vpop.f32.mrf.mxu0
        %v1806 = vadd.f32 %v1758, %v1805
        %v1807 = vpop.f32.mrf.mxu0
        %v1808 = vadd.f32 %v1760, %v1807
        %1809 = vmatmul.bf16.gmra.mxu0 %v871
        %v1810 = vpop.f32.mrf.mxu0
        %v1811 = vadd.f32 %v1763, %v1810
        %v1812 = vpop.f32.mrf.mxu0
        %v1813 = vadd.f32 %v1765, %v1812
        %1814 = vdwg.mxu0
        %1815 = vmatpush.bf16.msra.mxu0 0
        %1816 = vmatpush.bf16.msra.mxu0 0
        %1817 = vmatpush.bf16.msra.mxu0 0
        %1818 = vmatpush.bf16.msra.mxu0 0
        %1819 = vmatpush.bf16.msra.mxu0 0
        %1820 = vmatpush.bf16.msra.mxu0 0
        %1821 = vmatpush.bf16.msra.mxu0 %v754
        %1822 = vmatpush.bf16.msra.mxu0 %v738
        %1823 = vmatmul.bf16.gmra.mxu0 %v1304
        %v1824 = vpop.f32.mrf.mxu0
        %v1825 = vadd.f32 0.0, %v1824
        %v1826 = vpop.f32.mrf.mxu0
        %v1827 = vadd.f32 0.0, %v1826
        %1828 = vmatmul.bf16.gmra.mxu0 %v1307
        %v1829 = vpop.f32.mrf.mxu0
        %v1830 = vadd.f32 0.0, %v1829
        %v1831 = vpop.f32.mrf.mxu0
        %v1832 = vadd.f32 0.0, %v1831
        %1833 = vmatmul.bf16.gmra.mxu0 %v1310
        %v1834 = vpop.f32.mrf.mxu0
        %v1835 = vadd.f32 0.0, %v1834
        %v1836 = vpop.f32.mrf.mxu0
        %v1837 = vadd.f32 0.0, %v1836
        %1838 = vdwg.mxu0
        %1839 = vmatpush.bf16.msra.mxu0 0
        %1840 = vmatpush.bf16.msra.mxu0 0
        %1841 = vmatpush.bf16.msra.mxu0 0
        %1842 = vmatpush.bf16.msra.mxu0 0
        %1843 = vmatpush.bf16.msra.mxu0 0
        %1844 = vmatpush.bf16.msra.mxu0 0
        %1845 = vmatpush.bf16.msra.mxu0 %v757
        %1846 = vmatpush.bf16.msra.mxu0 %v739
        %1847 = vmatmul.bf16.gmra.mxu0 %v1304
        %v1848 = vpop.f32.mrf.mxu0
        %v1849 = vadd.f32 0.0, %v1848
        %v1850 = vpop.f32.mrf.mxu0
        %v1851 = vadd.f32 0.0, %v1850
        %1852 = vmatmul.bf16.gmra.mxu0 %v1307
        %v1853 = vpop.f32.mrf.mxu0
        %v1854 = vadd.f32 0.0, %v1853
        %v1855 = vpop.f32.mrf.mxu0
        %v1856 = vadd.f32 0.0, %v1855
        %1857 = vmatmul.bf16.gmra.mxu0 %v1310
        %v1858 = vpop.f32.mrf.mxu0
        %v1859 = vadd.f32 0.0, %v1858
        %v1860 = vpop.f32.mrf.mxu0
        %v1861 = vadd.f32 0.0, %v1860
        %1862 = vdwg.mxu0
        %v1863 = vadd.f32 %v1777, %v1825
        %v1864 = vadd.f32 %v1801, %v1849
        %v1865 = vadd.f32 %v1779, %v1827
        %v1866 = vadd.f32 %v1803, %v1851
        %v1867 = vadd.f32 %v1782, %v1830
        %v1868 = vadd.f32 %v1806, %v1854
        %v1869 = vadd.f32 %v1784, %v1832
        %v1870 = vadd.f32 %v1808, %v1856
        %v1871 = vadd.f32 %v1787, %v1835
        %v1872 = vadd.f32 %v1811, %v1859
        %v1873 = vadd.f32 %v1789, %v1837
        %v1874 = vadd.f32 %v1813, %v1861
        %1875 = vmatpush.bf16.msra.mxu0 0
        %1876 = vmatpush.bf16.msra.mxu0 0
        %1877 = vmatpush.bf16.msra.mxu0 0
        %1878 = vmatpush.bf16.msra.mxu0 0
        %1879 = vmatpush.bf16.msra.mxu0 0
        %1880 = vmatpush.bf16.msra.mxu0 0
        %1881 = vmatpush.bf16.msra.mxu0 %v874
        %1882 = vmatpush.bf16.msra.mxu0 %v858
        %1883 = vmatmul.bf16.gmra.mxu0 %v1645
        %v1884 = vpop.f32.mrf.mxu0
        %v1885 = vadd.f32 0.0, %v1884
        %v1886 = vpop.f32.mrf.mxu0
        %v1887 = vadd.f32 0.0, %v1886
        %1888 = vmatmul.bf16.gmra.mxu0 %v1648
        %v1889 = vpop.f32.mrf.mxu0
        %v1890 = vadd.f32 0.0, %v1889
        %v1891 = vpop.f32.mrf.mxu0
        %v1892 = vadd.f32 0.0, %v1891
        %1893 = vmatmul.bf16.gmra.mxu0 %v1651
        %v1894 = vpop.f32.mrf.mxu0
        %v1895 = vadd.f32 0.0, %v1894
        %v1896 = vpop.f32.mrf.mxu0
        %v1897 = vadd.f32 0.0, %v1896
        %1898 = vdwg.mxu0
        %1899 = vmatpush.bf16.msra.mxu0 0
        %1900 = vmatpush.bf16.msra.mxu0 0
        %1901 = vmatpush.bf16.msra.mxu0 0
        %1902 = vmatpush.bf16.msra.mxu0 0
        %1903 = vmatpush.bf16.msra.mxu0 0
        %1904 = vmatpush.bf16.msra.mxu0 0
        %1905 = vmatpush.bf16.msra.mxu0 %v877
        %1906 = vmatpush.bf16.msra.mxu0 %v859
        %1907 = vmatmul.bf16.gmra.mxu0 %v1645
        %v1908 = vpop.f32.mrf.mxu0
        %v1909 = vadd.f32 0.0, %v1908
        %v1910 = vpop.f32.mrf.mxu0
        %v1911 = vadd.f32 0.0, %v1910
        %1912 = vmatmul.bf16.gmra.mxu0 %v1648
        %v1913 = vpop.f32.mrf.mxu0
        %v1914 = vadd.f32 0.0, %v1913
        %v1915 = vpop.f32.mrf.mxu0
        %v1916 = vadd.f32 0.0, %v1915
        %1917 = vmatmul.bf16.gmra.mxu0 %v1651
        %v1918 = vpop.f32.mrf.mxu0
        %v1919 = vadd.f32 0.0, %v1918
        %v1920 = vpop.f32.mrf.mxu0
        %v1921 = vadd.f32 0.0, %v1920
        %1922 = vdwg.mxu0
        %v1923 = vadd.f32 %v1863, %v1885
        %v1924 = vadd.f32 %v1864, %v1909
        %v1925 = vadd.f32 %v1865, %v1887
        %v1926 = vadd.f32 %v1866, %v1911
        %v1927 = vadd.f32 %v1867, %v1890
        %v1928 = vadd.f32 %v1868, %v1914
        %v1929 = vadd.f32 %v1869, %v1892
        %v1930 = vadd.f32 %v1870, %v1916
        %v1931 = vadd.f32 %v1871, %v1895
        %v1932 = vadd.f32 %v1872, %v1919
        %v1933 = vadd.f32 %v1873, %v1897
        %v1934 = vadd.f32 %v1874, %v1921
        %s1935 = scalar_lea.vmem %s446, 28 [#allocation2]
        %v1936 = vld [vmem:[%s1935] sm:$0xf]
        %v1937 = vld [vmem:[%s1935 + $0x10] sm:$0xf]
        %v1938 = vld [vmem:[%s1935 + $0x20] sm:$0xf]
        %v1939 = vld [vmem:[%s1935 + $0x30] sm:$0xf]
        %v1940 = vld [vmem:[%s1935 + $0x40] sm:$0xf]
        %v1941 = vld [vmem:[%s1935 + $0x50] sm:$0xf]
        %v1948 = vunpack.c.l.b16 %v1936
        %v1949 = vunpack.c.l.b16 %v1937
        %v1950 = vunpack.c.l.b16 %v1938
        %v1951 = vunpack.c.l.b16 %v1939
        %v1952 = vunpack.c.l.b16 %v1940
        %v1953 = vunpack.c.l.b16 %v1941
        %v1954 = vpack.c.b16 %v1949, %v1948
        %v1955 = vpack.c.b16 %v1951, %v1950
        %v1956 = vpack.c.b16 %v1953, %v1952
        %v1958 = vsel %vm538, %v1954, 0
        %v1961 = vsel %vm538, %v1955, 0
        %v1964 = vsel %vm538, %v1956, 0
        %1966 = vmatpush.bf16.msra.mxu0 0
        %1967 = vmatpush.bf16.msra.mxu0 0
        %1968 = vmatpush.bf16.msra.mxu0 0
        %1969 = vmatpush.bf16.msra.mxu0 0
        %1970 = vmatpush.bf16.msra.mxu0 0
        %1971 = vmatpush.bf16.msra.mxu0 0
        %1972 = vmatpush.bf16.msra.mxu0 %v994
        %1973 = vmatpush.bf16.msra.mxu0 %v978
        %1974 = vmatmul.bf16.gmra.mxu0 %v1958
        %v1975 = vpop.f32.mrf.mxu0
        %v1976 = vadd.f32 0.0, %v1975
        %v1977 = vpop.f32.mrf.mxu0
        %v1978 = vadd.f32 0.0, %v1977
        %1979 = vmatmul.bf16.gmra.mxu0 %v1961
        %v1980 = vpop.f32.mrf.mxu0
        %v1981 = vadd.f32 0.0, %v1980
        %v1982 = vpop.f32.mrf.mxu0
        %v1983 = vadd.f32 0.0, %v1982
        %1984 = vmatmul.bf16.gmra.mxu0 %v1964
        %v1985 = vpop.f32.mrf.mxu0
        %v1986 = vadd.f32 0.0, %v1985
        %v1987 = vpop.f32.mrf.mxu0
        %v1988 = vadd.f32 0.0, %v1987
        %1989 = vdwg.mxu0
        %1990 = vmatpush.bf16.msra.mxu0 0
        %1991 = vmatpush.bf16.msra.mxu0 0
        %1992 = vmatpush.bf16.msra.mxu0 0
        %1993 = vmatpush.bf16.msra.mxu0 0
        %1994 = vmatpush.bf16.msra.mxu0 0
        %1995 = vmatpush.bf16.msra.mxu0 0
        %1996 = vmatpush.bf16.msra.mxu0 %v997
        %1997 = vmatpush.bf16.msra.mxu0 %v979
        %1998 = vmatmul.bf16.gmra.mxu0 %v1958
        %v1999 = vpop.f32.mrf.mxu0
        %v2000 = vadd.f32 0.0, %v1999
        %v2001 = vpop.f32.mrf.mxu0
        %v2002 = vadd.f32 0.0, %v2001
        %2003 = vmatmul.bf16.gmra.mxu0 %v1961
        %v2004 = vpop.f32.mrf.mxu0
        %v2005 = vadd.f32 0.0, %v2004
        %v2006 = vpop.f32.mrf.mxu0
        %v2007 = vadd.f32 0.0, %v2006
        %2008 = vmatmul.bf16.gmra.mxu0 %v1964
        %v2009 = vpop.f32.mrf.mxu0
        %v2010 = vadd.f32 0.0, %v2009
        %v2011 = vpop.f32.mrf.mxu0
        %v2012 = vadd.f32 0.0, %v2011
        %2013 = vdwg.mxu0
        %v2014 = vadd.f32 %v1923, %v1976
        %v2015 = vadd.f32 %v1924, %v2000
        %v2016 = vadd.f32 %v1925, %v1978
        %v2017 = vadd.f32 %v1926, %v2002
        %v2018 = vadd.f32 %v1927, %v1981
        %v2019 = vadd.f32 %v1928, %v2005
        %v2020 = vadd.f32 %v1929, %v1983
        %v2021 = vadd.f32 %v1930, %v2007
        %v2022 = vadd.f32 %v1931, %v1986
        %v2023 = vadd.f32 %v1932, %v2010
        %v2024 = vadd.f32 %v1933, %v1988
        %v2025 = vadd.f32 %v1934, %v2012
        %v2026 = vmax.f32 %v2014, %v2015
        %v2027 = vmax.f32 %v2016, %v2017
        %v2028 = vmax.f32 %v2018, %v2019
        %v2029 = vmax.f32 %v2020, %v2021
        %v2030 = vmax.f32 %v2022, %v2023
        %v2031 = vmax.f32 %v2024, %v2025
        %v2032 = vmax.f32 %v1713, %v2026
        %v2033 = vmax.f32 %v1714, %v2027
        %v2034 = vmax.f32 %v1715, %v2028
        %v2035 = vmax.f32 %v1716, %v2029
        %v2036 = vmax.f32 %v1717, %v2030
        %v2037 = vmax.f32 %v1718, %v2031
        %v2038 = vadd.f32 %v2032, %v1386
        %v2039 = vadd.f32 %v2033, %v1386
        %v2040 = vadd.f32 %v2034, %v1386
        %v2041 = vadd.f32 %v2035, %v1386
        %v2042 = vadd.f32 %v2036, %v1386
        %v2043 = vadd.f32 %v2037, %v1386
        %v2044 = vmax.f32 %v2038, 0.0
        %v2045 = vmax.f32 %v2039, 0.0
        %v2046 = vmax.f32 %v2040, 0.0
        %v2047 = vmax.f32 %v2041, 0.0
        %v2048 = vmax.f32 %v2042, 0.0
        %v2049 = vmax.f32 %v2043, 0.0
        %v2050 = vpack.c.bf16 %v2044, %v2044
        %v2051 = vpack.c.bf16 %v2045, %v2045
        %v2052 = vpack.c.bf16 %v2046, %v2046
        %v2053 = vpack.c.bf16 %v2047, %v2047
        %v2054 = vpack.c.bf16 %v2048, %v2048
        %v2055 = vpack.c.bf16 %v2049, %v2049
        %v2056 = vld [vmem:[%s3] sm:$0xff]
        %v2057 = vld [vmem:[%s3 + $0x8] sm:$0xff]
        %v2058 = vld [vmem:[%s3 + $0x10] sm:$0xff]
        %v2059 = vld [vmem:[%s3 + $0x18] sm:$0xff]
        %v2060 = vld [vmem:[%s3 + $0x20] sm:$0xff]
        %v2061 = vld [vmem:[%s3 + $0x28] sm:$0xff]
        %v2062 = vld [vmem:[%s3 + $0x30] sm:$0xff]
        %v2063 = vld [vmem:[%s3 + $0x38] sm:$0xff]
        %v2064 = vld [vmem:[%s3 + $0x40] sm:$0xff]
        %v2065 = vld [vmem:[%s3 + $0x48] sm:$0xff]
        %v2066 = vld [vmem:[%s3 + $0x50] sm:$0xff]
        %v2067 = vld [vmem:[%s3 + $0x58] sm:$0xff]
        %v2068 = vld [vmem:[%s3 + $0x60] sm:$0xff]
        %v2069 = vld [vmem:[%s3 + $0x68] sm:$0xff]
        %v2070 = vld [vmem:[%s3 + $0x70] sm:$0xff]
        %v2071 = vld [vmem:[%s3 + $0x78] sm:$0xff]
        %s2072 = scalar_lea.vmem %s3, 128
        %v2073 = vld [vmem:[%s2072] sm:$0xff]
        %v2074 = vld [vmem:[%s2072 + $0x8] sm:$0xff]
        %v2075 = vld [vmem:[%s2072 + $0x10] sm:$0xff]
        %v2076 = vld [vmem:[%s2072 + $0x18] sm:$0xff]
        %v2077 = vld [vmem:[%s2072 + $0x20] sm:$0xff]
        %v2078 = vld [vmem:[%s2072 + $0x28] sm:$0xff]
        %v2079 = vld [vmem:[%s2072 + $0x30] sm:$0xff]
        %v2080 = vld [vmem:[%s2072 + $0x38] sm:$0xff]
        %v2081 = vld [vmem:[%s2072 + $0x40] sm:$0xff]
        %v2082 = vld [vmem:[%s2072 + $0x48] sm:$0xff]
        %v2083 = vld [vmem:[%s2072 + $0x50] sm:$0xff]
        %v2084 = vld [vmem:[%s2072 + $0x58] sm:$0xff]
        %v2085 = vld [vmem:[%s2072 + $0x60] sm:$0xff]
        %v2086 = vld [vmem:[%s2072 + $0x68] sm:$0xff]
        %v2087 = vld [vmem:[%s2072 + $0x70] sm:$0xff]
        %v2088 = vld [vmem:[%s2072 + $0x78] sm:$0xff]
        %v2105 = vunpack.c.l.b16 %v2073
        %v2106 = vunpack.c.h.b16 %v2073
        %v2107 = vunpack.c.l.b16 %v2074
        %v2108 = vunpack.c.h.b16 %v2074
        %v2109 = vunpack.c.l.b16 %v2075
        %v2110 = vunpack.c.h.b16 %v2075
        %v2111 = vunpack.c.l.b16 %v2076
        %v2112 = vunpack.c.h.b16 %v2076
        %v2113 = vunpack.c.l.b16 %v2077
        %v2114 = vunpack.c.h.b16 %v2077
        %v2115 = vunpack.c.l.b16 %v2078
        %v2116 = vunpack.c.h.b16 %v2078
        %v2117 = vunpack.c.l.b16 %v2079
        %v2118 = vunpack.c.h.b16 %v2079
        %v2119 = vunpack.c.l.b16 %v2080
        %v2120 = vunpack.c.h.b16 %v2080
        %v2121 = vunpack.c.l.b16 %v2081
        %v2122 = vunpack.c.h.b16 %v2081
        %v2123 = vunpack.c.l.b16 %v2082
        %v2124 = vunpack.c.h.b16 %v2082
        %v2125 = vunpack.c.l.b16 %v2083
        %v2126 = vunpack.c.h.b16 %v2083
        %v2127 = vunpack.c.l.b16 %v2084
        %v2128 = vunpack.c.h.b16 %v2084
        %v2129 = vunpack.c.l.b16 %v2085
        %v2130 = vunpack.c.h.b16 %v2085
        %v2131 = vunpack.c.l.b16 %v2086
        %v2132 = vunpack.c.h.b16 %v2086
        %v2133 = vunpack.c.l.b16 %v2087
        %v2134 = vunpack.c.h.b16 %v2087
        %v2135 = vunpack.c.l.b16 %v2088
        %v2136 = vunpack.c.h.b16 %v2088
        %v2137 = vpack.c.b16 %v2107, %v2105
        %v2138 = vpack.c.b16 %v2108, %v2106
        %v2139 = vpack.c.b16 %v2111, %v2109
        %v2140 = vpack.c.b16 %v2112, %v2110
        %v2141 = vpack.c.b16 %v2115, %v2113
        %v2142 = vpack.c.b16 %v2116, %v2114
        %v2143 = vpack.c.b16 %v2119, %v2117
        %v2144 = vpack.c.b16 %v2120, %v2118
        %v2145 = vpack.c.b16 %v2123, %v2121
        %v2146 = vpack.c.b16 %v2124, %v2122
        %v2147 = vpack.c.b16 %v2127, %v2125
        %v2148 = vpack.c.b16 %v2128, %v2126
        %v2149 = vpack.c.b16 %v2131, %v2129
        %v2150 = vpack.c.b16 %v2132, %v2130
        %v2151 = vpack.c.b16 %v2135, %v2133
        %v2152 = vpack.c.b16 %v2136, %v2134
        %2169 = vmatpush.bf16.msra.mxu0 %v2151
        %2170 = vmatpush.bf16.msra.mxu0 %v2149
        %2171 = vmatpush.bf16.msra.mxu0 %v2147
        %2172 = vmatpush.bf16.msra.mxu0 %v2145
        %2173 = vmatpush.bf16.msra.mxu0 %v2143
        %2174 = vmatpush.bf16.msra.mxu0 %v2141
        %2175 = vmatpush.bf16.msra.mxu0 %v2139
        %2176 = vmatpush.bf16.msra.mxu0 %v2137
        %2177 = vmatmul.bf16.gmra.mxu0 %v2050
        %v2178 = vpop.f32.mrf.mxu0
        %v2179 = vadd.f32 0.0, %v2178
        %v2180 = vpop.f32.mrf.mxu0
        %2181 = vdwg.mxu0
        %2182 = vmatpush.bf16.msra.mxu0 %v2152
        %2183 = vmatpush.bf16.msra.mxu0 %v2150
        %2184 = vmatpush.bf16.msra.mxu0 %v2148
        %2185 = vmatpush.bf16.msra.mxu0 %v2146
        %2186 = vmatpush.bf16.msra.mxu0 %v2144
        %2187 = vmatpush.bf16.msra.mxu0 %v2142
        %2188 = vmatpush.bf16.msra.mxu0 %v2140
        %2189 = vmatpush.bf16.msra.mxu0 %v2138
        %2190 = vmatmul.bf16.gmra.mxu0 %v2050
        %v2191 = vpop.f32.mrf.mxu0
        %v2192 = vadd.f32 0.0, %v2191
        %v2193 = vpop.f32.mrf.mxu0
        %2194 = vdwg.mxu0
        %v2211 = vunpack.c.l.b16 %v2056
        %v2212 = vunpack.c.h.b16 %v2056
        %v2213 = vunpack.c.l.b16 %v2057
        %v2214 = vunpack.c.h.b16 %v2057
        %v2215 = vunpack.c.l.b16 %v2058
        %v2216 = vunpack.c.h.b16 %v2058
        %v2217 = vunpack.c.l.b16 %v2059
        %v2218 = vunpack.c.h.b16 %v2059
        %v2219 = vunpack.c.l.b16 %v2060
        %v2220 = vunpack.c.h.b16 %v2060
        %v2221 = vunpack.c.l.b16 %v2061
        %v2222 = vunpack.c.h.b16 %v2061
        %v2223 = vunpack.c.l.b16 %v2062
        %v2224 = vunpack.c.h.b16 %v2062
        %v2225 = vunpack.c.l.b16 %v2063
        %v2226 = vunpack.c.h.b16 %v2063
        %v2227 = vunpack.c.l.b16 %v2064
        %v2228 = vunpack.c.h.b16 %v2064
        %v2229 = vunpack.c.l.b16 %v2065
        %v2230 = vunpack.c.h.b16 %v2065
        %v2231 = vunpack.c.l.b16 %v2066
        %v2232 = vunpack.c.h.b16 %v2066
        %v2233 = vunpack.c.l.b16 %v2067
        %v2234 = vunpack.c.h.b16 %v2067
        %v2235 = vunpack.c.l.b16 %v2068
        %v2236 = vunpack.c.h.b16 %v2068
        %v2237 = vunpack.c.l.b16 %v2069
        %v2238 = vunpack.c.h.b16 %v2069
        %v2239 = vunpack.c.l.b16 %v2070
        %v2240 = vunpack.c.h.b16 %v2070
        %v2241 = vunpack.c.l.b16 %v2071
        %v2242 = vunpack.c.h.b16 %v2071
        %v2243 = vpack.c.b16 %v2213, %v2211
        %v2244 = vpack.c.b16 %v2214, %v2212
        %v2245 = vpack.c.b16 %v2217, %v2215
        %v2246 = vpack.c.b16 %v2218, %v2216
        %v2247 = vpack.c.b16 %v2221, %v2219
        %v2248 = vpack.c.b16 %v2222, %v2220
        %v2249 = vpack.c.b16 %v2225, %v2223
        %v2250 = vpack.c.b16 %v2226, %v2224
        %v2251 = vpack.c.b16 %v2229, %v2227
        %v2252 = vpack.c.b16 %v2230, %v2228
        %v2253 = vpack.c.b16 %v2233, %v2231
        %v2254 = vpack.c.b16 %v2234, %v2232
        %v2255 = vpack.c.b16 %v2237, %v2235
        %v2256 = vpack.c.b16 %v2238, %v2236
        %v2257 = vpack.c.b16 %v2241, %v2239
        %v2258 = vpack.c.b16 %v2242, %v2240
        %2275 = vmatpush.bf16.msra.mxu0 %v2257
        %2276 = vmatpush.bf16.msra.mxu0 %v2255
        %2277 = vmatpush.bf16.msra.mxu0 %v2253
        %2278 = vmatpush.bf16.msra.mxu0 %v2251
        %2279 = vmatpush.bf16.msra.mxu0 %v2249
        %2280 = vmatpush.bf16.msra.mxu0 %v2247
        %2281 = vmatpush.bf16.msra.mxu0 %v2245
        %2282 = vmatpush.bf16.msra.mxu0 %v2243
        %2283 = vmatmul.bf16.gmra.mxu0 %v1400
        %v2284 = vpop.f32.mrf.mxu0
        %v2285 = vadd.f32 %v2179, %v2284
        %v2286 = vpop.f32.mrf.mxu0
        %2287 = vdwg.mxu0
        %2288 = vmatpush.bf16.msra.mxu0 %v2258
        %2289 = vmatpush.bf16.msra.mxu0 %v2256
        %2290 = vmatpush.bf16.msra.mxu0 %v2254
        %2291 = vmatpush.bf16.msra.mxu0 %v2252
        %2292 = vmatpush.bf16.msra.mxu0 %v2250
        %2293 = vmatpush.bf16.msra.mxu0 %v2248
        %2294 = vmatpush.bf16.msra.mxu0 %v2246
        %2295 = vmatpush.bf16.msra.mxu0 %v2244
        %2296 = vmatmul.bf16.gmra.mxu0 %v1400
        %v2297 = vpop.f32.mrf.mxu0
        %v2298 = vadd.f32 %v2192, %v2297
        %v2299 = vpop.f32.mrf.mxu0
        %2300 = vdwg.mxu0
        %s2301 = scalar_lea.vmem %s3, 256
        %v2302 = vld [vmem:[%s2301] sm:$0xff]
        %v2303 = vld [vmem:[%s2301 + $0x8] sm:$0xff]
        %v2304 = vld [vmem:[%s2301 + $0x10] sm:$0xff]
        %v2305 = vld [vmem:[%s2301 + $0x18] sm:$0xff]
        %v2306 = vld [vmem:[%s2301 + $0x20] sm:$0xff]
        %v2307 = vld [vmem:[%s2301 + $0x28] sm:$0xff]
        %v2308 = vld [vmem:[%s2301 + $0x30] sm:$0xff]
        %v2309 = vld [vmem:[%s2301 + $0x38] sm:$0xff]
        %v2310 = vld [vmem:[%s2301 + $0x40] sm:$0xff]
        %v2311 = vld [vmem:[%s2301 + $0x48] sm:$0xff]
        %v2312 = vld [vmem:[%s2301 + $0x50] sm:$0xff]
        %v2313 = vld [vmem:[%s2301 + $0x58] sm:$0xff]
        %v2314 = vld [vmem:[%s2301 + $0x60] sm:$0xff]
        %v2315 = vld [vmem:[%s2301 + $0x68] sm:$0xff]
        %v2316 = vld [vmem:[%s2301 + $0x70] sm:$0xff]
        %v2317 = vld [vmem:[%s2301 + $0x78] sm:$0xff]
        %v2334 = vunpack.c.l.b16 %v2302
        %v2335 = vunpack.c.h.b16 %v2302
        %v2336 = vunpack.c.l.b16 %v2303
        %v2337 = vunpack.c.h.b16 %v2303
        %v2338 = vunpack.c.l.b16 %v2304
        %v2339 = vunpack.c.h.b16 %v2304
        %v2340 = vunpack.c.l.b16 %v2305
        %v2341 = vunpack.c.h.b16 %v2305
        %v2342 = vunpack.c.l.b16 %v2306
        %v2343 = vunpack.c.h.b16 %v2306
        %v2344 = vunpack.c.l.b16 %v2307
        %v2345 = vunpack.c.h.b16 %v2307
        %v2346 = vunpack.c.l.b16 %v2308
        %v2347 = vunpack.c.h.b16 %v2308
        %v2348 = vunpack.c.l.b16 %v2309
        %v2349 = vunpack.c.h.b16 %v2309
        %v2350 = vunpack.c.l.b16 %v2310
        %v2351 = vunpack.c.h.b16 %v2310
        %v2352 = vunpack.c.l.b16 %v2311
        %v2353 = vunpack.c.h.b16 %v2311
        %v2354 = vunpack.c.l.b16 %v2312
        %v2355 = vunpack.c.h.b16 %v2312
        %v2356 = vunpack.c.l.b16 %v2313
        %v2357 = vunpack.c.h.b16 %v2313
        %v2358 = vunpack.c.l.b16 %v2314
        %v2359 = vunpack.c.h.b16 %v2314
        %v2360 = vunpack.c.l.b16 %v2315
        %v2361 = vunpack.c.h.b16 %v2315
        %v2362 = vunpack.c.l.b16 %v2316
        %v2363 = vunpack.c.h.b16 %v2316
        %v2364 = vunpack.c.l.b16 %v2317
        %v2365 = vunpack.c.h.b16 %v2317
        %v2366 = vpack.c.b16 %v2336, %v2334
        %v2367 = vpack.c.b16 %v2337, %v2335
        %v2368 = vpack.c.b16 %v2340, %v2338
        %v2369 = vpack.c.b16 %v2341, %v2339
        %v2370 = vpack.c.b16 %v2344, %v2342
        %v2371 = vpack.c.b16 %v2345, %v2343
        %v2372 = vpack.c.b16 %v2348, %v2346
        %v2373 = vpack.c.b16 %v2349, %v2347
        %v2374 = vpack.c.b16 %v2352, %v2350
        %v2375 = vpack.c.b16 %v2353, %v2351
        %v2376 = vpack.c.b16 %v2356, %v2354
        %v2377 = vpack.c.b16 %v2357, %v2355
        %v2378 = vpack.c.b16 %v2360, %v2358
        %v2379 = vpack.c.b16 %v2361, %v2359
        %v2380 = vpack.c.b16 %v2364, %v2362
        %v2381 = vpack.c.b16 %v2365, %v2363
        %2398 = vmatpush.bf16.msra.mxu0 %v2380
        %2399 = vmatpush.bf16.msra.mxu0 %v2378
        %2400 = vmatpush.bf16.msra.mxu0 %v2376
        %2401 = vmatpush.bf16.msra.mxu0 %v2374
        %2402 = vmatpush.bf16.msra.mxu0 %v2372
        %2403 = vmatpush.bf16.msra.mxu0 %v2370
        %2404 = vmatpush.bf16.msra.mxu0 %v2368
        %2405 = vmatpush.bf16.msra.mxu0 %v2366
        %2406 = vmatmul.bf16.gmra.mxu0 %v1401
        %v2407 = vpop.f32.mrf.mxu0
        %v2408 = vadd.f32 0.0, %v2407
        %v2409 = vpop.f32.mrf.mxu0
        %2410 = vdwg.mxu0
        %2411 = vmatpush.bf16.msra.mxu0 %v2381
        %2412 = vmatpush.bf16.msra.mxu0 %v2379
        %2413 = vmatpush.bf16.msra.mxu0 %v2377
        %2414 = vmatpush.bf16.msra.mxu0 %v2375
        %2415 = vmatpush.bf16.msra.mxu0 %v2373
        %2416 = vmatpush.bf16.msra.mxu0 %v2371
        %2417 = vmatpush.bf16.msra.mxu0 %v2369
        %2418 = vmatpush.bf16.msra.mxu0 %v2367
        %2419 = vmatmul.bf16.gmra.mxu0 %v1401
        %v2420 = vpop.f32.mrf.mxu0
        %v2421 = vadd.f32 0.0, %v2420
        %v2422 = vpop.f32.mrf.mxu0
        %2423 = vdwg.mxu0
        %v2424 = vadd.f32 %v2285, %v2408
        %v2425 = vadd.f32 %v2298, %v2421
        %s2426 = scalar_lea.vmem %s3, 384
        %v2427 = vld [vmem:[%s2426] sm:$0xff]
        %v2428 = vld [vmem:[%s2426 + $0x8] sm:$0xff]
        %v2429 = vld [vmem:[%s2426 + $0x10] sm:$0xff]
        %v2430 = vld [vmem:[%s2426 + $0x18] sm:$0xff]
        %v2431 = vld [vmem:[%s2426 + $0x20] sm:$0xff]
        %v2432 = vld [vmem:[%s2426 + $0x28] sm:$0xff]
        %v2433 = vld [vmem:[%s2426 + $0x30] sm:$0xff]
        %v2434 = vld [vmem:[%s2426 + $0x38] sm:$0xff]
        %v2435 = vld [vmem:[%s2426 + $0x40] sm:$0xff]
        %v2436 = vld [vmem:[%s2426 + $0x48] sm:$0xff]
        %v2437 = vld [vmem:[%s2426 + $0x50] sm:$0xff]
        %v2438 = vld [vmem:[%s2426 + $0x58] sm:$0xff]
        %v2439 = vld [vmem:[%s2426 + $0x60] sm:$0xff]
        %v2440 = vld [vmem:[%s2426 + $0x68] sm:$0xff]
        %v2441 = vld [vmem:[%s2426 + $0x70] sm:$0xff]
        %v2442 = vld [vmem:[%s2426 + $0x78] sm:$0xff]
        %v2459 = vunpack.c.l.b16 %v2427
        %v2460 = vunpack.c.h.b16 %v2427
        %v2461 = vunpack.c.l.b16 %v2428
        %v2462 = vunpack.c.h.b16 %v2428
        %v2463 = vunpack.c.l.b16 %v2429
        %v2464 = vunpack.c.h.b16 %v2429
        %v2465 = vunpack.c.l.b16 %v2430
        %v2466 = vunpack.c.h.b16 %v2430
        %v2467 = vunpack.c.l.b16 %v2431
        %v2468 = vunpack.c.h.b16 %v2431
        %v2469 = vunpack.c.l.b16 %v2432
        %v2470 = vunpack.c.h.b16 %v2432
        %v2471 = vunpack.c.l.b16 %v2433
        %v2472 = vunpack.c.h.b16 %v2433
        %v2473 = vunpack.c.l.b16 %v2434
        %v2474 = vunpack.c.h.b16 %v2434
        %v2475 = vunpack.c.l.b16 %v2435
        %v2476 = vunpack.c.h.b16 %v2435
        %v2477 = vunpack.c.l.b16 %v2436
        %v2478 = vunpack.c.h.b16 %v2436
        %v2479 = vunpack.c.l.b16 %v2437
        %v2480 = vunpack.c.h.b16 %v2437
        %v2481 = vunpack.c.l.b16 %v2438
        %v2482 = vunpack.c.h.b16 %v2438
        %v2483 = vunpack.c.l.b16 %v2439
        %v2484 = vunpack.c.h.b16 %v2439
        %v2485 = vunpack.c.l.b16 %v2440
        %v2486 = vunpack.c.h.b16 %v2440
        %v2487 = vunpack.c.l.b16 %v2441
        %v2488 = vunpack.c.h.b16 %v2441
        %v2489 = vunpack.c.l.b16 %v2442
        %v2490 = vunpack.c.h.b16 %v2442
        %v2491 = vpack.c.b16 %v2461, %v2459
        %v2492 = vpack.c.b16 %v2462, %v2460
        %v2493 = vpack.c.b16 %v2465, %v2463
        %v2494 = vpack.c.b16 %v2466, %v2464
        %v2495 = vpack.c.b16 %v2469, %v2467
        %v2496 = vpack.c.b16 %v2470, %v2468
        %v2497 = vpack.c.b16 %v2473, %v2471
        %v2498 = vpack.c.b16 %v2474, %v2472
        %v2499 = vpack.c.b16 %v2477, %v2475
        %v2500 = vpack.c.b16 %v2478, %v2476
        %v2501 = vpack.c.b16 %v2481, %v2479
        %v2502 = vpack.c.b16 %v2482, %v2480
        %v2503 = vpack.c.b16 %v2485, %v2483
        %v2504 = vpack.c.b16 %v2486, %v2484
        %v2505 = vpack.c.b16 %v2489, %v2487
        %v2506 = vpack.c.b16 %v2490, %v2488
        %2523 = vmatpush.bf16.msra.mxu0 %v2505
        %2524 = vmatpush.bf16.msra.mxu0 %v2503
        %2525 = vmatpush.bf16.msra.mxu0 %v2501
        %2526 = vmatpush.bf16.msra.mxu0 %v2499
        %2527 = vmatpush.bf16.msra.mxu0 %v2497
        %2528 = vmatpush.bf16.msra.mxu0 %v2495
        %2529 = vmatpush.bf16.msra.mxu0 %v2493
        %2530 = vmatpush.bf16.msra.mxu0 %v2491
        %2531 = vmatmul.bf16.gmra.mxu0 %v2051
        %v2532 = vpop.f32.mrf.mxu0
        %v2533 = vadd.f32 0.0, %v2532
        %v2534 = vpop.f32.mrf.mxu0
        %2535 = vdwg.mxu0
        %2536 = vmatpush.bf16.msra.mxu0 %v2506
        %2537 = vmatpush.bf16.msra.mxu0 %v2504
        %2538 = vmatpush.bf16.msra.mxu0 %v2502
        %2539 = vmatpush.bf16.msra.mxu0 %v2500
        %2540 = vmatpush.bf16.msra.mxu0 %v2498
        %2541 = vmatpush.bf16.msra.mxu0 %v2496
        %2542 = vmatpush.bf16.msra.mxu0 %v2494
        %2543 = vmatpush.bf16.msra.mxu0 %v2492
        %2544 = vmatmul.bf16.gmra.mxu0 %v2051
        %v2545 = vpop.f32.mrf.mxu0
        %v2546 = vadd.f32 0.0, %v2545
        %v2547 = vpop.f32.mrf.mxu0
        %2548 = vdwg.mxu0
        %v2549 = vadd.f32 %v2424, %v2533
        %v2550 = vadd.f32 %v2425, %v2546
        %s2551 = scalar_lea.vmem %s3, 512
        %v2552 = vld [vmem:[%s2551] sm:$0xff]
        %v2553 = vld [vmem:[%s2551 + $0x8] sm:$0xff]
        %v2554 = vld [vmem:[%s2551 + $0x10] sm:$0xff]
        %v2555 = vld [vmem:[%s2551 + $0x18] sm:$0xff]
        %v2556 = vld [vmem:[%s2551 + $0x20] sm:$0xff]
        %v2557 = vld [vmem:[%s2551 + $0x28] sm:$0xff]
        %v2558 = vld [vmem:[%s2551 + $0x30] sm:$0xff]
        %v2559 = vld [vmem:[%s2551 + $0x38] sm:$0xff]
        %v2560 = vld [vmem:[%s2551 + $0x40] sm:$0xff]
        %v2561 = vld [vmem:[%s2551 + $0x48] sm:$0xff]
        %v2562 = vld [vmem:[%s2551 + $0x50] sm:$0xff]
        %v2563 = vld [vmem:[%s2551 + $0x58] sm:$0xff]
        %v2564 = vld [vmem:[%s2551 + $0x60] sm:$0xff]
        %v2565 = vld [vmem:[%s2551 + $0x68] sm:$0xff]
        %v2566 = vld [vmem:[%s2551 + $0x70] sm:$0xff]
        %v2567 = vld [vmem:[%s2551 + $0x78] sm:$0xff]
        %v2584 = vunpack.c.l.b16 %v2552
        %v2585 = vunpack.c.h.b16 %v2552
        %v2586 = vunpack.c.l.b16 %v2553
        %v2587 = vunpack.c.h.b16 %v2553
        %v2588 = vunpack.c.l.b16 %v2554
        %v2589 = vunpack.c.h.b16 %v2554
        %v2590 = vunpack.c.l.b16 %v2555
        %v2591 = vunpack.c.h.b16 %v2555
        %v2592 = vunpack.c.l.b16 %v2556
        %v2593 = vunpack.c.h.b16 %v2556
        %v2594 = vunpack.c.l.b16 %v2557
        %v2595 = vunpack.c.h.b16 %v2557
        %v2596 = vunpack.c.l.b16 %v2558
        %v2597 = vunpack.c.h.b16 %v2558
        %v2598 = vunpack.c.l.b16 %v2559
        %v2599 = vunpack.c.h.b16 %v2559
        %v2600 = vunpack.c.l.b16 %v2560
        %v2601 = vunpack.c.h.b16 %v2560
        %v2602 = vunpack.c.l.b16 %v2561
        %v2603 = vunpack.c.h.b16 %v2561
        %v2604 = vunpack.c.l.b16 %v2562
        %v2605 = vunpack.c.h.b16 %v2562
        %v2606 = vunpack.c.l.b16 %v2563
        %v2607 = vunpack.c.h.b16 %v2563
        %v2608 = vunpack.c.l.b16 %v2564
        %v2609 = vunpack.c.h.b16 %v2564
        %v2610 = vunpack.c.l.b16 %v2565
        %v2611 = vunpack.c.h.b16 %v2565
        %v2612 = vunpack.c.l.b16 %v2566
        %v2613 = vunpack.c.h.b16 %v2566
        %v2614 = vunpack.c.l.b16 %v2567
        %v2615 = vunpack.c.h.b16 %v2567
        %v2616 = vpack.c.b16 %v2586, %v2584
        %v2617 = vpack.c.b16 %v2587, %v2585
        %v2618 = vpack.c.b16 %v2590, %v2588
        %v2619 = vpack.c.b16 %v2591, %v2589
        %v2620 = vpack.c.b16 %v2594, %v2592
        %v2621 = vpack.c.b16 %v2595, %v2593
        %v2622 = vpack.c.b16 %v2598, %v2596
        %v2623 = vpack.c.b16 %v2599, %v2597
        %v2624 = vpack.c.b16 %v2602, %v2600
        %v2625 = vpack.c.b16 %v2603, %v2601
        %v2626 = vpack.c.b16 %v2606, %v2604
        %v2627 = vpack.c.b16 %v2607, %v2605
        %v2628 = vpack.c.b16 %v2610, %v2608
        %v2629 = vpack.c.b16 %v2611, %v2609
        %v2630 = vpack.c.b16 %v2614, %v2612
        %v2631 = vpack.c.b16 %v2615, %v2613
        %2648 = vmatpush.bf16.msra.mxu0 %v2630
        %2649 = vmatpush.bf16.msra.mxu0 %v2628
        %2650 = vmatpush.bf16.msra.mxu0 %v2626
        %2651 = vmatpush.bf16.msra.mxu0 %v2624
        %2652 = vmatpush.bf16.msra.mxu0 %v2622
        %2653 = vmatpush.bf16.msra.mxu0 %v2620
        %2654 = vmatpush.bf16.msra.mxu0 %v2618
        %2655 = vmatpush.bf16.msra.mxu0 %v2616
        %2656 = vmatmul.bf16.gmra.mxu0 %v1402
        %v2657 = vpop.f32.mrf.mxu0
        %v2658 = vadd.f32 0.0, %v2657
        %v2659 = vpop.f32.mrf.mxu0
        %2660 = vdwg.mxu0
        %2661 = vmatpush.bf16.msra.mxu0 %v2631
        %2662 = vmatpush.bf16.msra.mxu0 %v2629
        %2663 = vmatpush.bf16.msra.mxu0 %v2627
        %2664 = vmatpush.bf16.msra.mxu0 %v2625
        %2665 = vmatpush.bf16.msra.mxu0 %v2623
        %2666 = vmatpush.bf16.msra.mxu0 %v2621
        %2667 = vmatpush.bf16.msra.mxu0 %v2619
        %2668 = vmatpush.bf16.msra.mxu0 %v2617
        %2669 = vmatmul.bf16.gmra.mxu0 %v1402
        %v2670 = vpop.f32.mrf.mxu0
        %v2671 = vadd.f32 0.0, %v2670
        %v2672 = vpop.f32.mrf.mxu0
        %2673 = vdwg.mxu0
        %v2674 = vadd.f32 %v2549, %v2658
        %v2675 = vadd.f32 %v2550, %v2671
        %v2676 = vmax.f32 %v2674, %v2675
        %2677 = vmatpush.bf16.msra.mxu0 %v2151
        %2678 = vmatpush.bf16.msra.mxu0 %v2149
        %2679 = vmatpush.bf16.msra.mxu0 %v2147
        %2680 = vmatpush.bf16.msra.mxu0 %v2145
        %2681 = vmatpush.bf16.msra.mxu0 %v2143
        %2682 = vmatpush.bf16.msra.mxu0 %v2141
        %2683 = vmatpush.bf16.msra.mxu0 %v2139
        %2684 = vmatpush.bf16.msra.mxu0 %v2137
        %2685 = vmatmul.bf16.gmra.mxu0 %v1401
        %v2686 = vpop.f32.mrf.mxu0
        %v2687 = vadd.f32 0.0, %v2686
        %v2688 = vpop.f32.mrf.mxu0
        %2689 = vdwg.mxu0
        %2690 = vmatpush.bf16.msra.mxu0 %v2152
        %2691 = vmatpush.bf16.msra.mxu0 %v2150
        %2692 = vmatpush.bf16.msra.mxu0 %v2148
        %2693 = vmatpush.bf16.msra.mxu0 %v2146
        %2694 = vmatpush.bf16.msra.mxu0 %v2144
        %2695 = vmatpush.bf16.msra.mxu0 %v2142
        %2696 = vmatpush.bf16.msra.mxu0 %v2140
        %2697 = vmatpush.bf16.msra.mxu0 %v2138
        %2698 = vmatmul.bf16.gmra.mxu0 %v1401
        %v2699 = vpop.f32.mrf.mxu0
        %v2700 = vadd.f32 0.0, %v2699
        %v2701 = vpop.f32.mrf.mxu0
        %2702 = vdwg.mxu0
        %2703 = vmatpush.bf16.msra.mxu0 %v2257
        %2704 = vmatpush.bf16.msra.mxu0 %v2255
        %2705 = vmatpush.bf16.msra.mxu0 %v2253
        %2706 = vmatpush.bf16.msra.mxu0 %v2251
        %2707 = vmatpush.bf16.msra.mxu0 %v2249
        %2708 = vmatpush.bf16.msra.mxu0 %v2247
        %2709 = vmatpush.bf16.msra.mxu0 %v2245
        %2710 = vmatpush.bf16.msra.mxu0 %v2243
        %2711 = vmatmul.bf16.gmra.mxu0 %v2050
        %v2712 = vpop.f32.mrf.mxu0
        %v2713 = vadd.f32 %v2687, %v2712
        %v2714 = vpop.f32.mrf.mxu0
        %2715 = vdwg.mxu0
        %2716 = vmatpush.bf16.msra.mxu0 %v2258
        %2717 = vmatpush.bf16.msra.mxu0 %v2256
        %2718 = vmatpush.bf16.msra.mxu0 %v2254
        %2719 = vmatpush.bf16.msra.mxu0 %v2252
        %2720 = vmatpush.bf16.msra.mxu0 %v2250
        %2721 = vmatpush.bf16.msra.mxu0 %v2248
        %2722 = vmatpush.bf16.msra.mxu0 %v2246
        %2723 = vmatpush.bf16.msra.mxu0 %v2244
        %2724 = vmatmul.bf16.gmra.mxu0 %v2050
        %v2725 = vpop.f32.mrf.mxu0
        %v2726 = vadd.f32 %v2700, %v2725
        %v2727 = vpop.f32.mrf.mxu0
        %2728 = vdwg.mxu0
        %2729 = vmatpush.bf16.msra.mxu0 %v2380
        %2730 = vmatpush.bf16.msra.mxu0 %v2378
        %2731 = vmatpush.bf16.msra.mxu0 %v2376
        %2732 = vmatpush.bf16.msra.mxu0 %v2374
        %2733 = vmatpush.bf16.msra.mxu0 %v2372
        %2734 = vmatpush.bf16.msra.mxu0 %v2370
        %2735 = vmatpush.bf16.msra.mxu0 %v2368
        %2736 = vmatpush.bf16.msra.mxu0 %v2366
        %2737 = vmatmul.bf16.gmra.mxu0 %v2051
        %v2738 = vpop.f32.mrf.mxu0
        %v2739 = vadd.f32 0.0, %v2738
        %v2740 = vpop.f32.mrf.mxu0
        %2741 = vdwg.mxu0
        %2742 = vmatpush.bf16.msra.mxu0 %v2381
        %2743 = vmatpush.bf16.msra.mxu0 %v2379
        %2744 = vmatpush.bf16.msra.mxu0 %v2377
        %2745 = vmatpush.bf16.msra.mxu0 %v2375
        %2746 = vmatpush.bf16.msra.mxu0 %v2373
        %2747 = vmatpush.bf16.msra.mxu0 %v2371
        %2748 = vmatpush.bf16.msra.mxu0 %v2369
        %2749 = vmatpush.bf16.msra.mxu0 %v2367
        %2750 = vmatmul.bf16.gmra.mxu0 %v2051
        %v2751 = vpop.f32.mrf.mxu0
        %v2752 = vadd.f32 0.0, %v2751
        %v2753 = vpop.f32.mrf.mxu0
        %2754 = vdwg.mxu0
        %v2755 = vadd.f32 %v2713, %v2739
        %v2756 = vadd.f32 %v2726, %v2752
        %2757 = vmatpush.bf16.msra.mxu0 %v2505
        %2758 = vmatpush.bf16.msra.mxu0 %v2503
        %2759 = vmatpush.bf16.msra.mxu0 %v2501
        %2760 = vmatpush.bf16.msra.mxu0 %v2499
        %2761 = vmatpush.bf16.msra.mxu0 %v2497
        %2762 = vmatpush.bf16.msra.mxu0 %v2495
        %2763 = vmatpush.bf16.msra.mxu0 %v2493
        %2764 = vmatpush.bf16.msra.mxu0 %v2491
        %2765 = vmatmul.bf16.gmra.mxu0 %v1402
        %v2766 = vpop.f32.mrf.mxu0
        %v2767 = vadd.f32 0.0, %v2766
        %v2768 = vpop.f32.mrf.mxu0
        %2769 = vdwg.mxu0
        %2770 = vmatpush.bf16.msra.mxu0 %v2506
        %2771 = vmatpush.bf16.msra.mxu0 %v2504
        %2772 = vmatpush.bf16.msra.mxu0 %v2502
        %2773 = vmatpush.bf16.msra.mxu0 %v2500
        %2774 = vmatpush.bf16.msra.mxu0 %v2498
        %2775 = vmatpush.bf16.msra.mxu0 %v2496
        %2776 = vmatpush.bf16.msra.mxu0 %v2494
        %2777 = vmatpush.bf16.msra.mxu0 %v2492
        %2778 = vmatmul.bf16.gmra.mxu0 %v1402
        %v2779 = vpop.f32.mrf.mxu0
        %v2780 = vadd.f32 0.0, %v2779
        %v2781 = vpop.f32.mrf.mxu0
        %2782 = vdwg.mxu0
        %v2783 = vadd.f32 %v2755, %v2767
        %v2784 = vadd.f32 %v2756, %v2780
        %2785 = vmatpush.bf16.msra.mxu0 %v2630
        %2786 = vmatpush.bf16.msra.mxu0 %v2628
        %2787 = vmatpush.bf16.msra.mxu0 %v2626
        %2788 = vmatpush.bf16.msra.mxu0 %v2624
        %2789 = vmatpush.bf16.msra.mxu0 %v2622
        %2790 = vmatpush.bf16.msra.mxu0 %v2620
        %2791 = vmatpush.bf16.msra.mxu0 %v2618
        %2792 = vmatpush.bf16.msra.mxu0 %v2616
        %2793 = vmatmul.bf16.gmra.mxu0 %v2052
        %v2794 = vpop.f32.mrf.mxu0
        %v2795 = vadd.f32 0.0, %v2794
        %v2796 = vpop.f32.mrf.mxu0
        %2797 = vdwg.mxu0
        %2798 = vmatpush.bf16.msra.mxu0 %v2631
        %2799 = vmatpush.bf16.msra.mxu0 %v2629
        %2800 = vmatpush.bf16.msra.mxu0 %v2627
        %2801 = vmatpush.bf16.msra.mxu0 %v2625
        %2802 = vmatpush.bf16.msra.mxu0 %v2623
        %2803 = vmatpush.bf16.msra.mxu0 %v2621
        %2804 = vmatpush.bf16.msra.mxu0 %v2619
        %2805 = vmatpush.bf16.msra.mxu0 %v2617
        %2806 = vmatmul.bf16.gmra.mxu0 %v2052
        %v2807 = vpop.f32.mrf.mxu0
        %v2808 = vadd.f32 0.0, %v2807
        %v2809 = vpop.f32.mrf.mxu0
        %2810 = vdwg.mxu0
        %v2811 = vadd.f32 %v2783, %v2795
        %v2812 = vadd.f32 %v2784, %v2808
        %v2813 = vmax.f32 %v2811, %v2812
        %v2814 = vmax.f32 %v2676, %v2813
        %v2815 = vld [vmem:[%s4] sm:$0x1]
        %v2817 = vperm.slane %v2815, 0
        %v2819 = vadd.f32 %v2814, %v2817
        %v2820 = vmax.f32 %v2819, 0.0
        %v2821 = vpack.c.bf16 %v2820, %v2820
        %2822 = vmatpush.bf16.msra.mxu0 %v2151
        %2823 = vmatpush.bf16.msra.mxu0 %v2149
        %2824 = vmatpush.bf16.msra.mxu0 %v2147
        %2825 = vmatpush.bf16.msra.mxu0 %v2145
        %2826 = vmatpush.bf16.msra.mxu0 %v2143
        %2827 = vmatpush.bf16.msra.mxu0 %v2141
        %2828 = vmatpush.bf16.msra.mxu0 %v2139
        %2829 = vmatpush.bf16.msra.mxu0 %v2137
        %2830 = vmatmul.bf16.gmra.mxu0 %v2051
        %v2831 = vpop.f32.mrf.mxu0
        %v2832 = vadd.f32 0.0, %v2831
        %v2833 = vpop.f32.mrf.mxu0
        %2834 = vdwg.mxu0
        %2835 = vmatpush.bf16.msra.mxu0 %v2152
        %2836 = vmatpush.bf16.msra.mxu0 %v2150
        %2837 = vmatpush.bf16.msra.mxu0 %v2148
        %2838 = vmatpush.bf16.msra.mxu0 %v2146
        %2839 = vmatpush.bf16.msra.mxu0 %v2144
        %2840 = vmatpush.bf16.msra.mxu0 %v2142
        %2841 = vmatpush.bf16.msra.mxu0 %v2140
        %2842 = vmatpush.bf16.msra.mxu0 %v2138
        %2843 = vmatmul.bf16.gmra.mxu0 %v2051
        %v2844 = vpop.f32.mrf.mxu0
        %v2845 = vadd.f32 0.0, %v2844
        %v2846 = vpop.f32.mrf.mxu0
        %2847 = vdwg.mxu0
        %2848 = vmatpush.bf16.msra.mxu0 %v2257
        %2849 = vmatpush.bf16.msra.mxu0 %v2255
        %2850 = vmatpush.bf16.msra.mxu0 %v2253
        %2851 = vmatpush.bf16.msra.mxu0 %v2251
        %2852 = vmatpush.bf16.msra.mxu0 %v2249
        %2853 = vmatpush.bf16.msra.mxu0 %v2247
        %2854 = vmatpush.bf16.msra.mxu0 %v2245
        %2855 = vmatpush.bf16.msra.mxu0 %v2243
        %2856 = vmatmul.bf16.gmra.mxu0 %v1401
        %v2857 = vpop.f32.mrf.mxu0
        %v2858 = vadd.f32 %v2832, %v2857
        %v2859 = vpop.f32.mrf.mxu0
        %2860 = vdwg.mxu0
        %2861 = vmatpush.bf16.msra.mxu0 %v2258
        %2862 = vmatpush.bf16.msra.mxu0 %v2256
        %2863 = vmatpush.bf16.msra.mxu0 %v2254
        %2864 = vmatpush.bf16.msra.mxu0 %v2252
        %2865 = vmatpush.bf16.msra.mxu0 %v2250
        %2866 = vmatpush.bf16.msra.mxu0 %v2248
        %2867 = vmatpush.bf16.msra.mxu0 %v2246
        %2868 = vmatpush.bf16.msra.mxu0 %v2244
        %2869 = vmatmul.bf16.gmra.mxu0 %v1401
        %v2870 = vpop.f32.mrf.mxu0
        %v2871 = vadd.f32 %v2845, %v2870
        %v2872 = vpop.f32.mrf.mxu0
        %2873 = vdwg.mxu0
        %2874 = vmatpush.bf16.msra.mxu0 %v2380
        %2875 = vmatpush.bf16.msra.mxu0 %v2378
        %2876 = vmatpush.bf16.msra.mxu0 %v2376
        %2877 = vmatpush.bf16.msra.mxu0 %v2374
        %2878 = vmatpush.bf16.msra.mxu0 %v2372
        %2879 = vmatpush.bf16.msra.mxu0 %v2370
        %2880 = vmatpush.bf16.msra.mxu0 %v2368
        %2881 = vmatpush.bf16.msra.mxu0 %v2366
        %2882 = vmatmul.bf16.gmra.mxu0 %v1402
        %v2883 = vpop.f32.mrf.mxu0
        %v2884 = vadd.f32 0.0, %v2883
        %v2885 = vpop.f32.mrf.mxu0
        %2886 = vdwg.mxu0
        %2887 = vmatpush.bf16.msra.mxu0 %v2381
        %2888 = vmatpush.bf16.msra.mxu0 %v2379
        %2889 = vmatpush.bf16.msra.mxu0 %v2377
        %2890 = vmatpush.bf16.msra.mxu0 %v2375
        %2891 = vmatpush.bf16.msra.mxu0 %v2373
        %2892 = vmatpush.bf16.msra.mxu0 %v2371
        %2893 = vmatpush.bf16.msra.mxu0 %v2369
        %2894 = vmatpush.bf16.msra.mxu0 %v2367
        %2895 = vmatmul.bf16.gmra.mxu0 %v1402
        %v2896 = vpop.f32.mrf.mxu0
        %v2897 = vadd.f32 0.0, %v2896
        %v2898 = vpop.f32.mrf.mxu0
        %2899 = vdwg.mxu0
        %v2900 = vadd.f32 %v2858, %v2884
        %v2901 = vadd.f32 %v2871, %v2897
        %2902 = vmatpush.bf16.msra.mxu0 %v2505
        %2903 = vmatpush.bf16.msra.mxu0 %v2503
        %2904 = vmatpush.bf16.msra.mxu0 %v2501
        %2905 = vmatpush.bf16.msra.mxu0 %v2499
        %2906 = vmatpush.bf16.msra.mxu0 %v2497
        %2907 = vmatpush.bf16.msra.mxu0 %v2495
        %2908 = vmatpush.bf16.msra.mxu0 %v2493
        %2909 = vmatpush.bf16.msra.mxu0 %v2491
        %2910 = vmatmul.bf16.gmra.mxu0 %v2052
        %v2911 = vpop.f32.mrf.mxu0
        %v2912 = vadd.f32 0.0, %v2911
        %v2913 = vpop.f32.mrf.mxu0
        %2914 = vdwg.mxu0
        %2915 = vmatpush.bf16.msra.mxu0 %v2506
        %2916 = vmatpush.bf16.msra.mxu0 %v2504
        %2917 = vmatpush.bf16.msra.mxu0 %v2502
        %2918 = vmatpush.bf16.msra.mxu0 %v2500
        %2919 = vmatpush.bf16.msra.mxu0 %v2498
        %2920 = vmatpush.bf16.msra.mxu0 %v2496
        %2921 = vmatpush.bf16.msra.mxu0 %v2494
        %2922 = vmatpush.bf16.msra.mxu0 %v2492
        %2923 = vmatmul.bf16.gmra.mxu0 %v2052
        %v2924 = vpop.f32.mrf.mxu0
        %v2925 = vadd.f32 0.0, %v2924
        %v2926 = vpop.f32.mrf.mxu0
        %2927 = vdwg.mxu0
        %v2928 = vadd.f32 %v2900, %v2912
        %v2929 = vadd.f32 %v2901, %v2925
        %2930 = vmatpush.bf16.msra.mxu0 %v2630
        %2931 = vmatpush.bf16.msra.mxu0 %v2628
        %2932 = vmatpush.bf16.msra.mxu0 %v2626
        %2933 = vmatpush.bf16.msra.mxu0 %v2624
        %2934 = vmatpush.bf16.msra.mxu0 %v2622
        %2935 = vmatpush.bf16.msra.mxu0 %v2620
        %2936 = vmatpush.bf16.msra.mxu0 %v2618
        %2937 = vmatpush.bf16.msra.mxu0 %v2616
        %2938 = vmatmul.bf16.gmra.mxu0 %v1403
        %v2939 = vpop.f32.mrf.mxu0
        %v2940 = vadd.f32 0.0, %v2939
        %v2941 = vpop.f32.mrf.mxu0
        %2942 = vdwg.mxu0
        %2943 = vmatpush.bf16.msra.mxu0 %v2631
        %2944 = vmatpush.bf16.msra.mxu0 %v2629
        %2945 = vmatpush.bf16.msra.mxu0 %v2627
        %2946 = vmatpush.bf16.msra.mxu0 %v2625
        %2947 = vmatpush.bf16.msra.mxu0 %v2623
        %2948 = vmatpush.bf16.msra.mxu0 %v2621
        %2949 = vmatpush.bf16.msra.mxu0 %v2619
        %2950 = vmatpush.bf16.msra.mxu0 %v2617
        %2951 = vmatmul.bf16.gmra.mxu0 %v1403
        %v2952 = vpop.f32.mrf.mxu0
        %v2953 = vadd.f32 0.0, %v2952
        %v2954 = vpop.f32.mrf.mxu0
        %2955 = vdwg.mxu0
        %v2956 = vadd.f32 %v2928, %v2940
        %v2957 = vadd.f32 %v2929, %v2953
        %v2958 = vmax.f32 %v2956, %v2957
        %2959 = vmatpush.bf16.msra.mxu0 %v2151
        %2960 = vmatpush.bf16.msra.mxu0 %v2149
        %2961 = vmatpush.bf16.msra.mxu0 %v2147
        %2962 = vmatpush.bf16.msra.mxu0 %v2145
        %2963 = vmatpush.bf16.msra.mxu0 %v2143
        %2964 = vmatpush.bf16.msra.mxu0 %v2141
        %2965 = vmatpush.bf16.msra.mxu0 %v2139
        %2966 = vmatpush.bf16.msra.mxu0 %v2137
        %2967 = vmatmul.bf16.gmra.mxu0 %v1402
        %v2968 = vpop.f32.mrf.mxu0
        %v2969 = vadd.f32 0.0, %v2968
        %v2970 = vpop.f32.mrf.mxu0
        %2971 = vdwg.mxu0
        %2972 = vmatpush.bf16.msra.mxu0 %v2152
        %2973 = vmatpush.bf16.msra.mxu0 %v2150
        %2974 = vmatpush.bf16.msra.mxu0 %v2148
        %2975 = vmatpush.bf16.msra.mxu0 %v2146
        %2976 = vmatpush.bf16.msra.mxu0 %v2144
        %2977 = vmatpush.bf16.msra.mxu0 %v2142
        %2978 = vmatpush.bf16.msra.mxu0 %v2140
        %2979 = vmatpush.bf16.msra.mxu0 %v2138
        %2980 = vmatmul.bf16.gmra.mxu0 %v1402
        %v2981 = vpop.f32.mrf.mxu0
        %v2982 = vadd.f32 0.0, %v2981
        %v2983 = vpop.f32.mrf.mxu0
        %2984 = vdwg.mxu0
        %2985 = vmatpush.bf16.msra.mxu0 %v2257
        %2986 = vmatpush.bf16.msra.mxu0 %v2255
        %2987 = vmatpush.bf16.msra.mxu0 %v2253
        %2988 = vmatpush.bf16.msra.mxu0 %v2251
        %2989 = vmatpush.bf16.msra.mxu0 %v2249
        %2990 = vmatpush.bf16.msra.mxu0 %v2247
        %2991 = vmatpush.bf16.msra.mxu0 %v2245
        %2992 = vmatpush.bf16.msra.mxu0 %v2243
        %2993 = vmatmul.bf16.gmra.mxu0 %v2051
        %v2994 = vpop.f32.mrf.mxu0
        %v2995 = vadd.f32 %v2969, %v2994
        %v2996 = vpop.f32.mrf.mxu0
        %2997 = vdwg.mxu0
        %2998 = vmatpush.bf16.msra.mxu0 %v2258
        %2999 = vmatpush.bf16.msra.mxu0 %v2256
        %3000 = vmatpush.bf16.msra.mxu0 %v2254
        %3001 = vmatpush.bf16.msra.mxu0 %v2252
        %3002 = vmatpush.bf16.msra.mxu0 %v2250
        %3003 = vmatpush.bf16.msra.mxu0 %v2248
        %3004 = vmatpush.bf16.msra.mxu0 %v2246
        %3005 = vmatpush.bf16.msra.mxu0 %v2244
        %3006 = vmatmul.bf16.gmra.mxu0 %v2051
        %v3007 = vpop.f32.mrf.mxu0
        %v3008 = vadd.f32 %v2982, %v3007
        %v3009 = vpop.f32.mrf.mxu0
        %3010 = vdwg.mxu0
        %3011 = vmatpush.bf16.msra.mxu0 %v2380
        %3012 = vmatpush.bf16.msra.mxu0 %v2378
        %3013 = vmatpush.bf16.msra.mxu0 %v2376
        %3014 = vmatpush.bf16.msra.mxu0 %v2374
        %3015 = vmatpush.bf16.msra.mxu0 %v2372
        %3016 = vmatpush.bf16.msra.mxu0 %v2370
        %3017 = vmatpush.bf16.msra.mxu0 %v2368
        %3018 = vmatpush.bf16.msra.mxu0 %v2366
        %3019 = vmatmul.bf16.gmra.mxu0 %v2052
        %v3020 = vpop.f32.mrf.mxu0
        %v3021 = vadd.f32 0.0, %v3020
        %v3022 = vpop.f32.mrf.mxu0
        %3023 = vdwg.mxu0
        %3024 = vmatpush.bf16.msra.mxu0 %v2381
        %3025 = vmatpush.bf16.msra.mxu0 %v2379
        %3026 = vmatpush.bf16.msra.mxu0 %v2377
        %3027 = vmatpush.bf16.msra.mxu0 %v2375
        %3028 = vmatpush.bf16.msra.mxu0 %v2373
        %3029 = vmatpush.bf16.msra.mxu0 %v2371
        %3030 = vmatpush.bf16.msra.mxu0 %v2369
        %3031 = vmatpush.bf16.msra.mxu0 %v2367
        %3032 = vmatmul.bf16.gmra.mxu0 %v2052
        %v3033 = vpop.f32.mrf.mxu0
        %v3034 = vadd.f32 0.0, %v3033
        %v3035 = vpop.f32.mrf.mxu0
        %3036 = vdwg.mxu0
        %v3037 = vadd.f32 %v2995, %v3021
        %v3038 = vadd.f32 %v3008, %v3034
        %3039 = vmatpush.bf16.msra.mxu0 %v2505
        %3040 = vmatpush.bf16.msra.mxu0 %v2503
        %3041 = vmatpush.bf16.msra.mxu0 %v2501
        %3042 = vmatpush.bf16.msra.mxu0 %v2499
        %3043 = vmatpush.bf16.msra.mxu0 %v2497
        %3044 = vmatpush.bf16.msra.mxu0 %v2495
        %3045 = vmatpush.bf16.msra.mxu0 %v2493
        %3046 = vmatpush.bf16.msra.mxu0 %v2491
        %3047 = vmatmul.bf16.gmra.mxu0 %v1403
        %v3048 = vpop.f32.mrf.mxu0
        %v3049 = vadd.f32 0.0, %v3048
        %v3050 = vpop.f32.mrf.mxu0
        %3051 = vdwg.mxu0
        %3052 = vmatpush.bf16.msra.mxu0 %v2506
        %3053 = vmatpush.bf16.msra.mxu0 %v2504
        %3054 = vmatpush.bf16.msra.mxu0 %v2502
        %3055 = vmatpush.bf16.msra.mxu0 %v2500
        %3056 = vmatpush.bf16.msra.mxu0 %v2498
        %3057 = vmatpush.bf16.msra.mxu0 %v2496
        %3058 = vmatpush.bf16.msra.mxu0 %v2494
        %3059 = vmatpush.bf16.msra.mxu0 %v2492
        %3060 = vmatmul.bf16.gmra.mxu0 %v1403
        %v3061 = vpop.f32.mrf.mxu0
        %v3062 = vadd.f32 0.0, %v3061
        %v3063 = vpop.f32.mrf.mxu0
        %3064 = vdwg.mxu0
        %v3065 = vadd.f32 %v3037, %v3049
        %v3066 = vadd.f32 %v3038, %v3062
        %3067 = vmatpush.bf16.msra.mxu0 %v2630
        %3068 = vmatpush.bf16.msra.mxu0 %v2628
        %3069 = vmatpush.bf16.msra.mxu0 %v2626
        %3070 = vmatpush.bf16.msra.mxu0 %v2624
        %3071 = vmatpush.bf16.msra.mxu0 %v2622
        %3072 = vmatpush.bf16.msra.mxu0 %v2620
        %3073 = vmatpush.bf16.msra.mxu0 %v2618
        %3074 = vmatpush.bf16.msra.mxu0 %v2616
        %3075 = vmatmul.bf16.gmra.mxu0 %v2053
        %v3076 = vpop.f32.mrf.mxu0
        %v3077 = vadd.f32 0.0, %v3076
        %v3078 = vpop.f32.mrf.mxu0
        %3079 = vdwg.mxu0
        %3080 = vmatpush.bf16.msra.mxu0 %v2631
        %3081 = vmatpush.bf16.msra.mxu0 %v2629
        %3082 = vmatpush.bf16.msra.mxu0 %v2627
        %3083 = vmatpush.bf16.msra.mxu0 %v2625
        %3084 = vmatpush.bf16.msra.mxu0 %v2623
        %3085 = vmatpush.bf16.msra.mxu0 %v2621
        %3086 = vmatpush.bf16.msra.mxu0 %v2619
        %3087 = vmatpush.bf16.msra.mxu0 %v2617
        %3088 = vmatmul.bf16.gmra.mxu0 %v2053
        %v3089 = vpop.f32.mrf.mxu0
        %v3090 = vadd.f32 0.0, %v3089
        %v3091 = vpop.f32.mrf.mxu0
        %3092 = vdwg.mxu0
        %v3093 = vadd.f32 %v3065, %v3077
        %v3094 = vadd.f32 %v3066, %v3090
        %v3095 = vmax.f32 %v3093, %v3094
        %v3096 = vmax.f32 %v2958, %v3095
        %v3097 = vadd.f32 %v3096, %v2817
        %v3098 = vmax.f32 %v3097, 0.0
        %v3099 = vpack.c.bf16 %v3098, %v3098
        %3100 = vmatpush.bf16.msra.mxu0 %v2151
        %3101 = vmatpush.bf16.msra.mxu0 %v2149
        %3102 = vmatpush.bf16.msra.mxu0 %v2147
        %3103 = vmatpush.bf16.msra.mxu0 %v2145
        %3104 = vmatpush.bf16.msra.mxu0 %v2143
        %3105 = vmatpush.bf16.msra.mxu0 %v2141
        %3106 = vmatpush.bf16.msra.mxu0 %v2139
        %3107 = vmatpush.bf16.msra.mxu0 %v2137
        %3108 = vmatmul.bf16.gmra.mxu0 %v2052
        %v3109 = vpop.f32.mrf.mxu0
        %v3110 = vadd.f32 0.0, %v3109
        %v3111 = vpop.f32.mrf.mxu0
        %3112 = vdwg.mxu0
        %3113 = vmatpush.bf16.msra.mxu0 %v2152
        %3114 = vmatpush.bf16.msra.mxu0 %v2150
        %3115 = vmatpush.bf16.msra.mxu0 %v2148
        %3116 = vmatpush.bf16.msra.mxu0 %v2146
        %3117 = vmatpush.bf16.msra.mxu0 %v2144
        %3118 = vmatpush.bf16.msra.mxu0 %v2142
        %3119 = vmatpush.bf16.msra.mxu0 %v2140
        %3120 = vmatpush.bf16.msra.mxu0 %v2138
        %3121 = vmatmul.bf16.gmra.mxu0 %v2052
        %v3122 = vpop.f32.mrf.mxu0
        %v3123 = vadd.f32 0.0, %v3122
        %v3124 = vpop.f32.mrf.mxu0
        %3125 = vdwg.mxu0
        %3126 = vmatpush.bf16.msra.mxu0 %v2257
        %3127 = vmatpush.bf16.msra.mxu0 %v2255
        %3128 = vmatpush.bf16.msra.mxu0 %v2253
        %3129 = vmatpush.bf16.msra.mxu0 %v2251
        %3130 = vmatpush.bf16.msra.mxu0 %v2249
        %3131 = vmatpush.bf16.msra.mxu0 %v2247
        %3132 = vmatpush.bf16.msra.mxu0 %v2245
        %3133 = vmatpush.bf16.msra.mxu0 %v2243
        %3134 = vmatmul.bf16.gmra.mxu0 %v1402
        %v3135 = vpop.f32.mrf.mxu0
        %v3136 = vadd.f32 %v3110, %v3135
        %v3137 = vpop.f32.mrf.mxu0
        %3138 = vdwg.mxu0
        %3139 = vmatpush.bf16.msra.mxu0 %v2258
        %3140 = vmatpush.bf16.msra.mxu0 %v2256
        %3141 = vmatpush.bf16.msra.mxu0 %v2254
        %3142 = vmatpush.bf16.msra.mxu0 %v2252
        %3143 = vmatpush.bf16.msra.mxu0 %v2250
        %3144 = vmatpush.bf16.msra.mxu0 %v2248
        %3145 = vmatpush.bf16.msra.mxu0 %v2246
        %3146 = vmatpush.bf16.msra.mxu0 %v2244
        %3147 = vmatmul.bf16.gmra.mxu0 %v1402
        %v3148 = vpop.f32.mrf.mxu0
        %v3149 = vadd.f32 %v3123, %v3148
        %v3150 = vpop.f32.mrf.mxu0
        %3151 = vdwg.mxu0
        %3152 = vmatpush.bf16.msra.mxu0 %v2380
        %3153 = vmatpush.bf16.msra.mxu0 %v2378
        %3154 = vmatpush.bf16.msra.mxu0 %v2376
        %3155 = vmatpush.bf16.msra.mxu0 %v2374
        %3156 = vmatpush.bf16.msra.mxu0 %v2372
        %3157 = vmatpush.bf16.msra.mxu0 %v2370
        %3158 = vmatpush.bf16.msra.mxu0 %v2368
        %3159 = vmatpush.bf16.msra.mxu0 %v2366
        %3160 = vmatmul.bf16.gmra.mxu0 %v1403
        %v3161 = vpop.f32.mrf.mxu0
        %v3162 = vadd.f32 0.0, %v3161
        %v3163 = vpop.f32.mrf.mxu0
        %3164 = vdwg.mxu0
        %3165 = vmatpush.bf16.msra.mxu0 %v2381
        %3166 = vmatpush.bf16.msra.mxu0 %v2379
        %3167 = vmatpush.bf16.msra.mxu0 %v2377
        %3168 = vmatpush.bf16.msra.mxu0 %v2375
        %3169 = vmatpush.bf16.msra.mxu0 %v2373
        %3170 = vmatpush.bf16.msra.mxu0 %v2371
        %3171 = vmatpush.bf16.msra.mxu0 %v2369
        %3172 = vmatpush.bf16.msra.mxu0 %v2367
        %3173 = vmatmul.bf16.gmra.mxu0 %v1403
        %v3174 = vpop.f32.mrf.mxu0
        %v3175 = vadd.f32 0.0, %v3174
        %v3176 = vpop.f32.mrf.mxu0
        %3177 = vdwg.mxu0
        %v3178 = vadd.f32 %v3136, %v3162
        %v3179 = vadd.f32 %v3149, %v3175
        %3180 = vmatpush.bf16.msra.mxu0 %v2505
        %3181 = vmatpush.bf16.msra.mxu0 %v2503
        %3182 = vmatpush.bf16.msra.mxu0 %v2501
        %3183 = vmatpush.bf16.msra.mxu0 %v2499
        %3184 = vmatpush.bf16.msra.mxu0 %v2497
        %3185 = vmatpush.bf16.msra.mxu0 %v2495
        %3186 = vmatpush.bf16.msra.mxu0 %v2493
        %3187 = vmatpush.bf16.msra.mxu0 %v2491
        %3188 = vmatmul.bf16.gmra.mxu0 %v2053
        %v3189 = vpop.f32.mrf.mxu0
        %v3190 = vadd.f32 0.0, %v3189
        %v3191 = vpop.f32.mrf.mxu0
        %3192 = vdwg.mxu0
        %3193 = vmatpush.bf16.msra.mxu0 %v2506
        %3194 = vmatpush.bf16.msra.mxu0 %v2504
        %3195 = vmatpush.bf16.msra.mxu0 %v2502
        %3196 = vmatpush.bf16.msra.mxu0 %v2500
        %3197 = vmatpush.bf16.msra.mxu0 %v2498
        %3198 = vmatpush.bf16.msra.mxu0 %v2496
        %3199 = vmatpush.bf16.msra.mxu0 %v2494
        %3200 = vmatpush.bf16.msra.mxu0 %v2492
        %3201 = vmatmul.bf16.gmra.mxu0 %v2053
        %v3202 = vpop.f32.mrf.mxu0
        %v3203 = vadd.f32 0.0, %v3202
        %v3204 = vpop.f32.mrf.mxu0
        %3205 = vdwg.mxu0
        %v3206 = vadd.f32 %v3178, %v3190
        %v3207 = vadd.f32 %v3179, %v3203
        %3208 = vmatpush.bf16.msra.mxu0 %v2630
        %3209 = vmatpush.bf16.msra.mxu0 %v2628
        %3210 = vmatpush.bf16.msra.mxu0 %v2626
        %3211 = vmatpush.bf16.msra.mxu0 %v2624
        %3212 = vmatpush.bf16.msra.mxu0 %v2622
        %3213 = vmatpush.bf16.msra.mxu0 %v2620
        %3214 = vmatpush.bf16.msra.mxu0 %v2618
        %3215 = vmatpush.bf16.msra.mxu0 %v2616
        %3216 = vmatmul.bf16.gmra.mxu0 %v1404
        %v3217 = vpop.f32.mrf.mxu0
        %v3218 = vadd.f32 0.0, %v3217
        %v3219 = vpop.f32.mrf.mxu0
        %3220 = vdwg.mxu0
        %3221 = vmatpush.bf16.msra.mxu0 %v2631
        %3222 = vmatpush.bf16.msra.mxu0 %v2629
        %3223 = vmatpush.bf16.msra.mxu0 %v2627
        %3224 = vmatpush.bf16.msra.mxu0 %v2625
        %3225 = vmatpush.bf16.msra.mxu0 %v2623
        %3226 = vmatpush.bf16.msra.mxu0 %v2621
        %3227 = vmatpush.bf16.msra.mxu0 %v2619
        %3228 = vmatpush.bf16.msra.mxu0 %v2617
        %3229 = vmatmul.bf16.gmra.mxu0 %v1404
        %v3230 = vpop.f32.mrf.mxu0
        %v3231 = vadd.f32 0.0, %v3230
        %v3232 = vpop.f32.mrf.mxu0
        %3233 = vdwg.mxu0
        %v3234 = vadd.f32 %v3206, %v3218
        %v3235 = vadd.f32 %v3207, %v3231
        %v3236 = vmax.f32 %v3234, %v3235
        %3237 = vmatpush.bf16.msra.mxu0 %v2151
        %3238 = vmatpush.bf16.msra.mxu0 %v2149
        %3239 = vmatpush.bf16.msra.mxu0 %v2147
        %3240 = vmatpush.bf16.msra.mxu0 %v2145
        %3241 = vmatpush.bf16.msra.mxu0 %v2143
        %3242 = vmatpush.bf16.msra.mxu0 %v2141
        %3243 = vmatpush.bf16.msra.mxu0 %v2139
        %3244 = vmatpush.bf16.msra.mxu0 %v2137
        %3245 = vmatmul.bf16.gmra.mxu0 %v1403
        %v3246 = vpop.f32.mrf.mxu0
        %v3247 = vadd.f32 0.0, %v3246
        %v3248 = vpop.f32.mrf.mxu0
        %3249 = vdwg.mxu0
        %3250 = vmatpush.bf16.msra.mxu0 %v2152
        %3251 = vmatpush.bf16.msra.mxu0 %v2150
        %3252 = vmatpush.bf16.msra.mxu0 %v2148
        %3253 = vmatpush.bf16.msra.mxu0 %v2146
        %3254 = vmatpush.bf16.msra.mxu0 %v2144
        %3255 = vmatpush.bf16.msra.mxu0 %v2142
        %3256 = vmatpush.bf16.msra.mxu0 %v2140
        %3257 = vmatpush.bf16.msra.mxu0 %v2138
        %3258 = vmatmul.bf16.gmra.mxu0 %v1403
        %v3259 = vpop.f32.mrf.mxu0
        %v3260 = vadd.f32 0.0, %v3259
        %v3261 = vpop.f32.mrf.mxu0
        %3262 = vdwg.mxu0
        %3263 = vmatpush.bf16.msra.mxu0 %v2257
        %3264 = vmatpush.bf16.msra.mxu0 %v2255
        %3265 = vmatpush.bf16.msra.mxu0 %v2253
        %3266 = vmatpush.bf16.msra.mxu0 %v2251
        %3267 = vmatpush.bf16.msra.mxu0 %v2249
        %3268 = vmatpush.bf16.msra.mxu0 %v2247
        %3269 = vmatpush.bf16.msra.mxu0 %v2245
        %3270 = vmatpush.bf16.msra.mxu0 %v2243
        %3271 = vmatmul.bf16.gmra.mxu0 %v2052
        %v3272 = vpop.f32.mrf.mxu0
        %v3273 = vadd.f32 %v3247, %v3272
        %v3274 = vpop.f32.mrf.mxu0
        %3275 = vdwg.mxu0
        %3276 = vmatpush.bf16.msra.mxu0 %v2258
        %3277 = vmatpush.bf16.msra.mxu0 %v2256
        %3278 = vmatpush.bf16.msra.mxu0 %v2254
        %3279 = vmatpush.bf16.msra.mxu0 %v2252
        %3280 = vmatpush.bf16.msra.mxu0 %v2250
        %3281 = vmatpush.bf16.msra.mxu0 %v2248
        %3282 = vmatpush.bf16.msra.mxu0 %v2246
        %3283 = vmatpush.bf16.msra.mxu0 %v2244
        %3284 = vmatmul.bf16.gmra.mxu0 %v2052
        %v3285 = vpop.f32.mrf.mxu0
        %v3286 = vadd.f32 %v3260, %v3285
        %v3287 = vpop.f32.mrf.mxu0
        %3288 = vdwg.mxu0
        %3289 = vmatpush.bf16.msra.mxu0 %v2380
        %3290 = vmatpush.bf16.msra.mxu0 %v2378
        %3291 = vmatpush.bf16.msra.mxu0 %v2376
        %3292 = vmatpush.bf16.msra.mxu0 %v2374
        %3293 = vmatpush.bf16.msra.mxu0 %v2372
        %3294 = vmatpush.bf16.msra.mxu0 %v2370
        %3295 = vmatpush.bf16.msra.mxu0 %v2368
        %3296 = vmatpush.bf16.msra.mxu0 %v2366
        %3297 = vmatmul.bf16.gmra.mxu0 %v2053
        %v3298 = vpop.f32.mrf.mxu0
        %v3299 = vadd.f32 0.0, %v3298
        %v3300 = vpop.f32.mrf.mxu0
        %3301 = vdwg.mxu0
        %3302 = vmatpush.bf16.msra.mxu0 %v2381
        %3303 = vmatpush.bf16.msra.mxu0 %v2379
        %3304 = vmatpush.bf16.msra.mxu0 %v2377
        %3305 = vmatpush.bf16.msra.mxu0 %v2375
        %3306 = vmatpush.bf16.msra.mxu0 %v2373
        %3307 = vmatpush.bf16.msra.mxu0 %v2371
        %3308 = vmatpush.bf16.msra.mxu0 %v2369
        %3309 = vmatpush.bf16.msra.mxu0 %v2367
        %3310 = vmatmul.bf16.gmra.mxu0 %v2053
        %v3311 = vpop.f32.mrf.mxu0
        %v3312 = vadd.f32 0.0, %v3311
        %v3313 = vpop.f32.mrf.mxu0
        %3314 = vdwg.mxu0
        %v3315 = vadd.f32 %v3273, %v3299
        %v3316 = vadd.f32 %v3286, %v3312
        %3317 = vmatpush.bf16.msra.mxu0 %v2505
        %3318 = vmatpush.bf16.msra.mxu0 %v2503
        %3319 = vmatpush.bf16.msra.mxu0 %v2501
        %3320 = vmatpush.bf16.msra.mxu0 %v2499
        %3321 = vmatpush.bf16.msra.mxu0 %v2497
        %3322 = vmatpush.bf16.msra.mxu0 %v2495
        %3323 = vmatpush.bf16.msra.mxu0 %v2493
        %3324 = vmatpush.bf16.msra.mxu0 %v2491
        %3325 = vmatmul.bf16.gmra.mxu0 %v1404
        %v3326 = vpop.f32.mrf.mxu0
        %v3327 = vadd.f32 0.0, %v3326
        %v3328 = vpop.f32.mrf.mxu0
        %3329 = vdwg.mxu0
        %3330 = vmatpush.bf16.msra.mxu0 %v2506
        %3331 = vmatpush.bf16.msra.mxu0 %v2504
        %3332 = vmatpush.bf16.msra.mxu0 %v2502
        %3333 = vmatpush.bf16.msra.mxu0 %v2500
        %3334 = vmatpush.bf16.msra.mxu0 %v2498
        %3335 = vmatpush.bf16.msra.mxu0 %v2496
        %3336 = vmatpush.bf16.msra.mxu0 %v2494
        %3337 = vmatpush.bf16.msra.mxu0 %v2492
        %3338 = vmatmul.bf16.gmra.mxu0 %v1404
        %v3339 = vpop.f32.mrf.mxu0
        %v3340 = vadd.f32 0.0, %v3339
        %v3341 = vpop.f32.mrf.mxu0
        %3342 = vdwg.mxu0
        %v3343 = vadd.f32 %v3315, %v3327
        %v3344 = vadd.f32 %v3316, %v3340
        %3345 = vmatpush.bf16.msra.mxu0 %v2630
        %3346 = vmatpush.bf16.msra.mxu0 %v2628
        %3347 = vmatpush.bf16.msra.mxu0 %v2626
        %3348 = vmatpush.bf16.msra.mxu0 %v2624
        %3349 = vmatpush.bf16.msra.mxu0 %v2622
        %3350 = vmatpush.bf16.msra.mxu0 %v2620
        %3351 = vmatpush.bf16.msra.mxu0 %v2618
        %3352 = vmatpush.bf16.msra.mxu0 %v2616
        %3353 = vmatmul.bf16.gmra.mxu0 %v2054
        %v3354 = vpop.f32.mrf.mxu0
        %v3355 = vadd.f32 0.0, %v3354
        %v3356 = vpop.f32.mrf.mxu0
        %3357 = vdwg.mxu0
        %3358 = vmatpush.bf16.msra.mxu0 %v2631
        %3359 = vmatpush.bf16.msra.mxu0 %v2629
        %3360 = vmatpush.bf16.msra.mxu0 %v2627
        %3361 = vmatpush.bf16.msra.mxu0 %v2625
        %3362 = vmatpush.bf16.msra.mxu0 %v2623
        %3363 = vmatpush.bf16.msra.mxu0 %v2621
        %3364 = vmatpush.bf16.msra.mxu0 %v2619
        %3365 = vmatpush.bf16.msra.mxu0 %v2617
        %3366 = vmatmul.bf16.gmra.mxu0 %v2054
        %v3367 = vpop.f32.mrf.mxu0
        %v3368 = vadd.f32 0.0, %v3367
        %v3369 = vpop.f32.mrf.mxu0
        %3370 = vdwg.mxu0
        %v3371 = vadd.f32 %v3343, %v3355
        %v3372 = vadd.f32 %v3344, %v3368
        %v3373 = vmax.f32 %v3371, %v3372
        %v3374 = vmax.f32 %v3236, %v3373
        %v3375 = vadd.f32 %v3374, %v2817
        %v3376 = vmax.f32 %v3375, 0.0
        %v3377 = vpack.c.bf16 %v3376, %v3376
        %3378 = vmatpush.bf16.msra.mxu0 %v2151
        %3379 = vmatpush.bf16.msra.mxu0 %v2149
        %3380 = vmatpush.bf16.msra.mxu0 %v2147
        %3381 = vmatpush.bf16.msra.mxu0 %v2145
        %3382 = vmatpush.bf16.msra.mxu0 %v2143
        %3383 = vmatpush.bf16.msra.mxu0 %v2141
        %3384 = vmatpush.bf16.msra.mxu0 %v2139
        %3385 = vmatpush.bf16.msra.mxu0 %v2137
        %3386 = vmatmul.bf16.gmra.mxu0 %v2053
        %v3387 = vpop.f32.mrf.mxu0
        %v3388 = vadd.f32 0.0, %v3387
        %v3389 = vpop.f32.mrf.mxu0
        %3390 = vdwg.mxu0
        %3391 = vmatpush.bf16.msra.mxu0 %v2152
        %3392 = vmatpush.bf16.msra.mxu0 %v2150
        %3393 = vmatpush.bf16.msra.mxu0 %v2148
        %3394 = vmatpush.bf16.msra.mxu0 %v2146
        %3395 = vmatpush.bf16.msra.mxu0 %v2144
        %3396 = vmatpush.bf16.msra.mxu0 %v2142
        %3397 = vmatpush.bf16.msra.mxu0 %v2140
        %3398 = vmatpush.bf16.msra.mxu0 %v2138
        %3399 = vmatmul.bf16.gmra.mxu0 %v2053
        %v3400 = vpop.f32.mrf.mxu0
        %v3401 = vadd.f32 0.0, %v3400
        %v3402 = vpop.f32.mrf.mxu0
        %3403 = vdwg.mxu0
        %3404 = vmatpush.bf16.msra.mxu0 %v2257
        %3405 = vmatpush.bf16.msra.mxu0 %v2255
        %3406 = vmatpush.bf16.msra.mxu0 %v2253
        %3407 = vmatpush.bf16.msra.mxu0 %v2251
        %3408 = vmatpush.bf16.msra.mxu0 %v2249
        %3409 = vmatpush.bf16.msra.mxu0 %v2247
        %3410 = vmatpush.bf16.msra.mxu0 %v2245
        %3411 = vmatpush.bf16.msra.mxu0 %v2243
        %3412 = vmatmul.bf16.gmra.mxu0 %v1403
        %v3413 = vpop.f32.mrf.mxu0
        %v3414 = vadd.f32 %v3388, %v3413
        %v3415 = vpop.f32.mrf.mxu0
        %3416 = vdwg.mxu0
        %3417 = vmatpush.bf16.msra.mxu0 %v2258
        %3418 = vmatpush.bf16.msra.mxu0 %v2256
        %3419 = vmatpush.bf16.msra.mxu0 %v2254
        %3420 = vmatpush.bf16.msra.mxu0 %v2252
        %3421 = vmatpush.bf16.msra.mxu0 %v2250
        %3422 = vmatpush.bf16.msra.mxu0 %v2248
        %3423 = vmatpush.bf16.msra.mxu0 %v2246
        %3424 = vmatpush.bf16.msra.mxu0 %v2244
        %3425 = vmatmul.bf16.gmra.mxu0 %v1403
        %v3426 = vpop.f32.mrf.mxu0
        %v3427 = vadd.f32 %v3401, %v3426
        %v3428 = vpop.f32.mrf.mxu0
        %3429 = vdwg.mxu0
        %3430 = vmatpush.bf16.msra.mxu0 %v2380
        %3431 = vmatpush.bf16.msra.mxu0 %v2378
        %3432 = vmatpush.bf16.msra.mxu0 %v2376
        %3433 = vmatpush.bf16.msra.mxu0 %v2374
        %3434 = vmatpush.bf16.msra.mxu0 %v2372
        %3435 = vmatpush.bf16.msra.mxu0 %v2370
        %3436 = vmatpush.bf16.msra.mxu0 %v2368
        %3437 = vmatpush.bf16.msra.mxu0 %v2366
        %3438 = vmatmul.bf16.gmra.mxu0 %v1404
        %v3439 = vpop.f32.mrf.mxu0
        %v3440 = vadd.f32 0.0, %v3439
        %v3441 = vpop.f32.mrf.mxu0
        %3442 = vdwg.mxu0
        %3443 = vmatpush.bf16.msra.mxu0 %v2381
        %3444 = vmatpush.bf16.msra.mxu0 %v2379
        %3445 = vmatpush.bf16.msra.mxu0 %v2377
        %3446 = vmatpush.bf16.msra.mxu0 %v2375
        %3447 = vmatpush.bf16.msra.mxu0 %v2373
        %3448 = vmatpush.bf16.msra.mxu0 %v2371
        %3449 = vmatpush.bf16.msra.mxu0 %v2369
        %3450 = vmatpush.bf16.msra.mxu0 %v2367
        %3451 = vmatmul.bf16.gmra.mxu0 %v1404
        %v3452 = vpop.f32.mrf.mxu0
        %v3453 = vadd.f32 0.0, %v3452
        %v3454 = vpop.f32.mrf.mxu0
        %3455 = vdwg.mxu0
        %v3456 = vadd.f32 %v3414, %v3440
        %v3457 = vadd.f32 %v3427, %v3453
        %3458 = vmatpush.bf16.msra.mxu0 %v2505
        %3459 = vmatpush.bf16.msra.mxu0 %v2503
        %3460 = vmatpush.bf16.msra.mxu0 %v2501
        %3461 = vmatpush.bf16.msra.mxu0 %v2499
        %3462 = vmatpush.bf16.msra.mxu0 %v2497
        %3463 = vmatpush.bf16.msra.mxu0 %v2495
        %3464 = vmatpush.bf16.msra.mxu0 %v2493
        %3465 = vmatpush.bf16.msra.mxu0 %v2491
        %3466 = vmatmul.bf16.gmra.mxu0 %v2054
        %v3467 = vpop.f32.mrf.mxu0
        %v3468 = vadd.f32 0.0, %v3467
        %v3469 = vpop.f32.mrf.mxu0
        %3470 = vdwg.mxu0
        %3471 = vmatpush.bf16.msra.mxu0 %v2506
        %3472 = vmatpush.bf16.msra.mxu0 %v2504
        %3473 = vmatpush.bf16.msra.mxu0 %v2502
        %3474 = vmatpush.bf16.msra.mxu0 %v2500
        %3475 = vmatpush.bf16.msra.mxu0 %v2498
        %3476 = vmatpush.bf16.msra.mxu0 %v2496
        %3477 = vmatpush.bf16.msra.mxu0 %v2494
        %3478 = vmatpush.bf16.msra.mxu0 %v2492
        %3479 = vmatmul.bf16.gmra.mxu0 %v2054
        %v3480 = vpop.f32.mrf.mxu0
        %v3481 = vadd.f32 0.0, %v3480
        %v3482 = vpop.f32.mrf.mxu0
        %3483 = vdwg.mxu0
        %v3484 = vadd.f32 %v3456, %v3468
        %v3485 = vadd.f32 %v3457, %v3481
        %3486 = vmatpush.bf16.msra.mxu0 %v2630
        %3487 = vmatpush.bf16.msra.mxu0 %v2628
        %3488 = vmatpush.bf16.msra.mxu0 %v2626
        %3489 = vmatpush.bf16.msra.mxu0 %v2624
        %3490 = vmatpush.bf16.msra.mxu0 %v2622
        %3491 = vmatpush.bf16.msra.mxu0 %v2620
        %3492 = vmatpush.bf16.msra.mxu0 %v2618
        %3493 = vmatpush.bf16.msra.mxu0 %v2616
        %3494 = vmatmul.bf16.gmra.mxu0 %v1405
        %v3495 = vpop.f32.mrf.mxu0
        %v3496 = vadd.f32 0.0, %v3495
        %v3497 = vpop.f32.mrf.mxu0
        %3498 = vdwg.mxu0
        %3499 = vmatpush.bf16.msra.mxu0 %v2631
        %3500 = vmatpush.bf16.msra.mxu0 %v2629
        %3501 = vmatpush.bf16.msra.mxu0 %v2627
        %3502 = vmatpush.bf16.msra.mxu0 %v2625
        %3503 = vmatpush.bf16.msra.mxu0 %v2623
        %3504 = vmatpush.bf16.msra.mxu0 %v2621
        %3505 = vmatpush.bf16.msra.mxu0 %v2619
        %3506 = vmatpush.bf16.msra.mxu0 %v2617
        %3507 = vmatmul.bf16.gmra.mxu0 %v1405
        %v3508 = vpop.f32.mrf.mxu0
        %v3509 = vadd.f32 0.0, %v3508
        %v3510 = vpop.f32.mrf.mxu0
        %3511 = vdwg.mxu0
        %v3512 = vadd.f32 %v3484, %v3496
        %v3513 = vadd.f32 %v3485, %v3509
        %v3514 = vmax.f32 %v3512, %v3513
        %3515 = vmatpush.bf16.msra.mxu0 %v2151
        %3516 = vmatpush.bf16.msra.mxu0 %v2149
        %3517 = vmatpush.bf16.msra.mxu0 %v2147
        %3518 = vmatpush.bf16.msra.mxu0 %v2145
        %3519 = vmatpush.bf16.msra.mxu0 %v2143
        %3520 = vmatpush.bf16.msra.mxu0 %v2141
        %3521 = vmatpush.bf16.msra.mxu0 %v2139
        %3522 = vmatpush.bf16.msra.mxu0 %v2137
        %3523 = vmatmul.bf16.gmra.mxu0 %v1404
        %v3524 = vpop.f32.mrf.mxu0
        %v3525 = vadd.f32 0.0, %v3524
        %v3526 = vpop.f32.mrf.mxu0
        %3527 = vdwg.mxu0
        %3528 = vmatpush.bf16.msra.mxu0 %v2152
        %3529 = vmatpush.bf16.msra.mxu0 %v2150
        %3530 = vmatpush.bf16.msra.mxu0 %v2148
        %3531 = vmatpush.bf16.msra.mxu0 %v2146
        %3532 = vmatpush.bf16.msra.mxu0 %v2144
        %3533 = vmatpush.bf16.msra.mxu0 %v2142
        %3534 = vmatpush.bf16.msra.mxu0 %v2140
        %3535 = vmatpush.bf16.msra.mxu0 %v2138
        %3536 = vmatmul.bf16.gmra.mxu0 %v1404
        %v3537 = vpop.f32.mrf.mxu0
        %v3538 = vadd.f32 0.0, %v3537
        %v3539 = vpop.f32.mrf.mxu0
        %3540 = vdwg.mxu0
        %3541 = vmatpush.bf16.msra.mxu0 %v2257
        %3542 = vmatpush.bf16.msra.mxu0 %v2255
        %3543 = vmatpush.bf16.msra.mxu0 %v2253
        %3544 = vmatpush.bf16.msra.mxu0 %v2251
        %3545 = vmatpush.bf16.msra.mxu0 %v2249
        %3546 = vmatpush.bf16.msra.mxu0 %v2247
        %3547 = vmatpush.bf16.msra.mxu0 %v2245
        %3548 = vmatpush.bf16.msra.mxu0 %v2243
        %3549 = vmatmul.bf16.gmra.mxu0 %v2053
        %v3550 = vpop.f32.mrf.mxu0
        %v3551 = vadd.f32 %v3525, %v3550
        %v3552 = vpop.f32.mrf.mxu0
        %3553 = vdwg.mxu0
        %3554 = vmatpush.bf16.msra.mxu0 %v2258
        %3555 = vmatpush.bf16.msra.mxu0 %v2256
        %3556 = vmatpush.bf16.msra.mxu0 %v2254
        %3557 = vmatpush.bf16.msra.mxu0 %v2252
        %3558 = vmatpush.bf16.msra.mxu0 %v2250
        %3559 = vmatpush.bf16.msra.mxu0 %v2248
        %3560 = vmatpush.bf16.msra.mxu0 %v2246
        %3561 = vmatpush.bf16.msra.mxu0 %v2244
        %3562 = vmatmul.bf16.gmra.mxu0 %v2053
        %v3563 = vpop.f32.mrf.mxu0
        %v3564 = vadd.f32 %v3538, %v3563
        %v3565 = vpop.f32.mrf.mxu0
        %3566 = vdwg.mxu0
        %3567 = vmatpush.bf16.msra.mxu0 %v2380
        %3568 = vmatpush.bf16.msra.mxu0 %v2378
        %3569 = vmatpush.bf16.msra.mxu0 %v2376
        %3570 = vmatpush.bf16.msra.mxu0 %v2374
        %3571 = vmatpush.bf16.msra.mxu0 %v2372
        %3572 = vmatpush.bf16.msra.mxu0 %v2370
        %3573 = vmatpush.bf16.msra.mxu0 %v2368
        %3574 = vmatpush.bf16.msra.mxu0 %v2366
        %3575 = vmatmul.bf16.gmra.mxu0 %v2054
        %v3576 = vpop.f32.mrf.mxu0
        %v3577 = vadd.f32 0.0, %v3576
        %v3578 = vpop.f32.mrf.mxu0
        %3579 = vdwg.mxu0
        %3580 = vmatpush.bf16.msra.mxu0 %v2381
        %3581 = vmatpush.bf16.msra.mxu0 %v2379
        %3582 = vmatpush.bf16.msra.mxu0 %v2377
        %3583 = vmatpush.bf16.msra.mxu0 %v2375
        %3584 = vmatpush.bf16.msra.mxu0 %v2373
        %3585 = vmatpush.bf16.msra.mxu0 %v2371
        %3586 = vmatpush.bf16.msra.mxu0 %v2369
        %3587 = vmatpush.bf16.msra.mxu0 %v2367
        %3588 = vmatmul.bf16.gmra.mxu0 %v2054
        %v3589 = vpop.f32.mrf.mxu0
        %v3590 = vadd.f32 0.0, %v3589
        %v3591 = vpop.f32.mrf.mxu0
        %3592 = vdwg.mxu0
        %v3593 = vadd.f32 %v3551, %v3577
        %v3594 = vadd.f32 %v3564, %v3590
        %3595 = vmatpush.bf16.msra.mxu0 %v2505
        %3596 = vmatpush.bf16.msra.mxu0 %v2503
        %3597 = vmatpush.bf16.msra.mxu0 %v2501
        %3598 = vmatpush.bf16.msra.mxu0 %v2499
        %3599 = vmatpush.bf16.msra.mxu0 %v2497
        %3600 = vmatpush.bf16.msra.mxu0 %v2495
        %3601 = vmatpush.bf16.msra.mxu0 %v2493
        %3602 = vmatpush.bf16.msra.mxu0 %v2491
        %3603 = vmatmul.bf16.gmra.mxu0 %v1405
        %v3604 = vpop.f32.mrf.mxu0
        %v3605 = vadd.f32 0.0, %v3604
        %v3606 = vpop.f32.mrf.mxu0
        %3607 = vdwg.mxu0
        %3608 = vmatpush.bf16.msra.mxu0 %v2506
        %3609 = vmatpush.bf16.msra.mxu0 %v2504
        %3610 = vmatpush.bf16.msra.mxu0 %v2502
        %3611 = vmatpush.bf16.msra.mxu0 %v2500
        %3612 = vmatpush.bf16.msra.mxu0 %v2498
        %3613 = vmatpush.bf16.msra.mxu0 %v2496
        %3614 = vmatpush.bf16.msra.mxu0 %v2494
        %3615 = vmatpush.bf16.msra.mxu0 %v2492
        %3616 = vmatmul.bf16.gmra.mxu0 %v1405
        %v3617 = vpop.f32.mrf.mxu0
        %v3618 = vadd.f32 0.0, %v3617
        %v3619 = vpop.f32.mrf.mxu0
        %3620 = vdwg.mxu0
        %v3621 = vadd.f32 %v3593, %v3605
        %v3622 = vadd.f32 %v3594, %v3618
        %3623 = vmatpush.bf16.msra.mxu0 %v2630
        %3624 = vmatpush.bf16.msra.mxu0 %v2628
        %3625 = vmatpush.bf16.msra.mxu0 %v2626
        %3626 = vmatpush.bf16.msra.mxu0 %v2624
        %3627 = vmatpush.bf16.msra.mxu0 %v2622
        %3628 = vmatpush.bf16.msra.mxu0 %v2620
        %3629 = vmatpush.bf16.msra.mxu0 %v2618
        %3630 = vmatpush.bf16.msra.mxu0 %v2616
        %3631 = vmatmul.bf16.gmra.mxu0 %v2055
        %v3632 = vpop.f32.mrf.mxu0
        %v3633 = vadd.f32 0.0, %v3632
        %v3634 = vpop.f32.mrf.mxu0
        %3635 = vdwg.mxu0
        %3636 = vmatpush.bf16.msra.mxu0 %v2631
        %3637 = vmatpush.bf16.msra.mxu0 %v2629
        %3638 = vmatpush.bf16.msra.mxu0 %v2627
        %3639 = vmatpush.bf16.msra.mxu0 %v2625
        %3640 = vmatpush.bf16.msra.mxu0 %v2623
        %3641 = vmatpush.bf16.msra.mxu0 %v2621
        %3642 = vmatpush.bf16.msra.mxu0 %v2619
        %3643 = vmatpush.bf16.msra.mxu0 %v2617
        %3644 = vmatmul.bf16.gmra.mxu0 %v2055
        %v3645 = vpop.f32.mrf.mxu0
        %v3646 = vadd.f32 0.0, %v3645
        %v3647 = vpop.f32.mrf.mxu0
        %3648 = vdwg.mxu0
        %v3649 = vadd.f32 %v3621, %v3633
        %v3650 = vadd.f32 %v3622, %v3646
        %v3651 = vmax.f32 %v3649, %v3650
        %v3652 = vmax.f32 %v3514, %v3651
        %v3653 = vadd.f32 %v3652, %v2817
        %v3654 = vmax.f32 %v3653, 0.0
        %v3655 = vpack.c.bf16 %v3654, %v3654
        %v3656 = vld [vmem:[%s5] sm:$0xf]
        %v3657 = vld [vmem:[%s5 + $0x4] sm:$0xf]
        %v3658 = vld [vmem:[%s5 + $0x8] sm:$0xf]
        %v3659 = vld [vmem:[%s5 + $0xc] sm:$0xf]
        %v3660 = vld [vmem:[%s5 + $0x10] sm:$0xf]
        %v3661 = vld [vmem:[%s5 + $0x14] sm:$0xf]
        %v3662 = vld [vmem:[%s5 + $0x18] sm:$0xf]
        %v3663 = vld [vmem:[%s5 + $0x1c] sm:$0xf]
        %v3664 = vld [vmem:[%s5 + $0x20] sm:$0xf]
        %v3665 = vld [vmem:[%s5 + $0x24] sm:$0xf]
        %v3666 = vld [vmem:[%s5 + $0x28] sm:$0xf]
        %v3667 = vld [vmem:[%s5 + $0x2c] sm:$0xf]
        %v3668 = vld [vmem:[%s5 + $0x30] sm:$0xf]
        %v3669 = vld [vmem:[%s5 + $0x34] sm:$0xf]
        %v3670 = vld [vmem:[%s5 + $0x38] sm:$0xf]
        %v3671 = vld [vmem:[%s5 + $0x3c] sm:$0xf]
        %s3672 = scalar_lea.vmem %s5, 64
        %v3673 = vld [vmem:[%s3672] sm:$0xf]
        %v3674 = vld [vmem:[%s3672 + $0x4] sm:$0xf]
        %v3675 = vld [vmem:[%s3672 + $0x8] sm:$0xf]
        %v3676 = vld [vmem:[%s3672 + $0xc] sm:$0xf]
        %v3677 = vld [vmem:[%s3672 + $0x10] sm:$0xf]
        %v3678 = vld [vmem:[%s3672 + $0x14] sm:$0xf]
        %v3679 = vld [vmem:[%s3672 + $0x18] sm:$0xf]
        %v3680 = vld [vmem:[%s3672 + $0x1c] sm:$0xf]
        %v3681 = vld [vmem:[%s3672 + $0x20] sm:$0xf]
        %v3682 = vld [vmem:[%s3672 + $0x24] sm:$0xf]
        %v3683 = vld [vmem:[%s3672 + $0x28] sm:$0xf]
        %v3684 = vld [vmem:[%s3672 + $0x2c] sm:$0xf]
        %v3685 = vld [vmem:[%s3672 + $0x30] sm:$0xf]
        %v3686 = vld [vmem:[%s3672 + $0x34] sm:$0xf]
        %v3687 = vld [vmem:[%s3672 + $0x38] sm:$0xf]
        %v3688 = vld [vmem:[%s3672 + $0x3c] sm:$0xf]
        %v3705 = vunpack.c.l.b16 %v3673
        %v3706 = vunpack.c.l.b16 %v3674
        %v3707 = vunpack.c.l.b16 %v3675
        %v3708 = vunpack.c.l.b16 %v3676
        %v3709 = vunpack.c.l.b16 %v3677
        %v3710 = vunpack.c.l.b16 %v3678
        %v3711 = vunpack.c.l.b16 %v3679
        %v3712 = vunpack.c.l.b16 %v3680
        %v3713 = vunpack.c.l.b16 %v3681
        %v3714 = vunpack.c.l.b16 %v3682
        %v3715 = vunpack.c.l.b16 %v3683
        %v3716 = vunpack.c.l.b16 %v3684
        %v3717 = vunpack.c.l.b16 %v3685
        %v3718 = vunpack.c.l.b16 %v3686
        %v3719 = vunpack.c.l.b16 %v3687
        %v3720 = vunpack.c.l.b16 %v3688
        %v3721 = vpack.c.b16 %v3706, %v3705
        %v3722 = vpack.c.b16 %v3708, %v3707
        %v3723 = vpack.c.b16 %v3710, %v3709
        %v3724 = vpack.c.b16 %v3712, %v3711
        %v3725 = vpack.c.b16 %v3714, %v3713
        %v3726 = vpack.c.b16 %v3716, %v3715
        %v3727 = vpack.c.b16 %v3718, %v3717
        %v3728 = vpack.c.b16 %v3720, %v3719
        %3737 = vmatpush.bf16.msra.mxu0 %v3728
        %3738 = vmatpush.bf16.msra.mxu0 %v3727
        %3739 = vmatpush.bf16.msra.mxu0 %v3726
        %3740 = vmatpush.bf16.msra.mxu0 %v3725
        %3741 = vmatpush.bf16.msra.mxu0 %v3724
        %3742 = vmatpush.bf16.msra.mxu0 %v3723
        %3743 = vmatpush.bf16.msra.mxu0 %v3722
        %3744 = vmatpush.bf16.msra.mxu0 %v3721
        %3745 = vmatmul.bf16.gmra.mxu0 %v3099
        %v3746 = vpop.f32.mrf.mxu0
        %v3747 = vadd.f32 0.0, %v3746
        %v3748 = vpop.f32.mrf.mxu0
        %3749 = vdwg.mxu0
        %v3766 = vunpack.c.l.b16 %v3656
        %v3767 = vunpack.c.l.b16 %v3657
        %v3768 = vunpack.c.l.b16 %v3658
        %v3769 = vunpack.c.l.b16 %v3659
        %v3770 = vunpack.c.l.b16 %v3660
        %v3771 = vunpack.c.l.b16 %v3661
        %v3772 = vunpack.c.l.b16 %v3662
        %v3773 = vunpack.c.l.b16 %v3663
        %v3774 = vunpack.c.l.b16 %v3664
        %v3775 = vunpack.c.l.b16 %v3665
        %v3776 = vunpack.c.l.b16 %v3666
        %v3777 = vunpack.c.l.b16 %v3667
        %v3778 = vunpack.c.l.b16 %v3668
        %v3779 = vunpack.c.l.b16 %v3669
        %v3780 = vunpack.c.l.b16 %v3670
        %v3781 = vunpack.c.l.b16 %v3671
        %v3782 = vpack.c.b16 %v3767, %v3766
        %v3783 = vpack.c.b16 %v3769, %v3768
        %v3784 = vpack.c.b16 %v3771, %v3770
        %v3785 = vpack.c.b16 %v3773, %v3772
        %v3786 = vpack.c.b16 %v3775, %v3774
        %v3787 = vpack.c.b16 %v3777, %v3776
        %v3788 = vpack.c.b16 %v3779, %v3778
        %v3789 = vpack.c.b16 %v3781, %v3780
        %3798 = vmatpush.bf16.msra.mxu0 %v3789
        %3799 = vmatpush.bf16.msra.mxu0 %v3788
        %3800 = vmatpush.bf16.msra.mxu0 %v3787
        %3801 = vmatpush.bf16.msra.mxu0 %v3786
        %3802 = vmatpush.bf16.msra.mxu0 %v3785
        %3803 = vmatpush.bf16.msra.mxu0 %v3784
        %3804 = vmatpush.bf16.msra.mxu0 %v3783
        %3805 = vmatpush.bf16.msra.mxu0 %v3782
        %3806 = vmatmul.bf16.gmra.mxu0 %v2821
        %v3807 = vpop.f32.mrf.mxu0
        %v3808 = vadd.f32 %v3747, %v3807
        %v3809 = vpop.f32.mrf.mxu0
        %3810 = vdwg.mxu0
        %s3811 = scalar_lea.vmem %s5, 128
        %v3812 = vld [vmem:[%s3811] sm:$0xf]
        %v3813 = vld [vmem:[%s3811 + $0x4] sm:$0xf]
        %v3814 = vld [vmem:[%s3811 + $0x8] sm:$0xf]
        %v3815 = vld [vmem:[%s3811 + $0xc] sm:$0xf]
        %v3816 = vld [vmem:[%s3811 + $0x10] sm:$0xf]
        %v3817 = vld [vmem:[%s3811 + $0x14] sm:$0xf]
        %v3818 = vld [vmem:[%s3811 + $0x18] sm:$0xf]
        %v3819 = vld [vmem:[%s3811 + $0x1c] sm:$0xf]
        %v3820 = vld [vmem:[%s3811 + $0x20] sm:$0xf]
        %v3821 = vld [vmem:[%s3811 + $0x24] sm:$0xf]
        %v3822 = vld [vmem:[%s3811 + $0x28] sm:$0xf]
        %v3823 = vld [vmem:[%s3811 + $0x2c] sm:$0xf]
        %v3824 = vld [vmem:[%s3811 + $0x30] sm:$0xf]
        %v3825 = vld [vmem:[%s3811 + $0x34] sm:$0xf]
        %v3826 = vld [vmem:[%s3811 + $0x38] sm:$0xf]
        %v3827 = vld [vmem:[%s3811 + $0x3c] sm:$0xf]
        %v3844 = vunpack.c.l.b16 %v3812
        %v3845 = vunpack.c.l.b16 %v3813
        %v3846 = vunpack.c.l.b16 %v3814
        %v3847 = vunpack.c.l.b16 %v3815
        %v3848 = vunpack.c.l.b16 %v3816
        %v3849 = vunpack.c.l.b16 %v3817
        %v3850 = vunpack.c.l.b16 %v3818
        %v3851 = vunpack.c.l.b16 %v3819
        %v3852 = vunpack.c.l.b16 %v3820
        %v3853 = vunpack.c.l.b16 %v3821
        %v3854 = vunpack.c.l.b16 %v3822
        %v3855 = vunpack.c.l.b16 %v3823
        %v3856 = vunpack.c.l.b16 %v3824
        %v3857 = vunpack.c.l.b16 %v3825
        %v3858 = vunpack.c.l.b16 %v3826
        %v3859 = vunpack.c.l.b16 %v3827
        %v3860 = vpack.c.b16 %v3845, %v3844
        %v3861 = vpack.c.b16 %v3847, %v3846
        %v3862 = vpack.c.b16 %v3849, %v3848
        %v3863 = vpack.c.b16 %v3851, %v3850
        %v3864 = vpack.c.b16 %v3853, %v3852
        %v3865 = vpack.c.b16 %v3855, %v3854
        %v3866 = vpack.c.b16 %v3857, %v3856
        %v3867 = vpack.c.b16 %v3859, %v3858
        %3876 = vmatpush.bf16.msra.mxu0 %v3867
        %3877 = vmatpush.bf16.msra.mxu0 %v3866
        %3878 = vmatpush.bf16.msra.mxu0 %v3865
        %3879 = vmatpush.bf16.msra.mxu0 %v3864
        %3880 = vmatpush.bf16.msra.mxu0 %v3863
        %3881 = vmatpush.bf16.msra.mxu0 %v3862
        %3882 = vmatpush.bf16.msra.mxu0 %v3861
        %3883 = vmatpush.bf16.msra.mxu0 %v3860
        %3884 = vmatmul.bf16.gmra.mxu0 %v3377
        %v3885 = vpop.f32.mrf.mxu0
        %v3886 = vadd.f32 0.0, %v3885
        %v3887 = vpop.f32.mrf.mxu0
        %3888 = vdwg.mxu0
        %v3889 = vadd.f32 %v3808, %v3886
        %s3890 = scalar_lea.vmem %s5, 192
        %v3891 = vld [vmem:[%s3890] sm:$0xf]
        %v3892 = vld [vmem:[%s3890 + $0x4] sm:$0xf]
        %v3893 = vld [vmem:[%s3890 + $0x8] sm:$0xf]
        %v3894 = vld [vmem:[%s3890 + $0xc] sm:$0xf]
        %v3895 = vld [vmem:[%s3890 + $0x10] sm:$0xf]
        %v3896 = vld [vmem:[%s3890 + $0x14] sm:$0xf]
        %v3897 = vld [vmem:[%s3890 + $0x18] sm:$0xf]
        %v3898 = vld [vmem:[%s3890 + $0x1c] sm:$0xf]
        %v3899 = vld [vmem:[%s3890 + $0x20] sm:$0xf]
        %v3900 = vld [vmem:[%s3890 + $0x24] sm:$0xf]
        %v3901 = vld [vmem:[%s3890 + $0x28] sm:$0xf]
        %v3902 = vld [vmem:[%s3890 + $0x2c] sm:$0xf]
        %v3903 = vld [vmem:[%s3890 + $0x30] sm:$0xf]
        %v3904 = vld [vmem:[%s3890 + $0x34] sm:$0xf]
        %v3905 = vld [vmem:[%s3890 + $0x38] sm:$0xf]
        %v3906 = vld [vmem:[%s3890 + $0x3c] sm:$0xf]
        %v3923 = vunpack.c.l.b16 %v3891
        %v3924 = vunpack.c.l.b16 %v3892
        %v3925 = vunpack.c.l.b16 %v3893
        %v3926 = vunpack.c.l.b16 %v3894
        %v3927 = vunpack.c.l.b16 %v3895
        %v3928 = vunpack.c.l.b16 %v3896
        %v3929 = vunpack.c.l.b16 %v3897
        %v3930 = vunpack.c.l.b16 %v3898
        %v3931 = vunpack.c.l.b16 %v3899
        %v3932 = vunpack.c.l.b16 %v3900
        %v3933 = vunpack.c.l.b16 %v3901
        %v3934 = vunpack.c.l.b16 %v3902
        %v3935 = vunpack.c.l.b16 %v3903
        %v3936 = vunpack.c.l.b16 %v3904
        %v3937 = vunpack.c.l.b16 %v3905
        %v3938 = vunpack.c.l.b16 %v3906
        %v3939 = vpack.c.b16 %v3924, %v3923
        %v3940 = vpack.c.b16 %v3926, %v3925
        %v3941 = vpack.c.b16 %v3928, %v3927
        %v3942 = vpack.c.b16 %v3930, %v3929
        %v3943 = vpack.c.b16 %v3932, %v3931
        %v3944 = vpack.c.b16 %v3934, %v3933
        %v3945 = vpack.c.b16 %v3936, %v3935
        %v3946 = vpack.c.b16 %v3938, %v3937
        %3955 = vmatpush.bf16.msra.mxu0 %v3946
        %3956 = vmatpush.bf16.msra.mxu0 %v3945
        %3957 = vmatpush.bf16.msra.mxu0 %v3944
        %3958 = vmatpush.bf16.msra.mxu0 %v3943
        %3959 = vmatpush.bf16.msra.mxu0 %v3942
        %3960 = vmatpush.bf16.msra.mxu0 %v3941
        %3961 = vmatpush.bf16.msra.mxu0 %v3940
        %3962 = vmatpush.bf16.msra.mxu0 %v3939
        %3963 = vmatmul.bf16.gmra.mxu0 %v3655
        %v3964 = vpop.f32.mrf.mxu0
        %v3965 = vadd.f32 0.0, %v3964
        %v3966 = vpop.f32.mrf.mxu0
        %3967 = vdwg.mxu0
        %v3968 = vadd.f32 %v3889, %v3965
        %v3969 = vld [vmem:[%s6] sm:$0x1]
        %v3971 = vperm.slane %v3969, 0
        %v3973 = vadd.f32 %v3968, %v3971
        %v3974 = vmax.f32 %v3973, 0.0
        %v3975 = vpack.c.bf16 %v3974, %v3974
        %v3976 = vld [vmem:[%s7] sm:$0xf]
        %v3977 = vld [vmem:[%s7 + $0x4] sm:$0xf]
        %v3978 = vld [vmem:[%s7 + $0x8] sm:$0xf]
        %v3979 = vld [vmem:[%s7 + $0xc] sm:$0xf]
        %v3980 = vld [vmem:[%s7 + $0x10] sm:$0xf]
        %v3981 = vld [vmem:[%s7 + $0x14] sm:$0xf]
        %v3982 = vld [vmem:[%s7 + $0x18] sm:$0xf]
        %v3983 = vld [vmem:[%s7 + $0x1c] sm:$0xf]
        %v3984 = vld [vmem:[%s7 + $0x20] sm:$0xf]
        %v3985 = vld [vmem:[%s7 + $0x24] sm:$0xf]
        %v3986 = vld [vmem:[%s7 + $0x28] sm:$0xf]
        %v3987 = vld [vmem:[%s7 + $0x2c] sm:$0xf]
        %v3988 = vld [vmem:[%s7 + $0x30] sm:$0xf]
        %v3989 = vld [vmem:[%s7 + $0x34] sm:$0xf]
        %v3990 = vld [vmem:[%s7 + $0x38] sm:$0xf]
        %v3991 = vld [vmem:[%s7 + $0x3c] sm:$0xf]
        %v3992 = vld [vmem:[%s8] sm:$0x1]
        %v3994 = vperm.slane %v3992, 0
        %v4012 = vunpack.c.l.b16 %v3976
        %v4013 = vunpack.c.l.b16 %v3977
        %v4014 = vunpack.c.l.b16 %v3978
        %v4015 = vunpack.c.l.b16 %v3979
        %v4016 = vunpack.c.l.b16 %v3980
        %v4017 = vunpack.c.l.b16 %v3981
        %v4018 = vunpack.c.l.b16 %v3982
        %v4019 = vunpack.c.l.b16 %v3983
        %v4020 = vunpack.c.l.b16 %v3984
        %v4021 = vunpack.c.l.b16 %v3985
        %v4022 = vunpack.c.l.b16 %v3986
        %v4023 = vunpack.c.l.b16 %v3987
        %v4024 = vunpack.c.l.b16 %v3988
        %v4025 = vunpack.c.l.b16 %v3989
        %v4026 = vunpack.c.l.b16 %v3990
        %v4027 = vunpack.c.l.b16 %v3991
        %v4028 = vpack.c.b16 %v4013, %v4012
        %v4029 = vpack.c.b16 %v4015, %v4014
        %v4030 = vpack.c.b16 %v4017, %v4016
        %v4031 = vpack.c.b16 %v4019, %v4018
        %v4032 = vpack.c.b16 %v4021, %v4020
        %v4033 = vpack.c.b16 %v4023, %v4022
        %v4034 = vpack.c.b16 %v4025, %v4024
        %v4035 = vpack.c.b16 %v4027, %v4026
        %4044 = vmatpush.bf16.msra.mxu0 %v4035
        %4045 = vmatpush.bf16.msra.mxu0 %v4034
        %4046 = vmatpush.bf16.msra.mxu0 %v4033
        %4047 = vmatpush.bf16.msra.mxu0 %v4032
        %4048 = vmatpush.bf16.msra.mxu0 %v4031
        %4049 = vmatpush.bf16.msra.mxu0 %v4030
        %4050 = vmatpush.bf16.msra.mxu0 %v4029
        %4051 = vmatpush.bf16.msra.mxu0 %v4028
        %4052 = vmatmul.bf16.gmra.mxu0 %v3975
        %v4053 = vpop.f32.mrf.mxu0
        %v4054 = vadd.f32 %v3994, %v4053
        %v4055 = vpop.f32.mrf.mxu0
        %4056 = vdwg.mxu0
        %4057 = vst [vmem:[%s481] sm:$0xff] %v4054
        %p4058 = scmp.lt.s32.totalorder %s20, 1
        %s4059 = scalar_select %p4058, %s20, 1
        %s4060 = smul.addr %s4059, 8
        %s4061 = scalar_lea.vmem %s9, %s4060
        // Predicated region
        $region98: #{cnn_mnist_forward.1} parent=92 // pred_check
          %p4062 = pneg %p232
        $region99: #{cnn_mnist_forward.1} parent=92 // pred_check_branch
          %4064 = sbr.rel (%p4062) target = $region101
        $region100: #{cnn_mnist_forward.1} parent=92 // pred_region
          _
        $region101: #{cnn_mnist_forward.1} parent=92 // pred_fallthru
          _
      $region93: #{cnn_mnist_forward.1} parent=5 // pred_fallthru
        _
      %p4065 = scmp.le.s32.totalorder 2, %s15
      // Predicated region
      $region102: #{cnn_mnist_forward.1} parent=5 // pred_check
        %p4066 = pneg %p4065
      $region103: #{cnn_mnist_forward.1} parent=5 // pred_check_branch
        %4068 = sbr.rel (%p4066) target = $region105
      $region104: #{cnn_mnist_forward.1} parent=5 // pred_region
        %s4069 = ssub.s32 %s15, 2
        // Predicated region
        $region106: #{cnn_mnist_forward.1} parent=104 // pred_check
          %p4070 = pneg %p238
        $region107: #{cnn_mnist_forward.1} parent=104 // pred_check_branch
          %4072 = sbr.rel (%p4070) target = $region109
        $region108: #{cnn_mnist_forward.1} parent=104 // pred_region
          %p4073 = scmp.lt.s32.totalorder %s21, 1
          %s4074 = scalar_select %p4073, %s21, 1
          %s4075 = smul.addr %s4074, 8
          %s4076 = scalar_lea.vmem %s9, %s4075
        $region109: #{cnn_mnist_forward.1} parent=104 // pred_fallthru
          _
      $region105: #{cnn_mnist_forward.1} parent=5 // pred_fallthru
        _
    $region6: #{cnn_mnist_forward.1} parent=1 // loop_footer
      %s19 = sadd.s32 1, %s15
    $region7: #{cnn_mnist_forward.1} parent=1 // loop_footer_branch
      %14 = sbr.rel target = $region3
    $region8: #{cnn_mnist_forward.1} parent=1 // loop_exit
      _

</llo_original>
